<compile_context>
chip_gen: v7x
topology: tpu7x:2x2x1
jax: 0.10.0
libtpu: 0.0.40
codegen_flags: <defaults>
</compile_context>

<pallas_src>
import jax
import jax.numpy as jnp
from jax.experimental import pallas as pl
from jax.experimental.pallas import tpu as pltpu

KERNEL_SIZES = (3, 5, 7)
MAXPAD = max(ks // 2 for ks in KERNEL_SIZES)      # 3
NTAPS = 2 * MAXPAD + 1                            # 7 tap offsets (-3 .. +3)
NK = len(KERNEL_SIZES)                            # 3
C1 = 32                                           # out_channels_per_kernel, conv1
C2 = 64                                           # out_channels_per_kernel, conv2
NKC1 = NK * C1                                    # 96
NKC2 = NK * C2                                    # 192
C2PAD = 256                                       # conv2 channels padded to 2 lane tiles

MATMUL_DTYPE = jnp.float32   # set to jnp.bfloat16 on v6e/v7x for MXU-native matmuls


# --------------------------------------------------------------------------------------
# Kernel
# --------------------------------------------------------------------------------------
def cnn_classifier_kernel(x_ref, w1_ref, b1_ref, w2_ref, b2_ref,
                          fc1w_ref, fc1b_ref, fc2w_ref, fc2b_ref,
                          out_ref, flat_ref):
    """One batch element per grid step, everything resident in vregs/VMEM.

    x_ref    : (1, L + 4*MAXPAD, 1)   input, zero-padded along length (2*MAXPAD per side)
    w1_ref   : (NTAPS, 96)            conv1 weights, tap-major, zero taps per group
    b1_ref   : (1, 96)
    w2_ref   : (NTAPS, 96, 256)       conv2 weights, tap-major, zero taps / zero cols 192..255
    b2_ref   : (1, 256)
    fc1w_ref : (L*256, 128)           rows in kernel flatten order (l*256 + c), zero rows c>=192
    fc1b_ref : (1, 128)
    fc2w_ref : (128, num_classes)
    fc2b_ref : (1, num_classes)
    out_ref  : (1, 1, num_classes)
    flat_ref : (1, L*256)             VMEM scratch holding the flattened conv2 output
    """
    f32 = jnp.float32
    cdt = fc1w_ref.dtype                     # matmul operand dtype (f32 or bf16)
    Lx = x_ref.shape[1]                      # L + 4*MAXPAD
    L = Lx - 4 * MAXPAD
    Le = L + 2 * MAXPAD                      # extended conv1 output length (with halo)

    xe = x_ref[0]                            # (Lx, 1)

    # ------------- conv1 + ReLU: 7 VPU broadcast-FMAs, all 3 groups fused on 96 lanes ----
    acc1 = xe[0:Le, :] * w1_ref[0:1, :]                      # (Le, 96)
    for d in range(1, NTAPS):
        acc1 = acc1 + xe[d:d + Le, :] * w1_ref[d:d + 1, :]
    h1 = jnp.maximum(acc1 + b1_ref[...], 0.0)                # (Le, 96)
    # Zero halo rows == PyTorch conv2's zero padding of the conv1 output.
    row = jax.lax.broadcasted_iota(jnp.int32, (Le, NKC1), 0)
    h1 = jnp.where((row >= MAXPAD) & (row < MAXPAD + L), h1, 0.0).astype(cdt)

    # ------------- conv2 + ReLU: 7 MXU matmuls (L,96)x(96,256), lane-dense 256 output ----
    acc2 = jnp.dot(h1[0:L, :], w2_ref[0], preferred_element_type=f32)
    for d in range(1, NTAPS):
        acc2 = acc2 + jnp.dot(h1[d:d + L, :], w2_ref[d], preferred_element_type=f32)
    h2 = jnp.maximum(acc2 + b2_ref[...], 0.0).astype(cdt)    # (L, 256); cols 192..255 == 0

    # Dropout(p=0.3) is the identity at inference.
    # TODO(synk): training-mode stochastic dropout not implemented in-kernel.

    # ------------- flatten (lane-aligned 256-wide stores) + fc1 as ONE K=L*256 matmul ----
    for l in range(L):
        flat_ref[:, l * C2PAD:(l + 1) * C2PAD] = h2[l:l + 1, :]
    h3 = jnp.maximum(
        jnp.dot(flat_ref[...], fc1w_ref[...], preferred_element_type=f32)
        + fc1b_ref[...], 0.0)                                # (1, 128)

    # ------------- fc2 -------------------------------------------------------------------
    out_ref[0] = (jnp.dot(h3.astype(cdt), fc2w_ref[...], preferred_element_type=f32)
                  + fc2b_ref[...])


# --------------------------------------------------------------------------------------
# Parameter init (PyTorch layouts) and packing into kernel layouts
# --------------------------------------------------------------------------------------
def init_params(key, input_dim, num_classes):
    """Synthetic parameters with the exact shapes of CNNClassifier (PyTorch layouts)."""
    ks = jax.random.split(key, 16)
    s = 0.1
    conv1_w = [jax.random.normal(ks[i], (C1, 1, k), jnp.float32) * s
               for i, k in enumerate(KERNEL_SIZES)]
    conv1_b = [jax.random.normal(ks[3 + i], (C1,), jnp.float32) * s for i in range(NK)]
    conv2_w = [jax.random.normal(ks[6 + i], (C2, NKC1, k), jnp.float32) * s
               for i, k in enumerate(KERNEL_SIZES)]
    conv2_b = [jax.random.normal(ks[9 + i], (C2,), jnp.float32) * s for i in range(NK)]
    fc1_w = jax.random.normal(ks[12], (128, NKC2 * input_dim), jnp.float32) * s  # (out, in)
    fc1_b = jax.random.normal(ks[13], (128,), jnp.float32) * s
    fc2_w = jax.random.normal(ks[14], (num_classes, 128), jnp.float32) * s       # (out, in)
    fc2_b = jax.random.normal(ks[15], (num_classes,), jnp.float32) * s
    return dict(conv1_w=conv1_w, conv1_b=conv1_b, conv2_w=conv2_w, conv2_b=conv2_b,
                fc1_w=fc1_w, fc1_b=fc1_b, fc2_w=fc2_w, fc2_b=fc2_b)


def _pack_params(params, L):
    """Repack PyTorch-layout weights into the tap-major / lane-dense kernel layouts."""
    # conv1 -> (NTAPS, 96): w1[d, gi*32+o] = conv1_gi.weight[o, 0, d - MAXPAD + pad_gi]
    w1 = jnp.zeros((NTAPS, NKC1), jnp.float32)
    b1_parts = []
    for gi, (w, ks) in enumerate(zip(params["conv1_w"], KERNEL_SIZES)):
        pad = ks // 2
        wt = jnp.transpose(w[:, 0, :], (1, 0))                        # (ks, C1)
        w1 = w1.at[MAXPAD - pad:MAXPAD + pad + 1, gi * C1:(gi + 1) * C1].set(wt)
        b1_parts.append(params["conv1_b"][gi])
    b1 = jnp.concatenate(b1_parts)[None, :]                           # (1, 96)

    # conv2 -> (NTAPS, 96, 256): zero taps per group, zero output cols 192..255
    w2 = jnp.zeros((NTAPS, NKC1, C2PAD), jnp.float32)
    b2 = jnp.zeros((1, C2PAD), jnp.float32)
    for gi, (w, ks) in enumerate(zip(params["conv2_w"], KERNEL_SIZES)):
        pad = ks // 2
        wt = jnp.transpose(w, (2, 1, 0))                              # (ks, 96, 64)
        w2 = w2.at[MAXPAD - pad:MAXPAD + pad + 1, :, gi * C2:(gi + 1) * C2].set(wt)
        b2 = b2.at[0, gi * C2:(gi + 1) * C2].set(params["conv2_b"][gi])

    # fc1: PyTorch flatten order (c*L + l) -> kernel order (l*256 + c), zero rows c>=192
    fc1_k = (params["fc1_w"].reshape(128, NKC2, L)                    # [j, c, l]
             .transpose(2, 1, 0))                                     # (L, 192, 128)
    fc1_k = jnp.pad(fc1_k, ((0, 0), (0, C2PAD - NKC2), (0, 0)))       # (L, 256, 128)
    fc1_k = fc1_k.reshape(L * C2PAD, 128)
    fc1_b = params["fc1_b"][None, :]                                  # (1, 128)
    fc2_w = params["fc2_w"].T                                         # (128, NC)
    fc2_b = params["fc2_b"][None, :]                                  # (1, NC)
    return w1, b1, w2, b2, fc1_k, fc1_b, fc2_w, fc2_b


# --------------------------------------------------------------------------------------
# Wrapper
# --------------------------------------------------------------------------------------
@jax.jit
def cnn_classifier_forward(x, params):
    """x: (B, 1, L) float32 in PyTorch NCL layout. Returns (B, num_classes) logits."""
    B, _, L = x.shape
    num_classes = params["fc2_w"].shape[0]
    cdt = MATMUL_DTYPE

    w1, b1, w2, b2, fc1w, fc1b, fc2w, fc2b = _pack_params(params, L)
    w2 = w2.astype(cdt)
    fc1w = fc1w.astype(cdt)
    fc2w = fc2w.astype(cdt)

    # Glue: (B, 1, L) -> (B, L, 1), zero-pad length by 2*MAXPAD per side (covers all taps
    # of conv1 evaluated over the halo-extended range).
    x_blc = jnp.transpose(x, (0, 2, 1))
    xpad = jnp.pad(x_blc, ((0, 0), (2 * MAXPAD, 2 * MAXPAD), (0, 0)))
    Lx = L + 4 * MAXPAD

    def const_spec(a):
        n = a.ndim
        return pl.BlockSpec(a.shape, lambda b, n=n: (0,) * n)

    out = pl.pallas_call(
        cnn_classifier_kernel,
        out_shape=jax.ShapeDtypeStruct((B, 1, num_classes), jnp.float32),
        grid=(B,),                                    # one batch element per step
        in_specs=[
            pl.BlockSpec((1, Lx, 1), lambda b: (b, 0, 0)),
            const_spec(w1), const_spec(b1),
            const_spec(w2), const_spec(b2),
            const_spec(fc1w), const_spec(fc1b),
            const_spec(fc2w), const_spec(fc2b),
        ],
        out_specs=pl.BlockSpec((1, 1, num_classes), lambda b: (b, 0, 0)),
        scratch_shapes=[pltpu.VMEM((1, L * C2PAD), cdt)],
        compiler_params=pltpu.CompilerParams(
            dimension_semantics=("parallel",),        # megacore: split batch across TCs
            vmem_limit_bytes=32 * 1024 * 1024),
    )(xpad, w1, b1, w2, b2, fc1w, fc1b, fc2w, fc2b)
    return out[:, 0, :]


# --------------------------------------------------------------------------------------
# Pure-JAX reference (replicates CNNClassifier.forward exactly, PyTorch NCL layout)
# --------------------------------------------------------------------------------------
def reference_forward(x, params):
    def multi_conv(h, ws, bs):
        outs = []
        for w, b in zip(ws, bs):
            ks = w.shape[-1]
            y = jax.lax.conv_general_dilated(
                h, w, window_strides=(1,), padding=[(ks // 2, ks // 2)],
                dimension_numbers=("NCH", "OIH", "NCH"))
            outs.append(y + b[None, :, None])
        return jnp.concatenate(outs, axis=1)

    h = jax.nn.relu(multi_conv(x, params["conv1_w"], params["conv1_b"]))
    h = jax.nn.relu(multi_conv(h, params["conv2_w"], params["conv2_b"]))
    flat = h.reshape(h.shape[0], -1)                  # channel-major flatten (c*L + l)
    h3 = jax.nn.relu(flat @ params["fc1_w"].T + params["fc1_b"])
    return h3 @ params["fc2_w"].T + params["fc2_b"]


if __name__ == "__main__":
    B, INPUT_DIM, NUM_CLASSES = 2, 16, 4
    key = jax.random.PRNGKey(0)
    kx, kp = jax.random.split(key)
    x = jax.random.normal(kx, (B, 1, INPUT_DIM), jnp.float32)   # PyTorch (B, C=1, L)
    params = init_params(kp, INPUT_DIM, NUM_CLASSES)

    out = jax.block_until_ready(cnn_classifier_forward(x, params))
    ref = reference_forward(x, params)

    assert out.shape == (B, NUM_CLASSES)
    assert jnp.allclose(out, ref, atol=2e-3, rtol=2e-3), (out, ref)
    print("KERNEL_OK")
</pallas_src>

<mosaic_0001>
module attributes {stable_mosaic.version = 11 : i64} {
  func.func @cnn_classifier_kernel(%arg0: i32, %arg1: memref<1x28x1xf32, #tpu.memory_space<vmem>>, %arg2: memref<7x96xf32, #tpu.memory_space<vmem>>, %arg3: memref<1x96xf32, #tpu.memory_space<vmem>>, %arg4: memref<7x96x256xf32, #tpu.memory_space<vmem>>, %arg5: memref<1x256xf32, #tpu.memory_space<vmem>>, %arg6: memref<4096x128xf32, #tpu.memory_space<vmem>>, %arg7: memref<1x128xf32, #tpu.memory_space<vmem>>, %arg8: memref<128x4xf32, #tpu.memory_space<vmem>>, %arg9: memref<1x4xf32, #tpu.memory_space<vmem>>, %arg10: memref<1x1x4xf32, #tpu.memory_space<vmem>>, %arg11: memref<1x4096xf32, #tpu.memory_space<vmem>>) attributes {dimension_semantics = [#tpu.dimension_semantics<parallel>], iteration_bounds = array<i64: 2>, scalar_prefetch = 0 : i64, scratch_operands = 1 : i64, tpu.core_type = #tpu.core_type<tc>, window_params = [{transform_indices = @transform_0, window_bounds = array<i64: 1, 28, 1>}, {pipeline_mode = #tpu.pipeline_mode<synchronous>, transform_indices = @transform_1, window_bounds = array<i64: 7, 96>}, {pipeline_mode = #tpu.pipeline_mode<synchronous>, transform_indices = @transform_2, window_bounds = array<i64: 1, 96>}, {pipeline_mode = #tpu.pipeline_mode<synchronous>, transform_indices = @transform_3, window_bounds = array<i64: 7, 96, 256>}, {pipeline_mode = #tpu.pipeline_mode<synchronous>, transform_indices = @transform_4, window_bounds = array<i64: 1, 256>}, {pipeline_mode = #tpu.pipeline_mode<synchronous>, transform_indices = @transform_5, window_bounds = array<i64: 4096, 128>}, {pipeline_mode = #tpu.pipeline_mode<synchronous>, transform_indices = @transform_6, window_bounds = array<i64: 1, 128>}, {pipeline_mode = #tpu.pipeline_mode<synchronous>, transform_indices = @transform_7, window_bounds = array<i64: 128, 4>}, {pipeline_mode = #tpu.pipeline_mode<synchronous>, transform_indices = @transform_8, window_bounds = array<i64: 1, 4>}, {transform_indices = @transform_9, window_bounds = array<i64: 1, 1, 4>}]} {
    %c0 = arith.constant 0 : index
    %c0_0 = arith.constant 0 : index
    %c0_1 = arith.constant 0 : index
    %0 = vector.load %arg1[%c0, %c0_0, %c0_1] : memref<1x28x1xf32, #tpu.memory_space<vmem>>, vector<1x28x1xf32>
    %1 = vector.shape_cast %0 : vector<1x28x1xf32> to vector<28x1xf32>
    %2 = vector.extract_strided_slice %1 {offsets = [0, 0], sizes = [22, 1], strides = [1, 1]} : vector<28x1xf32> to vector<22x1xf32>
    %c0_2 = arith.constant 0 : index
    %c0_3 = arith.constant 0 : index
    %3 = vector.load %arg2[%c0_2, %c0_3] : memref<7x96xf32, #tpu.memory_space<vmem>>, vector<1x96xf32>
    %4 = vector.broadcast %2 : vector<22x1xf32> to vector<22x96xf32>
    %5 = vector.broadcast %3 : vector<1x96xf32> to vector<22x96xf32>
    %6 = arith.mulf %4, %5 : vector<22x96xf32>
    %7 = vector.extract_strided_slice %1 {offsets = [1, 0], sizes = [22, 1], strides = [1, 1]} : vector<28x1xf32> to vector<22x1xf32>
    %c1 = arith.constant 1 : index
    %c0_4 = arith.constant 0 : index
    %8 = vector.load %arg2[%c1, %c0_4] : memref<7x96xf32, #tpu.memory_space<vmem>>, vector<1x96xf32>
    %9 = vector.broadcast %7 : vector<22x1xf32> to vector<22x96xf32>
    %10 = vector.broadcast %8 : vector<1x96xf32> to vector<22x96xf32>
    %11 = arith.mulf %9, %10 : vector<22x96xf32>
    %12 = arith.addf %6, %11 : vector<22x96xf32>
    %13 = vector.extract_strided_slice %1 {offsets = [2, 0], sizes = [22, 1], strides = [1, 1]} : vector<28x1xf32> to vector<22x1xf32>
    %c2 = arith.constant 2 : index
    %c0_5 = arith.constant 0 : index
    %14 = vector.load %arg2[%c2, %c0_5] : memref<7x96xf32, #tpu.memory_space<vmem>>, vector<1x96xf32>
    %15 = vector.broadcast %13 : vector<22x1xf32> to vector<22x96xf32>
    %16 = vector.broadcast %14 : vector<1x96xf32> to vector<22x96xf32>
    %17 = arith.mulf %15, %16 : vector<22x96xf32>
    %18 = arith.addf %12, %17 : vector<22x96xf32>
    %19 = vector.extract_strided_slice %1 {offsets = [3, 0], sizes = [22, 1], strides = [1, 1]} : vector<28x1xf32> to vector<22x1xf32>
    %c3 = arith.constant 3 : index
    %c0_6 = arith.constant 0 : index
    %20 = vector.load %arg2[%c3, %c0_6] : memref<7x96xf32, #tpu.memory_space<vmem>>, vector<1x96xf32>
    %21 = vector.broadcast %19 : vector<22x1xf32> to vector<22x96xf32>
    %22 = vector.broadcast %20 : vector<1x96xf32> to vector<22x96xf32>
    %23 = arith.mulf %21, %22 : vector<22x96xf32>
    %24 = arith.addf %18, %23 : vector<22x96xf32>
    %25 = vector.extract_strided_slice %1 {offsets = [4, 0], sizes = [22, 1], strides = [1, 1]} : vector<28x1xf32> to vector<22x1xf32>
    %c4 = arith.constant 4 : index
    %c0_7 = arith.constant 0 : index
    %26 = vector.load %arg2[%c4, %c0_7] : memref<7x96xf32, #tpu.memory_space<vmem>>, vector<1x96xf32>
    %27 = vector.broadcast %25 : vector<22x1xf32> to vector<22x96xf32>
    %28 = vector.broadcast %26 : vector<1x96xf32> to vector<22x96xf32>
    %29 = arith.mulf %27, %28 : vector<22x96xf32>
    %30 = arith.addf %24, %29 : vector<22x96xf32>
    %31 = vector.extract_strided_slice %1 {offsets = [5, 0], sizes = [22, 1], strides = [1, 1]} : vector<28x1xf32> to vector<22x1xf32>
    %c5 = arith.constant 5 : index
    %c0_8 = arith.constant 0 : index
    %32 = vector.load %arg2[%c5, %c0_8] : memref<7x96xf32, #tpu.memory_space<vmem>>, vector<1x96xf32>
    %33 = vector.broadcast %31 : vector<22x1xf32> to vector<22x96xf32>
    %34 = vector.broadcast %32 : vector<1x96xf32> to vector<22x96xf32>
    %35 = arith.mulf %33, %34 : vector<22x96xf32>
    %36 = arith.addf %30, %35 : vector<22x96xf32>
    %37 = vector.extract_strided_slice %1 {offsets = [6, 0], sizes = [22, 1], strides = [1, 1]} : vector<28x1xf32> to vector<22x1xf32>
    %c6 = arith.constant 6 : index
    %c0_9 = arith.constant 0 : index
    %38 = vector.load %arg2[%c6, %c0_9] : memref<7x96xf32, #tpu.memory_space<vmem>>, vector<1x96xf32>
    %39 = vector.broadcast %37 : vector<22x1xf32> to vector<22x96xf32>
    %40 = vector.broadcast %38 : vector<1x96xf32> to vector<22x96xf32>
    %41 = arith.mulf %39, %40 : vector<22x96xf32>
    %42 = arith.addf %36, %41 : vector<22x96xf32>
    %c0_10 = arith.constant 0 : index
    %c0_11 = arith.constant 0 : index
    %43 = vector.load %arg3[%c0_10, %c0_11] : memref<1x96xf32, #tpu.memory_space<vmem>>, vector<1x96xf32>
    %44 = vector.broadcast %43 : vector<1x96xf32> to vector<22x96xf32>
    %45 = arith.addf %42, %44 : vector<22x96xf32>
    %cst = arith.constant 0.000000e+00 : f32
    %46 = vector.broadcast %cst : f32 to vector<22x96xf32>
    %47 = arith.maximumf %45, %46 : vector<22x96xf32>
    %48 = tpu.iota {dimensions = array<i32: 0>} : vector<22x96xi32>
    %c3_i32 = arith.constant 3 : i32
    %49 = vector.broadcast %c3_i32 : i32 to vector<22x96xi32>
    %50 = arith.cmpi sge, %48, %49 : vector<22x96xi32>
    %c19_i32 = arith.constant 19 : i32
    %51 = vector.broadcast %c19_i32 : i32 to vector<22x96xi32>
    %52 = arith.cmpi slt, %48, %51 : vector<22x96xi32>
    %53 = arith.andi %50, %52 : vector<22x96xi1>
    %cst_12 = arith.constant 0.000000e+00 : f32
    %54 = vector.broadcast %cst_12 : f32 to vector<22x96xf32>
    %55 = arith.select %53, %47, %54 : vector<22x96xi1>, vector<22x96xf32>
    %56 = vector.extract_strided_slice %55 {offsets = [0, 0], sizes = [16, 96], strides = [1, 1]} : vector<22x96xf32> to vector<16x96xf32>
    %c0_13 = arith.constant 0 : index
    %c0_14 = arith.constant 0 : index
    %c0_15 = arith.constant 0 : index
    %57 = vector.load %arg4[%c0_13, %c0_14, %c0_15] : memref<7x96x256xf32, #tpu.memory_space<vmem>>, vector<1x96x256xf32>
    %58 = vector.shape_cast %57 : vector<1x96x256xf32> to vector<96x256xf32>
    %cst_16 = arith.constant dense<0.000000e+00> : vector<16x256xf32>
    %59 = tpu.matmul %56, %58, %cst_16 {dimension_numbers = #tpu.dot_dimension_numbers<[1], [0], [0], [1], [0, 0, 1, 1], [], []>} : vector<16x96xf32>, vector<96x256xf32>, vector<16x256xf32> -> vector<16x256xf32>
    %60 = vector.extract_strided_slice %55 {offsets = [1, 0], sizes = [16, 96], strides = [1, 1]} : vector<22x96xf32> to vector<16x96xf32>
    %c1_17 = arith.constant 1 : index
    %c0_18 = arith.constant 0 : index
    %c0_19 = arith.constant 0 : index
    %61 = vector.load %arg4[%c1_17, %c0_18, %c0_19] : memref<7x96x256xf32, #tpu.memory_space<vmem>>, vector<1x96x256xf32>
    %62 = vector.shape_cast %61 : vector<1x96x256xf32> to vector<96x256xf32>
    %cst_20 = arith.constant dense<0.000000e+00> : vector<16x256xf32>
    %63 = tpu.matmul %60, %62, %cst_20 {dimension_numbers = #tpu.dot_dimension_numbers<[1], [0], [0], [1], [0, 0, 1, 1], [], []>} : vector<16x96xf32>, vector<96x256xf32>, vector<16x256xf32> -> vector<16x256xf32>
    %64 = arith.addf %59, %63 : vector<16x256xf32>
    %65 = vector.extract_strided_slice %55 {offsets = [2, 0], sizes = [16, 96], strides = [1, 1]} : vector<22x96xf32> to vector<16x96xf32>
    %c2_21 = arith.constant 2 : index
    %c0_22 = arith.constant 0 : index
    %c0_23 = arith.constant 0 : index
    %66 = vector.load %arg4[%c2_21, %c0_22, %c0_23] : memref<7x96x256xf32, #tpu.memory_space<vmem>>, vector<1x96x256xf32>
    %67 = vector.shape_cast %66 : vector<1x96x256xf32> to vector<96x256xf32>
    %cst_24 = arith.constant dense<0.000000e+00> : vector<16x256xf32>
    %68 = tpu.matmul %65, %67, %cst_24 {dimension_numbers = #tpu.dot_dimension_numbers<[1], [0], [0], [1], [0, 0, 1, 1], [], []>} : vector<16x96xf32>, vector<96x256xf32>, vector<16x256xf32> -> vector<16x256xf32>
    %69 = arith.addf %64, %68 : vector<16x256xf32>
    %70 = vector.extract_strided_slice %55 {offsets = [3, 0], sizes = [16, 96], strides = [1, 1]} : vector<22x96xf32> to vector<16x96xf32>
    %c3_25 = arith.constant 3 : index
    %c0_26 = arith.constant 0 : index
    %c0_27 = arith.constant 0 : index
    %71 = vector.load %arg4[%c3_25, %c0_26, %c0_27] : memref<7x96x256xf32, #tpu.memory_space<vmem>>, vector<1x96x256xf32>
    %72 = vector.shape_cast %71 : vector<1x96x256xf32> to vector<96x256xf32>
    %cst_28 = arith.constant dense<0.000000e+00> : vector<16x256xf32>
    %73 = tpu.matmul %70, %72, %cst_28 {dimension_numbers = #tpu.dot_dimension_numbers<[1], [0], [0], [1], [0, 0, 1, 1], [], []>} : vector<16x96xf32>, vector<96x256xf32>, vector<16x256xf32> -> vector<16x256xf32>
    %74 = arith.addf %69, %73 : vector<16x256xf32>
    %75 = vector.extract_strided_slice %55 {offsets = [4, 0], sizes = [16, 96], strides = [1, 1]} : vector<22x96xf32> to vector<16x96xf32>
    %c4_29 = arith.constant 4 : index
    %c0_30 = arith.constant 0 : index
    %c0_31 = arith.constant 0 : index
    %76 = vector.load %arg4[%c4_29, %c0_30, %c0_31] : memref<7x96x256xf32, #tpu.memory_space<vmem>>, vector<1x96x256xf32>
    %77 = vector.shape_cast %76 : vector<1x96x256xf32> to vector<96x256xf32>
    %cst_32 = arith.constant dense<0.000000e+00> : vector<16x256xf32>
    %78 = tpu.matmul %75, %77, %cst_32 {dimension_numbers = #tpu.dot_dimension_numbers<[1], [0], [0], [1], [0, 0, 1, 1], [], []>} : vector<16x96xf32>, vector<96x256xf32>, vector<16x256xf32> -> vector<16x256xf32>
    %79 = arith.addf %74, %78 : vector<16x256xf32>
    %80 = vector.extract_strided_slice %55 {offsets = [5, 0], sizes = [16, 96], strides = [1, 1]} : vector<22x96xf32> to vector<16x96xf32>
    %c5_33 = arith.constant 5 : index
    %c0_34 = arith.constant 0 : index
    %c0_35 = arith.constant 0 : index
    %81 = vector.load %arg4[%c5_33, %c0_34, %c0_35] : memref<7x96x256xf32, #tpu.memory_space<vmem>>, vector<1x96x256xf32>
    %82 = vector.shape_cast %81 : vector<1x96x256xf32> to vector<96x256xf32>
    %cst_36 = arith.constant dense<0.000000e+00> : vector<16x256xf32>
    %83 = tpu.matmul %80, %82, %cst_36 {dimension_numbers = #tpu.dot_dimension_numbers<[1], [0], [0], [1], [0, 0, 1, 1], [], []>} : vector<16x96xf32>, vector<96x256xf32>, vector<16x256xf32> -> vector<16x256xf32>
    %84 = arith.addf %79, %83 : vector<16x256xf32>
    %85 = vector.extract_strided_slice %55 {offsets = [6, 0], sizes = [16, 96], strides = [1, 1]} : vector<22x96xf32> to vector<16x96xf32>
    %c6_37 = arith.constant 6 : index
    %c0_38 = arith.constant 0 : index
    %c0_39 = arith.constant 0 : index
    %86 = vector.load %arg4[%c6_37, %c0_38, %c0_39] : memref<7x96x256xf32, #tpu.memory_space<vmem>>, vector<1x96x256xf32>
    %87 = vector.shape_cast %86 : vector<1x96x256xf32> to vector<96x256xf32>
    %cst_40 = arith.constant dense<0.000000e+00> : vector<16x256xf32>
    %88 = tpu.matmul %85, %87, %cst_40 {dimension_numbers = #tpu.dot_dimension_numbers<[1], [0], [0], [1], [0, 0, 1, 1], [], []>} : vector<16x96xf32>, vector<96x256xf32>, vector<16x256xf32> -> vector<16x256xf32>
    %89 = arith.addf %84, %88 : vector<16x256xf32>
    %c0_41 = arith.constant 0 : index
    %c0_42 = arith.constant 0 : index
    %90 = vector.load %arg5[%c0_41, %c0_42] : memref<1x256xf32, #tpu.memory_space<vmem>>, vector<1x256xf32>
    %91 = vector.broadcast %90 : vector<1x256xf32> to vector<16x256xf32>
    %92 = arith.addf %89, %91 : vector<16x256xf32>
    %cst_43 = arith.constant 0.000000e+00 : f32
    %93 = vector.broadcast %cst_43 : f32 to vector<16x256xf32>
    %94 = arith.maximumf %92, %93 : vector<16x256xf32>
    %95 = vector.extract_strided_slice %94 {offsets = [0, 0], sizes = [1, 256], strides = [1, 1]} : vector<16x256xf32> to vector<1x256xf32>
    %c0_44 = arith.constant 0 : index
    %c0_45 = arith.constant 0 : index
    %96 = vector.load %arg11[%c0_44, %c0_45] : memref<1x4096xf32, #tpu.memory_space<vmem>>, vector<1x256xf32>
    tpu.vector_store %arg11[%c0_44, %c0_45], %95 {strides = array<i32>} : memref<1x4096xf32, #tpu.memory_space<vmem>>, vector<1x256xf32>,
    %97 = vector.extract_strided_slice %94 {offsets = [1, 0], sizes = [1, 256], strides = [1, 1]} : vector<16x256xf32> to vector<1x256xf32>
    %c0_46 = arith.constant 0 : index
    %c256 = arith.constant 256 : index
    %98 = vector.load %arg11[%c0_46, %c256] : memref<1x4096xf32, #tpu.memory_space<vmem>>, vector<1x256xf32>
    tpu.vector_store %arg11[%c0_46, %c256], %97 {strides = array<i32>} : memref<1x4096xf32, #tpu.memory_space<vmem>>, vector<1x256xf32>,
    %99 = vector.extract_strided_slice %94 {offsets = [2, 0], sizes = [1, 256], strides = [1, 1]} : vector<16x256xf32> to vector<1x256xf32>
    %c0_47 = arith.constant 0 : index
    %c512 = arith.constant 512 : index
    %100 = vector.load %arg11[%c0_47, %c512] : memref<1x4096xf32, #tpu.memory_space<vmem>>, vector<1x256xf32>
    tpu.vector_store %arg11[%c0_47, %c512], %99 {strides = array<i32>} : memref<1x4096xf32, #tpu.memory_space<vmem>>, vector<1x256xf32>,
    %101 = vector.extract_strided_slice %94 {offsets = [3, 0], sizes = [1, 256], strides = [1, 1]} : vector<16x256xf32> to vector<1x256xf32>
    %c0_48 = arith.constant 0 : index
    %c768 = arith.constant 768 : index
    %102 = vector.load %arg11[%c0_48, %c768] : memref<1x4096xf32, #tpu.memory_space<vmem>>, vector<1x256xf32>
    tpu.vector_store %arg11[%c0_48, %c768], %101 {strides = array<i32>} : memref<1x4096xf32, #tpu.memory_space<vmem>>, vector<1x256xf32>,
    %103 = vector.extract_strided_slice %94 {offsets = [4, 0], sizes = [1, 256], strides = [1, 1]} : vector<16x256xf32> to vector<1x256xf32>
    %c0_49 = arith.constant 0 : index
    %c1024 = arith.constant 1024 : index
    %104 = vector.load %arg11[%c0_49, %c1024] : memref<1x4096xf32, #tpu.memory_space<vmem>>, vector<1x256xf32>
    tpu.vector_store %arg11[%c0_49, %c1024], %103 {strides = array<i32>} : memref<1x4096xf32, #tpu.memory_space<vmem>>, vector<1x256xf32>,
    %105 = vector.extract_strided_slice %94 {offsets = [5, 0], sizes = [1, 256], strides = [1, 1]} : vector<16x256xf32> to vector<1x256xf32>
    %c0_50 = arith.constant 0 : index
    %c1280 = arith.constant 1280 : index
    %106 = vector.load %arg11[%c0_50, %c1280] : memref<1x4096xf32, #tpu.memory_space<vmem>>, vector<1x256xf32>
    tpu.vector_store %arg11[%c0_50, %c1280], %105 {strides = array<i32>} : memref<1x4096xf32, #tpu.memory_space<vmem>>, vector<1x256xf32>,
    %107 = vector.extract_strided_slice %94 {offsets = [6, 0], sizes = [1, 256], strides = [1, 1]} : vector<16x256xf32> to vector<1x256xf32>
    %c0_51 = arith.constant 0 : index
    %c1536 = arith.constant 1536 : index
    %108 = vector.load %arg11[%c0_51, %c1536] : memref<1x4096xf32, #tpu.memory_space<vmem>>, vector<1x256xf32>
    tpu.vector_store %arg11[%c0_51, %c1536], %107 {strides = array<i32>} : memref<1x4096xf32, #tpu.memory_space<vmem>>, vector<1x256xf32>,
    %109 = vector.extract_strided_slice %94 {offsets = [7, 0], sizes = [1, 256], strides = [1, 1]} : vector<16x256xf32> to vector<1x256xf32>
    %c0_52 = arith.constant 0 : index
    %c1792 = arith.constant 1792 : index
    %110 = vector.load %arg11[%c0_52, %c1792] : memref<1x4096xf32, #tpu.memory_space<vmem>>, vector<1x256xf32>
    tpu.vector_store %arg11[%c0_52, %c1792], %109 {strides = array<i32>} : memref<1x4096xf32, #tpu.memory_space<vmem>>, vector<1x256xf32>,
    %111 = vector.extract_strided_slice %94 {offsets = [8, 0], sizes = [1, 256], strides = [1, 1]} : vector<16x256xf32> to vector<1x256xf32>
    %c0_53 = arith.constant 0 : index
    %c2048 = arith.constant 2048 : index
    %112 = vector.load %arg11[%c0_53, %c2048] : memref<1x4096xf32, #tpu.memory_space<vmem>>, vector<1x256xf32>
    tpu.vector_store %arg11[%c0_53, %c2048], %111 {strides = array<i32>} : memref<1x4096xf32, #tpu.memory_space<vmem>>, vector<1x256xf32>,
    %113 = vector.extract_strided_slice %94 {offsets = [9, 0], sizes = [1, 256], strides = [1, 1]} : vector<16x256xf32> to vector<1x256xf32>
    %c0_54 = arith.constant 0 : index
    %c2304 = arith.constant 2304 : index
    %114 = vector.load %arg11[%c0_54, %c2304] : memref<1x4096xf32, #tpu.memory_space<vmem>>, vector<1x256xf32>
    tpu.vector_store %arg11[%c0_54, %c2304], %113 {strides = array<i32>} : memref<1x4096xf32, #tpu.memory_space<vmem>>, vector<1x256xf32>,
    %115 = vector.extract_strided_slice %94 {offsets = [10, 0], sizes = [1, 256], strides = [1, 1]} : vector<16x256xf32> to vector<1x256xf32>
    %c0_55 = arith.constant 0 : index
    %c2560 = arith.constant 2560 : index
    %116 = vector.load %arg11[%c0_55, %c2560] : memref<1x4096xf32, #tpu.memory_space<vmem>>, vector<1x256xf32>
    tpu.vector_store %arg11[%c0_55, %c2560], %115 {strides = array<i32>} : memref<1x4096xf32, #tpu.memory_space<vmem>>, vector<1x256xf32>,
    %117 = vector.extract_strided_slice %94 {offsets = [11, 0], sizes = [1, 256], strides = [1, 1]} : vector<16x256xf32> to vector<1x256xf32>
    %c0_56 = arith.constant 0 : index
    %c2816 = arith.constant 2816 : index
    %118 = vector.load %arg11[%c0_56, %c2816] : memref<1x4096xf32, #tpu.memory_space<vmem>>, vector<1x256xf32>
    tpu.vector_store %arg11[%c0_56, %c2816], %117 {strides = array<i32>} : memref<1x4096xf32, #tpu.memory_space<vmem>>, vector<1x256xf32>,
    %119 = vector.extract_strided_slice %94 {offsets = [12, 0], sizes = [1, 256], strides = [1, 1]} : vector<16x256xf32> to vector<1x256xf32>
    %c0_57 = arith.constant 0 : index
    %c3072 = arith.constant 3072 : index
    %120 = vector.load %arg11[%c0_57, %c3072] : memref<1x4096xf32, #tpu.memory_space<vmem>>, vector<1x256xf32>
    tpu.vector_store %arg11[%c0_57, %c3072], %119 {strides = array<i32>} : memref<1x4096xf32, #tpu.memory_space<vmem>>, vector<1x256xf32>,
    %121 = vector.extract_strided_slice %94 {offsets = [13, 0], sizes = [1, 256], strides = [1, 1]} : vector<16x256xf32> to vector<1x256xf32>
    %c0_58 = arith.constant 0 : index
    %c3328 = arith.constant 3328 : index
    %122 = vector.load %arg11[%c0_58, %c3328] : memref<1x4096xf32, #tpu.memory_space<vmem>>, vector<1x256xf32>
    tpu.vector_store %arg11[%c0_58, %c3328], %121 {strides = array<i32>} : memref<1x4096xf32, #tpu.memory_space<vmem>>, vector<1x256xf32>,
    %123 = vector.extract_strided_slice %94 {offsets = [14, 0], sizes = [1, 256], strides = [1, 1]} : vector<16x256xf32> to vector<1x256xf32>
    %c0_59 = arith.constant 0 : index
    %c3584 = arith.constant 3584 : index
    %124 = vector.load %arg11[%c0_59, %c3584] : memref<1x4096xf32, #tpu.memory_space<vmem>>, vector<1x256xf32>
    tpu.vector_store %arg11[%c0_59, %c3584], %123 {strides = array<i32>} : memref<1x4096xf32, #tpu.memory_space<vmem>>, vector<1x256xf32>,
    %125 = vector.extract_strided_slice %94 {offsets = [15, 0], sizes = [1, 256], strides = [1, 1]} : vector<16x256xf32> to vector<1x256xf32>
    %c0_60 = arith.constant 0 : index
    %c3840 = arith.constant 3840 : index
    %126 = vector.load %arg11[%c0_60, %c3840] : memref<1x4096xf32, #tpu.memory_space<vmem>>, vector<1x256xf32>
    tpu.vector_store %arg11[%c0_60, %c3840], %125 {strides = array<i32>} : memref<1x4096xf32, #tpu.memory_space<vmem>>, vector<1x256xf32>,
    %c0_61 = arith.constant 0 : index
    %c0_62 = arith.constant 0 : index
    %127 = vector.load %arg11[%c0_61, %c0_62] : memref<1x4096xf32, #tpu.memory_space<vmem>>, vector<1x4096xf32>
    %c0_63 = arith.constant 0 : index
    %c0_64 = arith.constant 0 : index
    %128 = vector.load %arg6[%c0_63, %c0_64] : memref<4096x128xf32, #tpu.memory_space<vmem>>, vector<4096x128xf32>
    %cst_65 = arith.constant dense<0.000000e+00> : vector<1x128xf32>
    %129 = tpu.matmul %127, %128, %cst_65 {dimension_numbers = #tpu.dot_dimension_numbers<[1], [0], [0], [1], [0, 0, 1, 1], [], []>} : vector<1x4096xf32>, vector<4096x128xf32>, vector<1x128xf32> -> vector<1x128xf32>
    %c0_66 = arith.constant 0 : index
    %c0_67 = arith.constant 0 : index
    %130 = vector.load %arg7[%c0_66, %c0_67] : memref<1x128xf32, #tpu.memory_space<vmem>>, vector<1x128xf32>
    %131 = arith.addf %129, %130 : vector<1x128xf32>
    %cst_68 = arith.constant 0.000000e+00 : f32
    %132 = vector.broadcast %cst_68 : f32 to vector<1x128xf32>
    %133 = arith.maximumf %131, %132 : vector<1x128xf32>
    %c0_69 = arith.constant 0 : index
    %c0_70 = arith.constant 0 : index
    %134 = vector.load %arg8[%c0_69, %c0_70] : memref<128x4xf32, #tpu.memory_space<vmem>>, vector<128x4xf32>
    %cst_71 = arith.constant dense<0.000000e+00> : vector<1x4xf32>
    %135 = tpu.matmul %133, %134, %cst_71 {dimension_numbers = #tpu.dot_dimension_numbers<[1], [0], [0], [1], [0, 0, 1, 1], [], []>} : vector<1x128xf32>, vector<128x4xf32>, vector<1x4xf32> -> vector<1x4xf32>
    %c0_72 = arith.constant 0 : index
    %c0_73 = arith.constant 0 : index
    %136 = vector.load %arg9[%c0_72, %c0_73] : memref<1x4xf32, #tpu.memory_space<vmem>>, vector<1x4xf32>
    %137 = arith.addf %135, %136 : vector<1x4xf32>
    %c0_74 = arith.constant 0 : index
    %c0_75 = arith.constant 0 : index
    %c0_76 = arith.constant 0 : index
    %138 = vector.load %arg10[%c0_74, %c0_75, %c0_76] : memref<1x1x4xf32, #tpu.memory_space<vmem>>, vector<1x1x4xf32>
    %139 = vector.shape_cast %138 : vector<1x1x4xf32> to vector<1x4xf32>
    %140 = vector.shape_cast %137 : vector<1x4xf32> to vector<1x1x4xf32>
    tpu.vector_store %arg10[%c0_74, %c0_75, %c0_76], %140 {strides = array<i32>} : memref<1x1x4xf32, #tpu.memory_space<vmem>>, vector<1x1x4xf32>,
    return
  }
  func.func @transform_0(%arg0: i32) -> (i32, i32, i32) {
    %c0_i32 = arith.constant 0 : i32
    %c0_i32_0 = arith.constant 0 : i32
    %c0_i32_1 = arith.constant 0 : i32
    return %arg0, %c0_i32, %c0_i32_0 : i32, i32, i32
  }
  func.func @transform_1(%arg0: i32) -> (i32, i32) {
    %c0_i32 = arith.constant 0 : i32
    %c0_i32_0 = arith.constant 0 : i32
    %c0_i32_1 = arith.constant 0 : i32
    return %c0_i32, %c0_i32_0 : i32, i32
  }
  func.func @transform_2(%arg0: i32) -> (i32, i32) {
    %c0_i32 = arith.constant 0 : i32
    %c0_i32_0 = arith.constant 0 : i32
    %c0_i32_1 = arith.constant 0 : i32
    return %c0_i32, %c0_i32_0 : i32, i32
  }
  func.func @transform_3(%arg0: i32) -> (i32, i32, i32) {
    %c0_i32 = arith.constant 0 : i32
    %c0_i32_0 = arith.constant 0 : i32
    %c0_i32_1 = arith.constant 0 : i32
    %c0_i32_2 = arith.constant 0 : i32
    return %c0_i32, %c0_i32_0, %c0_i32_1 : i32, i32, i32
  }
  func.func @transform_4(%arg0: i32) -> (i32, i32) {
    %c0_i32 = arith.constant 0 : i32
    %c0_i32_0 = arith.constant 0 : i32
    %c0_i32_1 = arith.constant 0 : i32
    return %c0_i32, %c0_i32_0 : i32, i32
  }
  func.func @transform_5(%arg0: i32) -> (i32, i32) {
    %c0_i32 = arith.constant 0 : i32
    %c0_i32_0 = arith.constant 0 : i32
    %c0_i32_1 = arith.constant 0 : i32
    return %c0_i32, %c0_i32_0 : i32, i32
  }
  func.func @transform_6(%arg0: i32) -> (i32, i32) {
    %c0_i32 = arith.constant 0 : i32
    %c0_i32_0 = arith.constant 0 : i32
    %c0_i32_1 = arith.constant 0 : i32
    return %c0_i32, %c0_i32_0 : i32, i32
  }
  func.func @transform_7(%arg0: i32) -> (i32, i32) {
    %c0_i32 = arith.constant 0 : i32
    %c0_i32_0 = arith.constant 0 : i32
    %c0_i32_1 = arith.constant 0 : i32
    return %c0_i32, %c0_i32_0 : i32, i32
  }
  func.func @transform_8(%arg0: i32) -> (i32, i32) {
    %c0_i32 = arith.constant 0 : i32
    %c0_i32_0 = arith.constant 0 : i32
    %c0_i32_1 = arith.constant 0 : i32
    return %c0_i32, %c0_i32_0 : i32, i32
  }
  func.func @transform_9(%arg0: i32) -> (i32, i32, i32) {
    %c0_i32 = arith.constant 0 : i32
    %c0_i32_0 = arith.constant 0 : i32
    %c0_i32_1 = arith.constant 0 : i32
    return %arg0, %c0_i32, %c0_i32_0 : i32, i32, i32
  }
}

</mosaic_0001>

<llo_original>
// kernel: cnn_classifier_forward.1
$region0: #{cnn_classifier_forward.1}
  #allocation0 [shape = 'u32[]', space=smem, size = 0x4, offset = 0x4, fixed_abs, tag = 'smem constant byte address 0x4 - core index']
  #allocation1 [shape = 'u32[144,128]{1,0:T(1,128)}', space=vmem, size = 0x12000, scoped, tag = 'internal scratch']
  #allocation2 [shape = 'f32[1,4096]{1,0:T(1,128)}', space=vmem, size = 0x4000, scoped, tag = 'scratch operand']
  %s0 = inlined_call_operand.vmem [shape: f32[2,28,1], index: 0, kind: input, shape index: {}]
  %s1 = inlined_call_operand.vmem [shape: f32[7,96], index: 1, kind: input, shape index: {}]
  %s2 = inlined_call_operand.vmem [shape: f32[1,96], index: 2, kind: input, shape index: {}]
  %s3 = inlined_call_operand.vmem [shape: f32[7,96,256], index: 3, kind: input, shape index: {}]
  %s4 = inlined_call_operand.vmem [shape: f32[1,256], index: 4, kind: input, shape index: {}]
  %s5 = inlined_call_operand.vmem [shape: f32[4096,128], index: 5, kind: input, shape index: {}]
  %s6 = inlined_call_operand.vmem [shape: f32[1,128], index: 6, kind: input, shape index: {}]
  %s7 = inlined_call_operand.vmem [shape: f32[128,4], index: 7, kind: input, shape index: {}]
  %s8 = inlined_call_operand.vmem [shape: f32[1,4], index: 8, kind: input, shape index: {}]
  %s9 = inlined_call_operand.hbm [shape: f32[2,1,4], index: 9, kind: output, shape index: {}]
  %s10 = sld [smem:[#allocation0]]
  $region69: #{cnn_classifier_forward.1} parent=0
    _
  %s12 = ssub.s32 1, %s10
  %s13 = scalar_select 0, %s12, %s10
  $region1: #{cnn_classifier_forward.1} parent=0
    #allocation3 [shape = 'u8[1024]{0}', space=vmem, size = 0x400, scoped, tag = 'output window, operand 0']
    #allocation4 [shape = 's32[2]{0}', space=sflag, size = 0x8, scoped, tag = 'scoped memory for cnn_classifier_forward.1']
    %14 = vsyncpa [#allocation4], 0
    %s15 = scalar_lea.sflag [#allocation4], 1
    %16 = vsyncpa %s15, 0
    loop: start=0, step=1, limit=4
    $region2: #{cnn_classifier_forward.1} parent=1 // loop_pre_header
      _
    $region3: #{cnn_classifier_forward.1} parent=1 // loop_header
      %s18 = sphi 0, %s22
      %p19 = scmp.ge.s32.totalorder %s18, 4
      %s28 = sphi 0, %s30
      %s31 = sphi 0, %s28
      %s32 = sphi 0, %s31
      %s48 = sphi 0, %s32
      %s52 = sphi 0, %s52
      %s54 = sphi 0, %s52
      %s55 = sphi 0, %s54
      %s69 = sphi 0, %s55
      %s73 = sphi 0, %s73
      %s75 = sphi 0, %s73
      %s76 = sphi 0, %s75
      %s90 = sphi 0, %s76
      %s94 = sphi 0, %s94
      %s96 = sphi 0, %s94
      %s97 = sphi 0, %s96
      %s111 = sphi 0, %s97
      %s115 = sphi 0, %s115
      %s117 = sphi 0, %s115
      %s118 = sphi 0, %s117
      %s132 = sphi 0, %s118
      %s136 = sphi 0, %s136
      %s138 = sphi 0, %s136
      %s139 = sphi 0, %s138
      %s153 = sphi 0, %s139
      %s157 = sphi 0, %s157
      %s159 = sphi 0, %s157
      %s160 = sphi 0, %s159
      %s174 = sphi 0, %s160
      %s178 = sphi 0, %s178
      %s180 = sphi 0, %s178
      %s181 = sphi 0, %s180
      %s195 = sphi 0, %s181
      %s199 = sphi 0, %s199
      %s201 = sphi 0, %s199
      %s202 = sphi 0, %s201
      %s216 = sphi 0, %s202
      %s222 = sphi 0, %s224
      %s225 = sphi 0, %s222
      %s226 = sphi 0, %s225
      %s242 = sphi 0, %s226
    $region4: #{cnn_classifier_forward.1} parent=1 // loop_header_branch
      %21 = sbr.rel (%p19) target = $region8
    $region5: #{cnn_classifier_forward.1} parent=1 // loop_body
      %s23 = ssub.s32 %s18, 1
      %s24 = ssub.s32 %s18, 2
      %s25 = sadd.s32 %s18, 1
      %s26 = ssub.s32 %s18, %s25
      %p27 = scmp.eq.s32.totalorder %s26, 0
      %s29 = sadd.s32 %s28, 1
      %s30 = scalar_select %p27, %s28, %s29
      %p33 = pneg %p27
      %p34 = scmp.eq.s32.totalorder %s18, 1
      %p35 = por %p33, %p34
      %p36 = scmp.ne.s32.totalorder %s28, %s31
      %p37 = scmp.eq.s32.totalorder %s18, 0
      %p38 = por %p36, %p37
      %p39 = scmp.ne.s32.totalorder %s28, %s31
      %p40 = scmp.eq.s32.totalorder %s23, 1
      %p41 = por %p39, %p40
      %p42 = scmp.ne.s32.totalorder %s31, %s32
      %p43 = scmp.eq.s32.totalorder %s23, 0
      %p44 = por %p42, %p43
      %p45 = scmp.ne.s32.totalorder %s31, %s32
      %p46 = scmp.eq.s32.totalorder %s24, 1
      %p47 = por %p45, %p46
      %p49 = scmp.ne.s32.totalorder %s32, %s48
      %p50 = scmp.eq.s32.totalorder %s24, 0
      %p51 = por %p49, %p50
      %s53 = sadd.s32 %s52, 1
      %p56 = scmp.eq.s32.totalorder %s18, 1
      %p57 = scmp.ne.s32.totalorder %s52, %s54
      %p58 = scmp.eq.s32.totalorder %s18, 0
      %p59 = por %p57, %p58
      %p60 = scmp.ne.s32.totalorder %s52, %s54
      %p61 = scmp.eq.s32.totalorder %s23, 1
      %p62 = por %p60, %p61
      %p63 = scmp.ne.s32.totalorder %s54, %s55
      %p64 = scmp.eq.s32.totalorder %s23, 0
      %p65 = por %p63, %p64
      %p66 = scmp.ne.s32.totalorder %s54, %s55
      %p67 = scmp.eq.s32.totalorder %s24, 1
      %p68 = por %p66, %p67
      %p70 = scmp.ne.s32.totalorder %s55, %s69
      %p71 = scmp.eq.s32.totalorder %s24, 0
      %p72 = por %p70, %p71
      %s74 = sadd.s32 %s73, 1
      %p77 = scmp.eq.s32.totalorder %s18, 1
      %p78 = scmp.ne.s32.totalorder %s73, %s75
      %p79 = scmp.eq.s32.totalorder %s18, 0
      %p80 = por %p78, %p79
      %p81 = scmp.ne.s32.totalorder %s73, %s75
      %p82 = scmp.eq.s32.totalorder %s23, 1
      %p83 = por %p81, %p82
      %p84 = scmp.ne.s32.totalorder %s75, %s76
      %p85 = scmp.eq.s32.totalorder %s23, 0
      %p86 = por %p84, %p85
      %p87 = scmp.ne.s32.totalorder %s75, %s76
      %p88 = scmp.eq.s32.totalorder %s24, 1
      %p89 = por %p87, %p88
      %p91 = scmp.ne.s32.totalorder %s76, %s90
      %p92 = scmp.eq.s32.totalorder %s24, 0
      %p93 = por %p91, %p92
      %s95 = sadd.s32 %s94, 1
      %p98 = scmp.eq.s32.totalorder %s18, 1
      %p99 = scmp.ne.s32.totalorder %s94, %s96
      %p100 = scmp.eq.s32.totalorder %s18, 0
      %p101 = por %p99, %p100
      %p102 = scmp.ne.s32.totalorder %s94, %s96
      %p103 = scmp.eq.s32.totalorder %s23, 1
      %p104 = por %p102, %p103
      %p105 = scmp.ne.s32.totalorder %s96, %s97
      %p106 = scmp.eq.s32.totalorder %s23, 0
      %p107 = por %p105, %p106
      %p108 = scmp.ne.s32.totalorder %s96, %s97
      %p109 = scmp.eq.s32.totalorder %s24, 1
      %p110 = por %p108, %p109
      %p112 = scmp.ne.s32.totalorder %s97, %s111
      %p113 = scmp.eq.s32.totalorder %s24, 0
      %p114 = por %p112, %p113
      %s116 = sadd.s32 %s115, 1
      %p119 = scmp.eq.s32.totalorder %s18, 1
      %p120 = scmp.ne.s32.totalorder %s115, %s117
      %p121 = scmp.eq.s32.totalorder %s18, 0
      %p122 = por %p120, %p121
      %p123 = scmp.ne.s32.totalorder %s115, %s117
      %p124 = scmp.eq.s32.totalorder %s23, 1
      %p125 = por %p123, %p124
      %p126 = scmp.ne.s32.totalorder %s117, %s118
      %p127 = scmp.eq.s32.totalorder %s23, 0
      %p128 = por %p126, %p127
      %p129 = scmp.ne.s32.totalorder %s117, %s118
      %p130 = scmp.eq.s32.totalorder %s24, 1
      %p131 = por %p129, %p130
      %p133 = scmp.ne.s32.totalorder %s118, %s132
      %p134 = scmp.eq.s32.totalorder %s24, 0
      %p135 = por %p133, %p134
      %s137 = sadd.s32 %s136, 1
      %p140 = scmp.eq.s32.totalorder %s18, 1
      %p141 = scmp.ne.s32.totalorder %s136, %s138
      %p142 = scmp.eq.s32.totalorder %s18, 0
      %p143 = por %p141, %p142
      %p144 = scmp.ne.s32.totalorder %s136, %s138
      %p145 = scmp.eq.s32.totalorder %s23, 1
      %p146 = por %p144, %p145
      %p147 = scmp.ne.s32.totalorder %s138, %s139
      %p148 = scmp.eq.s32.totalorder %s23, 0
      %p149 = por %p147, %p148
      %p150 = scmp.ne.s32.totalorder %s138, %s139
      %p151 = scmp.eq.s32.totalorder %s24, 1
      %p152 = por %p150, %p151
      %p154 = scmp.ne.s32.totalorder %s139, %s153
      %p155 = scmp.eq.s32.totalorder %s24, 0
      %p156 = por %p154, %p155
      %s158 = sadd.s32 %s157, 1
      %p161 = scmp.eq.s32.totalorder %s18, 1
      %p162 = scmp.ne.s32.totalorder %s157, %s159
      %p163 = scmp.eq.s32.totalorder %s18, 0
      %p164 = por %p162, %p163
      %p165 = scmp.ne.s32.totalorder %s157, %s159
      %p166 = scmp.eq.s32.totalorder %s23, 1
      %p167 = por %p165, %p166
      %p168 = scmp.ne.s32.totalorder %s159, %s160
      %p169 = scmp.eq.s32.totalorder %s23, 0
      %p170 = por %p168, %p169
      %p171 = scmp.ne.s32.totalorder %s159, %s160
      %p172 = scmp.eq.s32.totalorder %s24, 1
      %p173 = por %p171, %p172
      %p175 = scmp.ne.s32.totalorder %s160, %s174
      %p176 = scmp.eq.s32.totalorder %s24, 0
      %p177 = por %p175, %p176
      %s179 = sadd.s32 %s178, 1
      %p182 = scmp.eq.s32.totalorder %s18, 1
      %p183 = scmp.ne.s32.totalorder %s178, %s180
      %p184 = scmp.eq.s32.totalorder %s18, 0
      %p185 = por %p183, %p184
      %p186 = scmp.ne.s32.totalorder %s178, %s180
      %p187 = scmp.eq.s32.totalorder %s23, 1
      %p188 = por %p186, %p187
      %p189 = scmp.ne.s32.totalorder %s180, %s181
      %p190 = scmp.eq.s32.totalorder %s23, 0
      %p191 = por %p189, %p190
      %p192 = scmp.ne.s32.totalorder %s180, %s181
      %p193 = scmp.eq.s32.totalorder %s24, 1
      %p194 = por %p192, %p193
      %p196 = scmp.ne.s32.totalorder %s181, %s195
      %p197 = scmp.eq.s32.totalorder %s24, 0
      %p198 = por %p196, %p197
      %s200 = sadd.s32 %s199, 1
      %p203 = scmp.eq.s32.totalorder %s18, 1
      %p204 = scmp.ne.s32.totalorder %s199, %s201
      %p205 = scmp.eq.s32.totalorder %s18, 0
      %p206 = por %p204, %p205
      %p207 = scmp.ne.s32.totalorder %s199, %s201
      %p208 = scmp.eq.s32.totalorder %s23, 1
      %p209 = por %p207, %p208
      %p210 = scmp.ne.s32.totalorder %s201, %s202
      %p211 = scmp.eq.s32.totalorder %s23, 0
      %p212 = por %p210, %p211
      %p213 = scmp.ne.s32.totalorder %s201, %s202
      %p214 = scmp.eq.s32.totalorder %s24, 1
      %p215 = por %p213, %p214
      %p217 = scmp.ne.s32.totalorder %s202, %s216
      %p218 = scmp.eq.s32.totalorder %s24, 0
      %p219 = por %p217, %p218
      %s220 = ssub.s32 %s18, %s25
      %p221 = scmp.eq.s32.totalorder %s220, 0
      %s223 = sadd.s32 %s222, 1
      %s224 = scalar_select %p221, %s222, %s223
      %p227 = pneg %p221
      %p228 = scmp.eq.s32.totalorder %s18, 1
      %p229 = por %p227, %p228
      %p230 = scmp.ne.s32.totalorder %s222, %s225
      %p231 = scmp.eq.s32.totalorder %s18, 0
      %p232 = por %p230, %p231
      %p233 = scmp.ne.s32.totalorder %s222, %s225
      %p234 = scmp.eq.s32.totalorder %s23, 1
      %p235 = por %p233, %p234
      %p236 = scmp.ne.s32.totalorder %s225, %s226
      %p237 = scmp.eq.s32.totalorder %s23, 0
      %p238 = por %p236, %p237
      %p239 = scmp.ne.s32.totalorder %s225, %s226
      %p240 = scmp.eq.s32.totalorder %s24, 1
      %p241 = por %p239, %p240
      %p243 = scmp.ne.s32.totalorder %s226, %s242
      %p244 = scmp.eq.s32.totalorder %s24, 0
      %p245 = por %p243, %p244
      %p246 = scmp.le.s32.totalorder 1, %s18
      %p247 = scmp.lt.s32.totalorder %s18, 3
      %p248 = pnand %p246, %p247
      %p249 = pneg %p248
      // Predicated region
      $region9: #{cnn_classifier_forward.1} parent=5 // pred_check
        _
      $region10: #{cnn_classifier_forward.1} parent=5 // pred_check_branch
        %251 = sbr.rel (%p248) target = $region12
      $region11: #{cnn_classifier_forward.1} parent=5 // pred_region
        %s252 = ssub.s32 %s18, 1
        // Predicated region
        $region13: #{cnn_classifier_forward.1} parent=11 // pred_check
          %p253 = pneg %p65
        $region14: #{cnn_classifier_forward.1} parent=11 // pred_check_branch
          %255 = sbr.rel (%p253) target = $region16
        $region15: #{cnn_classifier_forward.1} parent=11 // pred_region
          _
        $region16: #{cnn_classifier_forward.1} parent=11 // pred_fallthru
          _
        // Predicated region
        $region17: #{cnn_classifier_forward.1} parent=11 // pred_check
          %p256 = pneg %p86
        $region18: #{cnn_classifier_forward.1} parent=11 // pred_check_branch
          %258 = sbr.rel (%p256) target = $region20
        $region19: #{cnn_classifier_forward.1} parent=11 // pred_region
          _
        $region20: #{cnn_classifier_forward.1} parent=11 // pred_fallthru
          _
        // Predicated region
        $region21: #{cnn_classifier_forward.1} parent=11 // pred_check
          %p259 = pneg %p107
        $region22: #{cnn_classifier_forward.1} parent=11 // pred_check_branch
          %261 = sbr.rel (%p259) target = $region24
        $region23: #{cnn_classifier_forward.1} parent=11 // pred_region
          _
        $region24: #{cnn_classifier_forward.1} parent=11 // pred_fallthru
          _
        // Predicated region
        $region25: #{cnn_classifier_forward.1} parent=11 // pred_check
          %p262 = pneg %p128
        $region26: #{cnn_classifier_forward.1} parent=11 // pred_check_branch
          %264 = sbr.rel (%p262) target = $region28
        $region27: #{cnn_classifier_forward.1} parent=11 // pred_region
          _
        $region28: #{cnn_classifier_forward.1} parent=11 // pred_fallthru
          _
        // Predicated region
        $region29: #{cnn_classifier_forward.1} parent=11 // pred_check
          %p265 = pneg %p149
        $region30: #{cnn_classifier_forward.1} parent=11 // pred_check_branch
          %267 = sbr.rel (%p265) target = $region32
        $region31: #{cnn_classifier_forward.1} parent=11 // pred_region
          _
        $region32: #{cnn_classifier_forward.1} parent=11 // pred_fallthru
          _
        // Predicated region
        $region33: #{cnn_classifier_forward.1} parent=11 // pred_check
          %p268 = pneg %p170
        $region34: #{cnn_classifier_forward.1} parent=11 // pred_check_branch
          %270 = sbr.rel (%p268) target = $region36
        $region35: #{cnn_classifier_forward.1} parent=11 // pred_region
          _
        $region36: #{cnn_classifier_forward.1} parent=11 // pred_fallthru
          _
        // Predicated region
        $region37: #{cnn_classifier_forward.1} parent=11 // pred_check
          %p271 = pneg %p191
        $region38: #{cnn_classifier_forward.1} parent=11 // pred_check_branch
          %273 = sbr.rel (%p271) target = $region40
        $region39: #{cnn_classifier_forward.1} parent=11 // pred_region
          _
        $region40: #{cnn_classifier_forward.1} parent=11 // pred_fallthru
          _
        // Predicated region
        $region41: #{cnn_classifier_forward.1} parent=11 // pred_check
          %p274 = pneg %p212
        $region42: #{cnn_classifier_forward.1} parent=11 // pred_check_branch
          %276 = sbr.rel (%p274) target = $region44
        $region43: #{cnn_classifier_forward.1} parent=11 // pred_region
          _
        $region44: #{cnn_classifier_forward.1} parent=11 // pred_fallthru
          _
      $region12: #{cnn_classifier_forward.1} parent=5 // pred_fallthru
        _
      %p277 = scmp.lt.s32.totalorder %s18, 2
      // Predicated region
      $region45: #{cnn_classifier_forward.1} parent=5 // pred_check
        %p278 = pneg %p277
      $region46: #{cnn_classifier_forward.1} parent=5 // pred_check_branch
        %280 = sbr.rel (%p278) target = $region48
      $region47: #{cnn_classifier_forward.1} parent=5 // pred_region
        // Predicated region
        $region49: #{cnn_classifier_forward.1} parent=47 // pred_check
          %p281 = pneg %p38
        $region50: #{cnn_classifier_forward.1} parent=47 // pred_check_branch
          %283 = sbr.rel (%p281) target = $region52
        $region51: #{cnn_classifier_forward.1} parent=47 // pred_region
          %p284 = scmp.lt.s32.totalorder %s18, 1
          %s285 = scalar_select %p284, %s18, 1
          %s286 = smul.addr %s285, 4
          %s287 = smul.addr %s286, 8
          %s288 = scalar_lea.vmem %s0, %s287
        $region52: #{cnn_classifier_forward.1} parent=47 // pred_fallthru
          _
      $region48: #{cnn_classifier_forward.1} parent=5 // pred_fallthru
        _
      %p289 = scmp.le.s32.totalorder 1, %s18
      %p290 = scmp.lt.s32.totalorder %s18, 3
      %p291 = pnand %p289, %p290
      %p292 = pneg %p291
      // Predicated region
      $region53: #{cnn_classifier_forward.1} parent=5 // pred_check
        _
      $region54: #{cnn_classifier_forward.1} parent=5 // pred_check_branch
        %294 = sbr.rel (%p291) target = $region56
      $region55: #{cnn_classifier_forward.1} parent=5 // pred_region
        %s295 = ssub.s32 %s18, 1
        %p296 = scmp.lt.s32.totalorder %s23, 1
        %s297 = scalar_select %p296, %s23, 1
        %s298 = smul.addr %s297, 4
        %s299 = smul.addr %s298, 8
        %s300 = scalar_lea.vmem %s0, %s299
        %p301 = pneg %p44
        %p302 = pneg %p41
        %p303 = pneg %p65
        %p304 = pneg %p62
        %p305 = pneg %p86
        %p306 = pneg %p83
        %p307 = pneg %p107
        %p308 = pneg %p104
        %p309 = pneg %p128
        %p310 = pneg %p125
        %p311 = pneg %p149
        %p312 = pneg %p146
        %p313 = pneg %p170
        %p314 = pneg %p167
        %p315 = pneg %p191
        %p316 = pneg %p188
        %p317 = pneg %p212
        %p318 = pneg %p209
        %p319 = pneg %p238
        %p320 = pneg %p235
        %s321 = sand.u32 %s225, 1
        %s322 = scalar_lea.sflag [#allocation4], %s321
        %s323 = sand.u32 %s225, 1
        %s324 = scalar_lea.vmem [#allocation3], %s323
        %p325 = scmp.lt.s32.totalorder %s23, 1
        %s326 = scalar_select %p325, %s23, 1
        %s327 = smul.addr %s326, 4
        %s328 = smul.addr %s327, 8
        %s329 = scalar_lea.vmem %s0, %s328
        %v330 = vld [vmem:[%s329] sm:$0xff]
        %v331 = vld [vmem:[%s329 + $0x8] sm:$0xff]
        %v332 = vld [vmem:[%s329 + $0x10] sm:$0xff]
        %v333 = vld [vmem:[%s329 + $0x18] sm:$0xf]
        %v334 = vld [vmem:[%s1] sm:$0x1]
        %336 = vset.pattern.permute.xlu0 0
        %337 = vperm.xlu0 %336, %v330
        %v338 = vpop.permute.xlu0 %337
        %341 = vset.pattern.permute.xlu0 0
        %342 = vperm.xlu0 %341, %v331
        %v343 = vpop.permute.xlu0 %342
        %346 = vset.pattern.permute.xlu0 0
        %347 = vperm.xlu0 %346, %v332
        %v348 = vpop.permute.xlu0 %347
        %v350 = vlaneseq
        %v351 = vshrl.u32 %v350, 7
        %v352 = vsub.s32 0, %v351
        %v353 = vrot.slane %v334, %v352
        %v354 = vmul.f32 %v338, %v353
        %v355 = vmul.f32 %v343, %v353
        %v356 = vmul.f32 %v348, %v353
        %v357 = vld [vmem:[%s1 + $0x1] sm:$0x1]
        %v358 = vlaneseq
        %v359 = vshrl.u32 %v358, 7
        %v360 = vsub.s32 0, %v359
        %v361 = vrot.slane %v357, %v360
        %v362 = vmul.f32 %v338, %v361
        %v363 = vmul.f32 %v343, %v361
        %v364 = vmul.f32 %v348, %v361
        %vm368 = vcmask 1046528
        %v369 = vrot.slane %v362, 1
        %v370 = vrot.slane %v363, 1
        %v371 = vsel %vm368, %v369, %v370
        %v372 = vrot.slane %v364, 1
        %v373 = vsel %vm368, %v370, %v372
        %v377 = vadd.f32 %v354, %v371
        %v378 = vadd.f32 %v355, %v373
        %v379 = vadd.f32 %v356, %v372
        %v380 = vld [vmem:[%s1 + $0x2] sm:$0x1]
        %v381 = vlaneseq
        %v382 = vshrl.u32 %v381, 7
        %v383 = vsub.s32 0, %v382
        %v384 = vrot.slane %v380, %v383
        %v385 = vmul.f32 %v338, %v384
        %v386 = vmul.f32 %v343, %v384
        %v387 = vmul.f32 %v348, %v384
        %vm391 = vcmask 1045504
        %v392 = vrot.slane %v385, 2
        %v393 = vrot.slane %v386, 2
        %v394 = vsel %vm391, %v392, %v393
        %v395 = vrot.slane %v387, 2
        %v396 = vsel %vm391, %v393, %v395
        %v400 = vadd.f32 %v377, %v394
        %v401 = vadd.f32 %v378, %v396
        %v402 = vadd.f32 %v379, %v395
        %v403 = vld [vmem:[%s1 + $0x3] sm:$0x1]
        %405 = vset.pattern.permute.xlu0 0
        %406 = vperm.xlu0 %405, %v333
        %v407 = vpop.permute.xlu0 %406
        %v409 = vlaneseq
        %v410 = vshrl.u32 %v409, 7
        %v411 = vsub.s32 0, %v410
        %v412 = vrot.slane %v403, %v411
        %v413 = vmul.f32 %v338, %v412
        %v414 = vmul.f32 %v343, %v412
        %v415 = vmul.f32 %v348, %v412
        %v416 = vmul.f32 %v407, %v412
        %vm421 = vcmask 1044480
        %v422 = vrot.slane %v413, 3
        %v423 = vrot.slane %v414, 3
        %v424 = vsel %vm421, %v422, %v423
        %v425 = vrot.slane %v415, 3
        %v426 = vsel %vm421, %v423, %v425
        %v427 = vrot.slane %v416, 3
        %v428 = vsel %vm421, %v425, %v427
        %v432 = vadd.f32 %v400, %v424
        %v433 = vadd.f32 %v401, %v426
        %v434 = vadd.f32 %v402, %v428
        %v435 = vld [vmem:[%s1 + $0x4] sm:$0x1]
        %v436 = vlaneseq
        %v437 = vshrl.u32 %v436, 7
        %v438 = vsub.s32 0, %v437
        %v439 = vrot.slane %v435, %v438
        %v440 = vmul.f32 %v338, %v439
        %v441 = vmul.f32 %v343, %v439
        %v442 = vmul.f32 %v348, %v439
        %v443 = vmul.f32 %v407, %v439
        %vm448 = vcmask 1043456
        %v449 = vrot.slane %v440, 4
        %v450 = vrot.slane %v441, 4
        %v451 = vsel %vm448, %v449, %v450
        %v452 = vrot.slane %v442, 4
        %v453 = vsel %vm448, %v450, %v452
        %v454 = vrot.slane %v443, 4
        %v455 = vsel %vm448, %v452, %v454
        %v459 = vadd.f32 %v432, %v451
        %v460 = vadd.f32 %v433, %v453
        %v461 = vadd.f32 %v434, %v455
        %v462 = vld [vmem:[%s1 + $0x5] sm:$0x1]
        %v463 = vlaneseq
        %v464 = vshrl.u32 %v463, 7
        %v465 = vsub.s32 0, %v464
        %v466 = vrot.slane %v462, %v465
        %v467 = vmul.f32 %v338, %v466
        %v468 = vmul.f32 %v343, %v466
        %v469 = vmul.f32 %v348, %v466
        %v470 = vmul.f32 %v407, %v466
        %vm475 = vcmask 1042432
        %v476 = vrot.slane %v467, 5
        %v477 = vrot.slane %v468, 5
        %v478 = vsel %vm475, %v476, %v477
        %v479 = vrot.slane %v469, 5
        %v480 = vsel %vm475, %v477, %v479
        %v481 = vrot.slane %v470, 5
        %v482 = vsel %vm475, %v479, %v481
        %v486 = vadd.f32 %v459, %v478
        %v487 = vadd.f32 %v460, %v480
        %v488 = vadd.f32 %v461, %v482
        %v489 = vld [vmem:[%s1 + $0x6] sm:$0x1]
        %v490 = vlaneseq
        %v491 = vshrl.u32 %v490, 7
        %v492 = vsub.s32 0, %v491
        %v493 = vrot.slane %v489, %v492
        %v494 = vmul.f32 %v338, %v493
        %v495 = vmul.f32 %v343, %v493
        %v496 = vmul.f32 %v348, %v493
        %v497 = vmul.f32 %v407, %v493
        %vm502 = vcmask 1041408
        %v503 = vrot.slane %v494, 6
        %v504 = vrot.slane %v495, 6
        %v505 = vsel %vm502, %v503, %v504
        %v506 = vrot.slane %v496, 6
        %v507 = vsel %vm502, %v504, %v506
        %v508 = vrot.slane %v497, 6
        %v509 = vsel %vm502, %v506, %v508
        %v513 = vadd.f32 %v486, %v505
        %v514 = vadd.f32 %v487, %v507
        %v515 = vadd.f32 %v488, %v509
        %v516 = vld [vmem:[%s2] sm:$0x1]
        %v518 = vlaneseq
        %v519 = vshrl.u32 %v518, 7
        %v520 = vsub.s32 0, %v519
        %v521 = vrot.slane %v516, %v520
        %v523 = vadd.f32 %v513, %v521
        %v524 = vadd.f32 %v514, %v521
        %v525 = vadd.f32 %v515, %v521
        %v526 = vmax.f32 %v523, 0.0
        %v527 = vmax.f32 %v524, 0.0
        %v528 = vmax.f32 %v525, 0.0
        %v529 = vlaneseq
        %v530 = vshrl.u32 %v529, 7
        %v531 = vadd.s32 %v530, 8
        %v532 = vadd.s32 %v530, 16
        %vm533 = vcmp.ge.s32.totalorder %v530, 3
        %vm534 = vcmp.ge.s32.totalorder %v531, 3
        %vm535 = vcmp.ge.s32.totalorder %v532, 3
        %vm536 = vcmp.lt.s32.totalorder %v530, 19
        %vm537 = vcmp.lt.s32.totalorder %v531, 19
        %vm538 = vcmp.lt.s32.totalorder %v532, 19
        %vm539 = vmand %vm533, %vm536
        %vm540 = vmand %vm534, %vm537
        %vm541 = vmand %vm535, %vm538
        %v542 = vsel %vm539, %v526, 0.0
        %v543 = vsel %vm540, %v527, 0.0
        %v544 = vsel %vm541, %v528, 0.0
        %v545 = vld [vmem:[%s3] sm:$0xff]
        %v546 = vld [vmem:[%s3 + $0x8] sm:$0xff]
        %v547 = vld [vmem:[%s3 + $0x10] sm:$0xff]
        %v548 = vld [vmem:[%s3 + $0x18] sm:$0xff]
        %v549 = vld [vmem:[%s3 + $0x20] sm:$0xff]
        %v550 = vld [vmem:[%s3 + $0x28] sm:$0xff]
        %v551 = vld [vmem:[%s3 + $0x30] sm:$0xff]
        %v552 = vld [vmem:[%s3 + $0x38] sm:$0xff]
        %v553 = vld [vmem:[%s3 + $0x40] sm:$0xff]
        %v554 = vld [vmem:[%s3 + $0x48] sm:$0xff]
        %v555 = vld [vmem:[%s3 + $0x50] sm:$0xff]
        %v556 = vld [vmem:[%s3 + $0x58] sm:$0xff]
        %v557 = vld [vmem:[%s3 + $0x60] sm:$0xff]
        %v558 = vld [vmem:[%s3 + $0x68] sm:$0xff]
        %v559 = vld [vmem:[%s3 + $0x70] sm:$0xff]
        %v560 = vld [vmem:[%s3 + $0x78] sm:$0xff]
        %v561 = vld [vmem:[%s3 + $0x80] sm:$0xff]
        %v562 = vld [vmem:[%s3 + $0x88] sm:$0xff]
        %v563 = vld [vmem:[%s3 + $0x90] sm:$0xff]
        %v564 = vld [vmem:[%s3 + $0x98] sm:$0xff]
        %v565 = vld [vmem:[%s3 + $0xa0] sm:$0xff]
        %v566 = vld [vmem:[%s3 + $0xa8] sm:$0xff]
        %v567 = vld [vmem:[%s3 + $0xb0] sm:$0xff]
        %v568 = vld [vmem:[%s3 + $0xb8] sm:$0xff]
        %s569 = scalar_lea.vmem %s3, 192
        %v570 = vld [vmem:[%s569] sm:$0xff]
        %v571 = vld [vmem:[%s569 + $0x8] sm:$0xff]
        %v572 = vld [vmem:[%s569 + $0x10] sm:$0xff]
        %v573 = vld [vmem:[%s569 + $0x18] sm:$0xff]
        %v574 = vld [vmem:[%s569 + $0x20] sm:$0xff]
        %v575 = vld [vmem:[%s569 + $0x28] sm:$0xff]
        %v576 = vld [vmem:[%s569 + $0x30] sm:$0xff]
        %v577 = vld [vmem:[%s569 + $0x38] sm:$0xff]
        %v578 = vld [vmem:[%s569 + $0x40] sm:$0xff]
        %v579 = vld [vmem:[%s569 + $0x48] sm:$0xff]
        %v580 = vld [vmem:[%s569 + $0x50] sm:$0xff]
        %v581 = vld [vmem:[%s569 + $0x58] sm:$0xff]
        %v582 = vld [vmem:[%s569 + $0x60] sm:$0xff]
        %v583 = vld [vmem:[%s569 + $0x68] sm:$0xff]
        %v584 = vld [vmem:[%s569 + $0x70] sm:$0xff]
        %v585 = vld [vmem:[%s569 + $0x78] sm:$0xff]
        %v586 = vld [vmem:[%s569 + $0x80] sm:$0xff]
        %v587 = vld [vmem:[%s569 + $0x88] sm:$0xff]
        %v588 = vld [vmem:[%s569 + $0x90] sm:$0xff]
        %v589 = vld [vmem:[%s569 + $0x98] sm:$0xff]
        %v590 = vld [vmem:[%s569 + $0xa0] sm:$0xff]
        %v591 = vld [vmem:[%s569 + $0xa8] sm:$0xff]
        %v592 = vld [vmem:[%s569 + $0xb0] sm:$0xff]
        %v593 = vld [vmem:[%s569 + $0xb8] sm:$0xff]
        %v597 = vrot.slane %v542, 1
        %v598 = vrot.slane %v543, 1
        %v599 = vsel %vm368, %v597, %v598
        %v600 = vrot.slane %v544, 1
        %v601 = vsel %vm368, %v598, %v600
        %vm602 = vcmask 785408
        %v603 = vsel %vm602, %v599, 0
        %v605 = vsel %vm602, %v601, 0
        %607 = vmatprep.subr.mxu0 %v571
        %608 = vmatpush1.msra.mxu0 %v570
        %609 = vmatprep.subr.mxu0 %v573
        %610 = vmatpush1.msra.mxu0 %v572
        %611 = vmatprep.subr.mxu0 %v575
        %612 = vmatpush1.msra.mxu0 %v574
        %613 = vmatprep.subr.mxu0 %v577
        %614 = vmatpush1.msra.mxu0 %v576
        %615 = vmatprep.subr.mxu0 %v579
        %616 = vmatpush1.msra.mxu0 %v578
        %617 = vmatprep.subr.mxu0 %v581
        %618 = vmatpush1.msra.mxu0 %v580
        %619 = vmatprep.subr.mxu0 %v583
        %620 = vmatpush1.msra.mxu0 %v582
        %621 = vmatprep.subr.mxu0 %v585
        %622 = vmatpush1.msra.mxu0 %v584
        %623 = vmatprep.subr.mxu0 %v587
        %624 = vmatpush1.msra.mxu0 %v586
        %625 = vmatprep.subr.mxu0 %v589
        %626 = vmatpush1.msra.mxu0 %v588
        %627 = vmatprep.subr.mxu0 %v591
        %628 = vmatpush1.msra.mxu0 %v590
        %629 = vmatprep.subr.mxu0 %v593
        %630 = vmatpush1.msra.mxu0 %v592
        %631 = vmatprep.subr.mxu0 0.0
        %632 = vmatpush1.msra.mxu0 0.0
        %633 = vmatprep.subr.mxu0 0.0
        %634 = vmatpush1.msra.mxu0 0.0
        %635 = vmatprep.subr.mxu0 0.0
        %636 = vmatpush1.msra.mxu0 0.0
        %637 = vmatprep.subr.mxu0 0.0
        %638 = vmatpush1.msra.mxu0 0.0
        %639 = vmatprep.subr.mxu0 0.0
        %640 = vmatpush1.msra.mxu0 0.0
        %641 = vmatprep.subr.mxu0 0.0
        %642 = vmatpush1.msra.mxu0 0.0
        %643 = vmatprep.subr.mxu0 0.0
        %644 = vmatpush1.msra.mxu0 0.0
        %645 = vmatprep.subr.mxu0 0.0
        %646 = vmatpush1.msra.mxu0 0.0
        %647 = vmatprep.subr.mxu0 0.0
        %648 = vmatpush1.msra.mxu0 0.0
        %649 = vmatprep.subr.mxu0 0.0
        %650 = vmatpush1.msra.mxu0 0.0
        %651 = vmatprep.subr.mxu0 0.0
        %652 = vmatpush1.msra.mxu0 0.0
        %653 = vmatprep.subr.mxu0 0.0
        %654 = vmatpush1.msra.mxu0 0.0
        %655 = vmatprep.subr.mxu0 0.0
        %656 = vmatpush1.msra.mxu0 0.0
        %657 = vmatprep.subr.mxu0 0.0
        %658 = vmatpush1.msra.mxu0 0.0
        %659 = vmatprep.subr.mxu0 0.0
        %660 = vmatpush1.msra.mxu0 0.0
        %661 = vmatprep.subr.mxu0 0.0
        %662 = vmatpush1.msra.mxu0 0.0
        %663 = vmatprep.subr.mxu0 0.0
        %664 = vmatpush1.msra.mxu0 0.0
        %665 = vmatprep.subr.mxu0 0.0
        %666 = vmatpush1.msra.mxu0 0.0
        %667 = vmatprep.subr.mxu0 0.0
        %668 = vmatpush1.msra.mxu0 0.0
        %669 = vmatprep.subr.mxu0 0.0
        %670 = vmatpush1.msra.mxu0 0.0
        %671 = vmatprep.mubr.f32.mxu0 0.0
        %672 = vmatmul.mubr.f32.gmra.mrb[0].mxu0 %v603
        %v673 = vpop.f32.mrb[0].mxu0
        %v674 = vadd.f32 0.0, %v673
        %v675 = vpop.f32.mrb[0].mxu0
        %v676 = vadd.f32 0.0, %v675
        %677 = vmatprep.mubr.f32.mxu0 0.0
        %678 = vmatmul.mubr.f32.gmra.mrb[0].mxu0 %v605
        %v679 = vpop.f32.mrb[0].mxu0
        %v680 = vadd.f32 0.0, %v679
        %v681 = vpop.f32.mrb[0].mxu0
        %v682 = vadd.f32 0.0, %v681
        %683 = vdwg.mxu0
        %v684 = vsel %vm602, %v542, 0
        %v686 = vsel %vm602, %v543, 0
        %688 = vmatprep.subr.mxu0 %v546
        %689 = vmatpush1.msra.mxu0 %v545
        %690 = vmatprep.subr.mxu0 %v548
        %691 = vmatpush1.msra.mxu0 %v547
        %692 = vmatprep.subr.mxu0 %v550
        %693 = vmatpush1.msra.mxu0 %v549
        %694 = vmatprep.subr.mxu0 %v552
        %695 = vmatpush1.msra.mxu0 %v551
        %696 = vmatprep.subr.mxu0 %v554
        %697 = vmatpush1.msra.mxu0 %v553
        %698 = vmatprep.subr.mxu0 %v556
        %699 = vmatpush1.msra.mxu0 %v555
        %700 = vmatprep.subr.mxu0 %v558
        %701 = vmatpush1.msra.mxu0 %v557
        %702 = vmatprep.subr.mxu0 %v560
        %703 = vmatpush1.msra.mxu0 %v559
        %704 = vmatprep.subr.mxu0 %v562
        %705 = vmatpush1.msra.mxu0 %v561
        %706 = vmatprep.subr.mxu0 %v564
        %707 = vmatpush1.msra.mxu0 %v563
        %708 = vmatprep.subr.mxu0 %v566
        %709 = vmatpush1.msra.mxu0 %v565
        %710 = vmatprep.subr.mxu0 %v568
        %711 = vmatpush1.msra.mxu0 %v567
        %712 = vmatprep.subr.mxu0 0.0
        %713 = vmatpush1.msra.mxu0 0.0
        %714 = vmatprep.subr.mxu0 0.0
        %715 = vmatpush1.msra.mxu0 0.0
        %716 = vmatprep.subr.mxu0 0.0
        %717 = vmatpush1.msra.mxu0 0.0
        %718 = vmatprep.subr.mxu0 0.0
        %719 = vmatpush1.msra.mxu0 0.0
        %720 = vmatprep.subr.mxu0 0.0
        %721 = vmatpush1.msra.mxu0 0.0
        %722 = vmatprep.subr.mxu0 0.0
        %723 = vmatpush1.msra.mxu0 0.0
        %724 = vmatprep.subr.mxu0 0.0
        %725 = vmatpush1.msra.mxu0 0.0
        %726 = vmatprep.subr.mxu0 0.0
        %727 = vmatpush1.msra.mxu0 0.0
        %728 = vmatprep.subr.mxu0 0.0
        %729 = vmatpush1.msra.mxu0 0.0
        %730 = vmatprep.subr.mxu0 0.0
        %731 = vmatpush1.msra.mxu0 0.0
        %732 = vmatprep.subr.mxu0 0.0
        %733 = vmatpush1.msra.mxu0 0.0
        %734 = vmatprep.subr.mxu0 0.0
        %735 = vmatpush1.msra.mxu0 0.0
        %736 = vmatprep.subr.mxu0 0.0
        %737 = vmatpush1.msra.mxu0 0.0
        %738 = vmatprep.subr.mxu0 0.0
        %739 = vmatpush1.msra.mxu0 0.0
        %740 = vmatprep.subr.mxu0 0.0
        %741 = vmatpush1.msra.mxu0 0.0
        %742 = vmatprep.subr.mxu0 0.0
        %743 = vmatpush1.msra.mxu0 0.0
        %744 = vmatprep.subr.mxu0 0.0
        %745 = vmatpush1.msra.mxu0 0.0
        %746 = vmatprep.subr.mxu0 0.0
        %747 = vmatpush1.msra.mxu0 0.0
        %748 = vmatprep.subr.mxu0 0.0
        %749 = vmatpush1.msra.mxu0 0.0
        %750 = vmatprep.subr.mxu0 0.0
        %751 = vmatpush1.msra.mxu0 0.0
        %752 = vmatprep.mubr.f32.mxu0 0.0
        %753 = vmatmul.mubr.f32.gmra.mrb[0].mxu0 %v684
        %v754 = vpop.f32.mrb[0].mxu0
        %v755 = vadd.f32 %v674, %v754
        %v756 = vpop.f32.mrb[0].mxu0
        %v757 = vadd.f32 %v676, %v756
        %758 = vmatprep.mubr.f32.mxu0 0.0
        %759 = vmatmul.mubr.f32.gmra.mrb[0].mxu0 %v686
        %v760 = vpop.f32.mrb[0].mxu0
        %v761 = vadd.f32 %v680, %v760
        %v762 = vpop.f32.mrb[0].mxu0
        %v763 = vadd.f32 %v682, %v762
        %764 = vdwg.mxu0
        %s765 = scalar_lea.vmem %s3, 384
        %v766 = vld [vmem:[%s765] sm:$0xff]
        %v767 = vld [vmem:[%s765 + $0x8] sm:$0xff]
        %v768 = vld [vmem:[%s765 + $0x10] sm:$0xff]
        %v769 = vld [vmem:[%s765 + $0x18] sm:$0xff]
        %v770 = vld [vmem:[%s765 + $0x20] sm:$0xff]
        %v771 = vld [vmem:[%s765 + $0x28] sm:$0xff]
        %v772 = vld [vmem:[%s765 + $0x30] sm:$0xff]
        %v773 = vld [vmem:[%s765 + $0x38] sm:$0xff]
        %v774 = vld [vmem:[%s765 + $0x40] sm:$0xff]
        %v775 = vld [vmem:[%s765 + $0x48] sm:$0xff]
        %v776 = vld [vmem:[%s765 + $0x50] sm:$0xff]
        %v777 = vld [vmem:[%s765 + $0x58] sm:$0xff]
        %v778 = vld [vmem:[%s765 + $0x60] sm:$0xff]
        %v779 = vld [vmem:[%s765 + $0x68] sm:$0xff]
        %v780 = vld [vmem:[%s765 + $0x70] sm:$0xff]
        %v781 = vld [vmem:[%s765 + $0x78] sm:$0xff]
        %v782 = vld [vmem:[%s765 + $0x80] sm:$0xff]
        %v783 = vld [vmem:[%s765 + $0x88] sm:$0xff]
        %v784 = vld [vmem:[%s765 + $0x90] sm:$0xff]
        %v785 = vld [vmem:[%s765 + $0x98] sm:$0xff]
        %v786 = vld [vmem:[%s765 + $0xa0] sm:$0xff]
        %v787 = vld [vmem:[%s765 + $0xa8] sm:$0xff]
        %v788 = vld [vmem:[%s765 + $0xb0] sm:$0xff]
        %v789 = vld [vmem:[%s765 + $0xb8] sm:$0xff]
        %v790 = vrot.slane %v542, 2
        %v791 = vrot.slane %v543, 2
        %v792 = vsel %vm391, %v790, %v791
        %v793 = vrot.slane %v544, 2
        %v794 = vsel %vm391, %v791, %v793
        %v795 = vsel %vm602, %v792, 0
        %v797 = vsel %vm602, %v794, 0
        %799 = vmatprep.subr.mxu0 %v767
        %800 = vmatpush1.msra.mxu0 %v766
        %801 = vmatprep.subr.mxu0 %v769
        %802 = vmatpush1.msra.mxu0 %v768
        %803 = vmatprep.subr.mxu0 %v771
        %804 = vmatpush1.msra.mxu0 %v770
        %805 = vmatprep.subr.mxu0 %v773
        %806 = vmatpush1.msra.mxu0 %v772
        %807 = vmatprep.subr.mxu0 %v775
        %808 = vmatpush1.msra.mxu0 %v774
        %809 = vmatprep.subr.mxu0 %v777
        %810 = vmatpush1.msra.mxu0 %v776
        %811 = vmatprep.subr.mxu0 %v779
        %812 = vmatpush1.msra.mxu0 %v778
        %813 = vmatprep.subr.mxu0 %v781
        %814 = vmatpush1.msra.mxu0 %v780
        %815 = vmatprep.subr.mxu0 %v783
        %816 = vmatpush1.msra.mxu0 %v782
        %817 = vmatprep.subr.mxu0 %v785
        %818 = vmatpush1.msra.mxu0 %v784
        %819 = vmatprep.subr.mxu0 %v787
        %820 = vmatpush1.msra.mxu0 %v786
        %821 = vmatprep.subr.mxu0 %v789
        %822 = vmatpush1.msra.mxu0 %v788
        %823 = vmatprep.subr.mxu0 0.0
        %824 = vmatpush1.msra.mxu0 0.0
        %825 = vmatprep.subr.mxu0 0.0
        %826 = vmatpush1.msra.mxu0 0.0
        %827 = vmatprep.subr.mxu0 0.0
        %828 = vmatpush1.msra.mxu0 0.0
        %829 = vmatprep.subr.mxu0 0.0
        %830 = vmatpush1.msra.mxu0 0.0
        %831 = vmatprep.subr.mxu0 0.0
        %832 = vmatpush1.msra.mxu0 0.0
        %833 = vmatprep.subr.mxu0 0.0
        %834 = vmatpush1.msra.mxu0 0.0
        %835 = vmatprep.subr.mxu0 0.0
        %836 = vmatpush1.msra.mxu0 0.0
        %837 = vmatprep.subr.mxu0 0.0
        %838 = vmatpush1.msra.mxu0 0.0
        %839 = vmatprep.subr.mxu0 0.0
        %840 = vmatpush1.msra.mxu0 0.0
        %841 = vmatprep.subr.mxu0 0.0
        %842 = vmatpush1.msra.mxu0 0.0
        %843 = vmatprep.subr.mxu0 0.0
        %844 = vmatpush1.msra.mxu0 0.0
        %845 = vmatprep.subr.mxu0 0.0
        %846 = vmatpush1.msra.mxu0 0.0
        %847 = vmatprep.subr.mxu0 0.0
        %848 = vmatpush1.msra.mxu0 0.0
        %849 = vmatprep.subr.mxu0 0.0
        %850 = vmatpush1.msra.mxu0 0.0
        %851 = vmatprep.subr.mxu0 0.0
        %852 = vmatpush1.msra.mxu0 0.0
        %853 = vmatprep.subr.mxu0 0.0
        %854 = vmatpush1.msra.mxu0 0.0
        %855 = vmatprep.subr.mxu0 0.0
        %856 = vmatpush1.msra.mxu0 0.0
        %857 = vmatprep.subr.mxu0 0.0
        %858 = vmatpush1.msra.mxu0 0.0
        %859 = vmatprep.subr.mxu0 0.0
        %860 = vmatpush1.msra.mxu0 0.0
        %861 = vmatprep.subr.mxu0 0.0
        %862 = vmatpush1.msra.mxu0 0.0
        %863 = vmatprep.mubr.f32.mxu0 0.0
        %864 = vmatmul.mubr.f32.gmra.mrb[0].mxu0 %v795
        %v865 = vpop.f32.mrb[0].mxu0
        %v866 = vadd.f32 0.0, %v865
        %v867 = vpop.f32.mrb[0].mxu0
        %v868 = vadd.f32 0.0, %v867
        %869 = vmatprep.mubr.f32.mxu0 0.0
        %870 = vmatmul.mubr.f32.gmra.mrb[0].mxu0 %v797
        %v871 = vpop.f32.mrb[0].mxu0
        %v872 = vadd.f32 0.0, %v871
        %v873 = vpop.f32.mrb[0].mxu0
        %v874 = vadd.f32 0.0, %v873
        %875 = vdwg.mxu0
        %v876 = vadd.f32 %v755, %v866
        %v877 = vadd.f32 %v757, %v868
        %v878 = vadd.f32 %v761, %v872
        %v879 = vadd.f32 %v763, %v874
        %s880 = scalar_lea.vmem %s3, 576
        %v881 = vld [vmem:[%s880] sm:$0xff]
        %v882 = vld [vmem:[%s880 + $0x8] sm:$0xff]
        %v883 = vld [vmem:[%s880 + $0x10] sm:$0xff]
        %v884 = vld [vmem:[%s880 + $0x18] sm:$0xff]
        %v885 = vld [vmem:[%s880 + $0x20] sm:$0xff]
        %v886 = vld [vmem:[%s880 + $0x28] sm:$0xff]
        %v887 = vld [vmem:[%s880 + $0x30] sm:$0xff]
        %v888 = vld [vmem:[%s880 + $0x38] sm:$0xff]
        %v889 = vld [vmem:[%s880 + $0x40] sm:$0xff]
        %v890 = vld [vmem:[%s880 + $0x48] sm:$0xff]
        %v891 = vld [vmem:[%s880 + $0x50] sm:$0xff]
        %v892 = vld [vmem:[%s880 + $0x58] sm:$0xff]
        %v893 = vld [vmem:[%s880 + $0x60] sm:$0xff]
        %v894 = vld [vmem:[%s880 + $0x68] sm:$0xff]
        %v895 = vld [vmem:[%s880 + $0x70] sm:$0xff]
        %v896 = vld [vmem:[%s880 + $0x78] sm:$0xff]
        %v897 = vld [vmem:[%s880 + $0x80] sm:$0xff]
        %v898 = vld [vmem:[%s880 + $0x88] sm:$0xff]
        %v899 = vld [vmem:[%s880 + $0x90] sm:$0xff]
        %v900 = vld [vmem:[%s880 + $0x98] sm:$0xff]
        %v901 = vld [vmem:[%s880 + $0xa0] sm:$0xff]
        %v902 = vld [vmem:[%s880 + $0xa8] sm:$0xff]
        %v903 = vld [vmem:[%s880 + $0xb0] sm:$0xff]
        %v904 = vld [vmem:[%s880 + $0xb8] sm:$0xff]
        %v905 = vrot.slane %v542, 3
        %v906 = vrot.slane %v543, 3
        %v907 = vsel %vm421, %v905, %v906
        %v908 = vrot.slane %v544, 3
        %v909 = vsel %vm421, %v906, %v908
        %v910 = vsel %vm602, %v907, 0
        %v912 = vsel %vm602, %v909, 0
        %914 = vmatprep.subr.mxu0 %v882
        %915 = vmatpush1.msra.mxu0 %v881
        %916 = vmatprep.subr.mxu0 %v884
        %917 = vmatpush1.msra.mxu0 %v883
        %918 = vmatprep.subr.mxu0 %v886
        %919 = vmatpush1.msra.mxu0 %v885
        %920 = vmatprep.subr.mxu0 %v888
        %921 = vmatpush1.msra.mxu0 %v887
        %922 = vmatprep.subr.mxu0 %v890
        %923 = vmatpush1.msra.mxu0 %v889
        %924 = vmatprep.subr.mxu0 %v892
        %925 = vmatpush1.msra.mxu0 %v891
        %926 = vmatprep.subr.mxu0 %v894
        %927 = vmatpush1.msra.mxu0 %v893
        %928 = vmatprep.subr.mxu0 %v896
        %929 = vmatpush1.msra.mxu0 %v895
        %930 = vmatprep.subr.mxu0 %v898
        %931 = vmatpush1.msra.mxu0 %v897
        %932 = vmatprep.subr.mxu0 %v900
        %933 = vmatpush1.msra.mxu0 %v899
        %934 = vmatprep.subr.mxu0 %v902
        %935 = vmatpush1.msra.mxu0 %v901
        %936 = vmatprep.subr.mxu0 %v904
        %937 = vmatpush1.msra.mxu0 %v903
        %938 = vmatprep.subr.mxu0 0.0
        %939 = vmatpush1.msra.mxu0 0.0
        %940 = vmatprep.subr.mxu0 0.0
        %941 = vmatpush1.msra.mxu0 0.0
        %942 = vmatprep.subr.mxu0 0.0
        %943 = vmatpush1.msra.mxu0 0.0
        %944 = vmatprep.subr.mxu0 0.0
        %945 = vmatpush1.msra.mxu0 0.0
        %946 = vmatprep.subr.mxu0 0.0
        %947 = vmatpush1.msra.mxu0 0.0
        %948 = vmatprep.subr.mxu0 0.0
        %949 = vmatpush1.msra.mxu0 0.0
        %950 = vmatprep.subr.mxu0 0.0
        %951 = vmatpush1.msra.mxu0 0.0
        %952 = vmatprep.subr.mxu0 0.0
        %953 = vmatpush1.msra.mxu0 0.0
        %954 = vmatprep.subr.mxu0 0.0
        %955 = vmatpush1.msra.mxu0 0.0
        %956 = vmatprep.subr.mxu0 0.0
        %957 = vmatpush1.msra.mxu0 0.0
        %958 = vmatprep.subr.mxu0 0.0
        %959 = vmatpush1.msra.mxu0 0.0
        %960 = vmatprep.subr.mxu0 0.0
        %961 = vmatpush1.msra.mxu0 0.0
        %962 = vmatprep.subr.mxu0 0.0
        %963 = vmatpush1.msra.mxu0 0.0
        %964 = vmatprep.subr.mxu0 0.0
        %965 = vmatpush1.msra.mxu0 0.0
        %966 = vmatprep.subr.mxu0 0.0
        %967 = vmatpush1.msra.mxu0 0.0
        %968 = vmatprep.subr.mxu0 0.0
        %969 = vmatpush1.msra.mxu0 0.0
        %970 = vmatprep.subr.mxu0 0.0
        %971 = vmatpush1.msra.mxu0 0.0
        %972 = vmatprep.subr.mxu0 0.0
        %973 = vmatpush1.msra.mxu0 0.0
        %974 = vmatprep.subr.mxu0 0.0
        %975 = vmatpush1.msra.mxu0 0.0
        %976 = vmatprep.subr.mxu0 0.0
        %977 = vmatpush1.msra.mxu0 0.0
        %978 = vmatprep.mubr.f32.mxu0 0.0
        %979 = vmatmul.mubr.f32.gmra.mrb[0].mxu0 %v910
        %v980 = vpop.f32.mrb[0].mxu0
        %v981 = vadd.f32 0.0, %v980
        %v982 = vpop.f32.mrb[0].mxu0
        %v983 = vadd.f32 0.0, %v982
        %984 = vmatprep.mubr.f32.mxu0 0.0
        %985 = vmatmul.mubr.f32.gmra.mrb[0].mxu0 %v912
        %v986 = vpop.f32.mrb[0].mxu0
        %v987 = vadd.f32 0.0, %v986
        %v988 = vpop.f32.mrb[0].mxu0
        %v989 = vadd.f32 0.0, %v988
        %990 = vdwg.mxu0
        %v991 = vadd.f32 %v876, %v981
        %v992 = vadd.f32 %v877, %v983
        %v993 = vadd.f32 %v878, %v987
        %v994 = vadd.f32 %v879, %v989
        %s995 = scalar_lea.vmem %s3, 768
        %v996 = vld [vmem:[%s995] sm:$0xff]
        %v997 = vld [vmem:[%s995 + $0x8] sm:$0xff]
        %v998 = vld [vmem:[%s995 + $0x10] sm:$0xff]
        %v999 = vld [vmem:[%s995 + $0x18] sm:$0xff]
        %v1000 = vld [vmem:[%s995 + $0x20] sm:$0xff]
        %v1001 = vld [vmem:[%s995 + $0x28] sm:$0xff]
        %v1002 = vld [vmem:[%s995 + $0x30] sm:$0xff]
        %v1003 = vld [vmem:[%s995 + $0x38] sm:$0xff]
        %v1004 = vld [vmem:[%s995 + $0x40] sm:$0xff]
        %v1005 = vld [vmem:[%s995 + $0x48] sm:$0xff]
        %v1006 = vld [vmem:[%s995 + $0x50] sm:$0xff]
        %v1007 = vld [vmem:[%s995 + $0x58] sm:$0xff]
        %v1008 = vld [vmem:[%s995 + $0x60] sm:$0xff]
        %v1009 = vld [vmem:[%s995 + $0x68] sm:$0xff]
        %v1010 = vld [vmem:[%s995 + $0x70] sm:$0xff]
        %v1011 = vld [vmem:[%s995 + $0x78] sm:$0xff]
        %v1012 = vld [vmem:[%s995 + $0x80] sm:$0xff]
        %v1013 = vld [vmem:[%s995 + $0x88] sm:$0xff]
        %v1014 = vld [vmem:[%s995 + $0x90] sm:$0xff]
        %v1015 = vld [vmem:[%s995 + $0x98] sm:$0xff]
        %v1016 = vld [vmem:[%s995 + $0xa0] sm:$0xff]
        %v1017 = vld [vmem:[%s995 + $0xa8] sm:$0xff]
        %v1018 = vld [vmem:[%s995 + $0xb0] sm:$0xff]
        %v1019 = vld [vmem:[%s995 + $0xb8] sm:$0xff]
        %v1020 = vrot.slane %v542, 4
        %v1021 = vrot.slane %v543, 4
        %v1022 = vsel %vm448, %v1020, %v1021
        %v1023 = vrot.slane %v544, 4
        %v1024 = vsel %vm448, %v1021, %v1023
        %v1025 = vsel %vm602, %v1022, 0
        %v1027 = vsel %vm602, %v1024, 0
        %1029 = vmatprep.subr.mxu0 %v997
        %1030 = vmatpush1.msra.mxu0 %v996
        %1031 = vmatprep.subr.mxu0 %v999
        %1032 = vmatpush1.msra.mxu0 %v998
        %1033 = vmatprep.subr.mxu0 %v1001
        %1034 = vmatpush1.msra.mxu0 %v1000
        %1035 = vmatprep.subr.mxu0 %v1003
        %1036 = vmatpush1.msra.mxu0 %v1002
        %1037 = vmatprep.subr.mxu0 %v1005
        %1038 = vmatpush1.msra.mxu0 %v1004
        %1039 = vmatprep.subr.mxu0 %v1007
        %1040 = vmatpush1.msra.mxu0 %v1006
        %1041 = vmatprep.subr.mxu0 %v1009
        %1042 = vmatpush1.msra.mxu0 %v1008
        %1043 = vmatprep.subr.mxu0 %v1011
        %1044 = vmatpush1.msra.mxu0 %v1010
        %1045 = vmatprep.subr.mxu0 %v1013
        %1046 = vmatpush1.msra.mxu0 %v1012
        %1047 = vmatprep.subr.mxu0 %v1015
        %1048 = vmatpush1.msra.mxu0 %v1014
        %1049 = vmatprep.subr.mxu0 %v1017
        %1050 = vmatpush1.msra.mxu0 %v1016
        %1051 = vmatprep.subr.mxu0 %v1019
        %1052 = vmatpush1.msra.mxu0 %v1018
        %1053 = vmatprep.subr.mxu0 0.0
        %1054 = vmatpush1.msra.mxu0 0.0
        %1055 = vmatprep.subr.mxu0 0.0
        %1056 = vmatpush1.msra.mxu0 0.0
        %1057 = vmatprep.subr.mxu0 0.0
        %1058 = vmatpush1.msra.mxu0 0.0
        %1059 = vmatprep.subr.mxu0 0.0
        %1060 = vmatpush1.msra.mxu0 0.0
        %1061 = vmatprep.subr.mxu0 0.0
        %1062 = vmatpush1.msra.mxu0 0.0
        %1063 = vmatprep.subr.mxu0 0.0
        %1064 = vmatpush1.msra.mxu0 0.0
        %1065 = vmatprep.subr.mxu0 0.0
        %1066 = vmatpush1.msra.mxu0 0.0
        %1067 = vmatprep.subr.mxu0 0.0
        %1068 = vmatpush1.msra.mxu0 0.0
        %1069 = vmatprep.subr.mxu0 0.0
        %1070 = vmatpush1.msra.mxu0 0.0
        %1071 = vmatprep.subr.mxu0 0.0
        %1072 = vmatpush1.msra.mxu0 0.0
        %1073 = vmatprep.subr.mxu0 0.0
        %1074 = vmatpush1.msra.mxu0 0.0
        %1075 = vmatprep.subr.mxu0 0.0
        %1076 = vmatpush1.msra.mxu0 0.0
        %1077 = vmatprep.subr.mxu0 0.0
        %1078 = vmatpush1.msra.mxu0 0.0
        %1079 = vmatprep.subr.mxu0 0.0
        %1080 = vmatpush1.msra.mxu0 0.0
        %1081 = vmatprep.subr.mxu0 0.0
        %1082 = vmatpush1.msra.mxu0 0.0
        %1083 = vmatprep.subr.mxu0 0.0
        %1084 = vmatpush1.msra.mxu0 0.0
        %1085 = vmatprep.subr.mxu0 0.0
        %1086 = vmatpush1.msra.mxu0 0.0
        %1087 = vmatprep.subr.mxu0 0.0
        %1088 = vmatpush1.msra.mxu0 0.0
        %1089 = vmatprep.subr.mxu0 0.0
        %1090 = vmatpush1.msra.mxu0 0.0
        %1091 = vmatprep.subr.mxu0 0.0
        %1092 = vmatpush1.msra.mxu0 0.0
        %1093 = vmatprep.mubr.f32.mxu0 0.0
        %1094 = vmatmul.mubr.f32.gmra.mrb[0].mxu0 %v1025
        %v1095 = vpop.f32.mrb[0].mxu0
        %v1096 = vadd.f32 0.0, %v1095
        %v1097 = vpop.f32.mrb[0].mxu0
        %v1098 = vadd.f32 0.0, %v1097
        %1099 = vmatprep.mubr.f32.mxu0 0.0
        %1100 = vmatmul.mubr.f32.gmra.mrb[0].mxu0 %v1027
        %v1101 = vpop.f32.mrb[0].mxu0
        %v1102 = vadd.f32 0.0, %v1101
        %v1103 = vpop.f32.mrb[0].mxu0
        %v1104 = vadd.f32 0.0, %v1103
        %1105 = vdwg.mxu0
        %v1106 = vadd.f32 %v991, %v1096
        %v1107 = vadd.f32 %v992, %v1098
        %v1108 = vadd.f32 %v993, %v1102
        %v1109 = vadd.f32 %v994, %v1104
        %s1110 = scalar_lea.vmem %s3, 960
        %v1111 = vld [vmem:[%s1110] sm:$0xff]
        %v1112 = vld [vmem:[%s1110 + $0x8] sm:$0xff]
        %v1113 = vld [vmem:[%s1110 + $0x10] sm:$0xff]
        %v1114 = vld [vmem:[%s1110 + $0x18] sm:$0xff]
        %v1115 = vld [vmem:[%s1110 + $0x20] sm:$0xff]
        %v1116 = vld [vmem:[%s1110 + $0x28] sm:$0xff]
        %v1117 = vld [vmem:[%s1110 + $0x30] sm:$0xff]
        %v1118 = vld [vmem:[%s1110 + $0x38] sm:$0xff]
        %v1119 = vld [vmem:[%s1110 + $0x40] sm:$0xff]
        %v1120 = vld [vmem:[%s1110 + $0x48] sm:$0xff]
        %v1121 = vld [vmem:[%s1110 + $0x50] sm:$0xff]
        %v1122 = vld [vmem:[%s1110 + $0x58] sm:$0xff]
        %v1123 = vld [vmem:[%s1110 + $0x60] sm:$0xff]
        %v1124 = vld [vmem:[%s1110 + $0x68] sm:$0xff]
        %v1125 = vld [vmem:[%s1110 + $0x70] sm:$0xff]
        %v1126 = vld [vmem:[%s1110 + $0x78] sm:$0xff]
        %v1127 = vld [vmem:[%s1110 + $0x80] sm:$0xff]
        %v1128 = vld [vmem:[%s1110 + $0x88] sm:$0xff]
        %v1129 = vld [vmem:[%s1110 + $0x90] sm:$0xff]
        %v1130 = vld [vmem:[%s1110 + $0x98] sm:$0xff]
        %v1131 = vld [vmem:[%s1110 + $0xa0] sm:$0xff]
        %v1132 = vld [vmem:[%s1110 + $0xa8] sm:$0xff]
        %v1133 = vld [vmem:[%s1110 + $0xb0] sm:$0xff]
        %v1134 = vld [vmem:[%s1110 + $0xb8] sm:$0xff]
        %v1135 = vrot.slane %v542, 5
        %v1136 = vrot.slane %v543, 5
        %v1137 = vsel %vm475, %v1135, %v1136
        %v1138 = vrot.slane %v544, 5
        %v1139 = vsel %vm475, %v1136, %v1138
        %v1140 = vsel %vm602, %v1137, 0
        %v1142 = vsel %vm602, %v1139, 0
        %1144 = vmatprep.subr.mxu0 %v1112
        %1145 = vmatpush1.msra.mxu0 %v1111
        %1146 = vmatprep.subr.mxu0 %v1114
        %1147 = vmatpush1.msra.mxu0 %v1113
        %1148 = vmatprep.subr.mxu0 %v1116
        %1149 = vmatpush1.msra.mxu0 %v1115
        %1150 = vmatprep.subr.mxu0 %v1118
        %1151 = vmatpush1.msra.mxu0 %v1117
        %1152 = vmatprep.subr.mxu0 %v1120
        %1153 = vmatpush1.msra.mxu0 %v1119
        %1154 = vmatprep.subr.mxu0 %v1122
        %1155 = vmatpush1.msra.mxu0 %v1121
        %1156 = vmatprep.subr.mxu0 %v1124
        %1157 = vmatpush1.msra.mxu0 %v1123
        %1158 = vmatprep.subr.mxu0 %v1126
        %1159 = vmatpush1.msra.mxu0 %v1125
        %1160 = vmatprep.subr.mxu0 %v1128
        %1161 = vmatpush1.msra.mxu0 %v1127
        %1162 = vmatprep.subr.mxu0 %v1130
        %1163 = vmatpush1.msra.mxu0 %v1129
        %1164 = vmatprep.subr.mxu0 %v1132
        %1165 = vmatpush1.msra.mxu0 %v1131
        %1166 = vmatprep.subr.mxu0 %v1134
        %1167 = vmatpush1.msra.mxu0 %v1133
        %1168 = vmatprep.subr.mxu0 0.0
        %1169 = vmatpush1.msra.mxu0 0.0
        %1170 = vmatprep.subr.mxu0 0.0
        %1171 = vmatpush1.msra.mxu0 0.0
        %1172 = vmatprep.subr.mxu0 0.0
        %1173 = vmatpush1.msra.mxu0 0.0
        %1174 = vmatprep.subr.mxu0 0.0
        %1175 = vmatpush1.msra.mxu0 0.0
        %1176 = vmatprep.subr.mxu0 0.0
        %1177 = vmatpush1.msra.mxu0 0.0
        %1178 = vmatprep.subr.mxu0 0.0
        %1179 = vmatpush1.msra.mxu0 0.0
        %1180 = vmatprep.subr.mxu0 0.0
        %1181 = vmatpush1.msra.mxu0 0.0
        %1182 = vmatprep.subr.mxu0 0.0
        %1183 = vmatpush1.msra.mxu0 0.0
        %1184 = vmatprep.subr.mxu0 0.0
        %1185 = vmatpush1.msra.mxu0 0.0
        %1186 = vmatprep.subr.mxu0 0.0
        %1187 = vmatpush1.msra.mxu0 0.0
        %1188 = vmatprep.subr.mxu0 0.0
        %1189 = vmatpush1.msra.mxu0 0.0
        %1190 = vmatprep.subr.mxu0 0.0
        %1191 = vmatpush1.msra.mxu0 0.0
        %1192 = vmatprep.subr.mxu0 0.0
        %1193 = vmatpush1.msra.mxu0 0.0
        %1194 = vmatprep.subr.mxu0 0.0
        %1195 = vmatpush1.msra.mxu0 0.0
        %1196 = vmatprep.subr.mxu0 0.0
        %1197 = vmatpush1.msra.mxu0 0.0
        %1198 = vmatprep.subr.mxu0 0.0
        %1199 = vmatpush1.msra.mxu0 0.0
        %1200 = vmatprep.subr.mxu0 0.0
        %1201 = vmatpush1.msra.mxu0 0.0
        %1202 = vmatprep.subr.mxu0 0.0
        %1203 = vmatpush1.msra.mxu0 0.0
        %1204 = vmatprep.subr.mxu0 0.0
        %1205 = vmatpush1.msra.mxu0 0.0
        %1206 = vmatprep.subr.mxu0 0.0
        %1207 = vmatpush1.msra.mxu0 0.0
        %1208 = vmatprep.mubr.f32.mxu0 0.0
        %1209 = vmatmul.mubr.f32.gmra.mrb[0].mxu0 %v1140
        %v1210 = vpop.f32.mrb[0].mxu0
        %v1211 = vadd.f32 0.0, %v1210
        %v1212 = vpop.f32.mrb[0].mxu0
        %v1213 = vadd.f32 0.0, %v1212
        %1214 = vmatprep.mubr.f32.mxu0 0.0
        %1215 = vmatmul.mubr.f32.gmra.mrb[0].mxu0 %v1142
        %v1216 = vpop.f32.mrb[0].mxu0
        %v1217 = vadd.f32 0.0, %v1216
        %v1218 = vpop.f32.mrb[0].mxu0
        %v1219 = vadd.f32 0.0, %v1218
        %1220 = vdwg.mxu0
        %v1221 = vadd.f32 %v1106, %v1211
        %v1222 = vadd.f32 %v1107, %v1213
        %v1223 = vadd.f32 %v1108, %v1217
        %v1224 = vadd.f32 %v1109, %v1219
        %s1225 = scalar_lea.vmem %s3, 1152
        %v1226 = vld [vmem:[%s1225] sm:$0xff]
        %v1227 = vld [vmem:[%s1225 + $0x8] sm:$0xff]
        %v1228 = vld [vmem:[%s1225 + $0x10] sm:$0xff]
        %v1229 = vld [vmem:[%s1225 + $0x18] sm:$0xff]
        %v1230 = vld [vmem:[%s1225 + $0x20] sm:$0xff]
        %v1231 = vld [vmem:[%s1225 + $0x28] sm:$0xff]
        %v1232 = vld [vmem:[%s1225 + $0x30] sm:$0xff]
        %v1233 = vld [vmem:[%s1225 + $0x38] sm:$0xff]
        %v1234 = vld [vmem:[%s1225 + $0x40] sm:$0xff]
        %v1235 = vld [vmem:[%s1225 + $0x48] sm:$0xff]
        %v1236 = vld [vmem:[%s1225 + $0x50] sm:$0xff]
        %v1237 = vld [vmem:[%s1225 + $0x58] sm:$0xff]
        %v1238 = vld [vmem:[%s1225 + $0x60] sm:$0xff]
        %v1239 = vld [vmem:[%s1225 + $0x68] sm:$0xff]
        %v1240 = vld [vmem:[%s1225 + $0x70] sm:$0xff]
        %v1241 = vld [vmem:[%s1225 + $0x78] sm:$0xff]
        %v1242 = vld [vmem:[%s1225 + $0x80] sm:$0xff]
        %v1243 = vld [vmem:[%s1225 + $0x88] sm:$0xff]
        %v1244 = vld [vmem:[%s1225 + $0x90] sm:$0xff]
        %v1245 = vld [vmem:[%s1225 + $0x98] sm:$0xff]
        %v1246 = vld [vmem:[%s1225 + $0xa0] sm:$0xff]
        %v1247 = vld [vmem:[%s1225 + $0xa8] sm:$0xff]
        %v1248 = vld [vmem:[%s1225 + $0xb0] sm:$0xff]
        %v1249 = vld [vmem:[%s1225 + $0xb8] sm:$0xff]
        %v1250 = vrot.slane %v542, 6
        %v1251 = vrot.slane %v543, 6
        %v1252 = vsel %vm502, %v1250, %v1251
        %v1253 = vrot.slane %v544, 6
        %v1254 = vsel %vm502, %v1251, %v1253
        %v1255 = vsel %vm602, %v1252, 0
        %v1257 = vsel %vm602, %v1254, 0
        %1259 = vmatprep.subr.mxu0 %v1227
        %1260 = vmatpush1.msra.mxu0 %v1226
        %1261 = vmatprep.subr.mxu0 %v1229
        %1262 = vmatpush1.msra.mxu0 %v1228
        %1263 = vmatprep.subr.mxu0 %v1231
        %1264 = vmatpush1.msra.mxu0 %v1230
        %1265 = vmatprep.subr.mxu0 %v1233
        %1266 = vmatpush1.msra.mxu0 %v1232
        %1267 = vmatprep.subr.mxu0 %v1235
        %1268 = vmatpush1.msra.mxu0 %v1234
        %1269 = vmatprep.subr.mxu0 %v1237
        %1270 = vmatpush1.msra.mxu0 %v1236
        %1271 = vmatprep.subr.mxu0 %v1239
        %1272 = vmatpush1.msra.mxu0 %v1238
        %1273 = vmatprep.subr.mxu0 %v1241
        %1274 = vmatpush1.msra.mxu0 %v1240
        %1275 = vmatprep.subr.mxu0 %v1243
        %1276 = vmatpush1.msra.mxu0 %v1242
        %1277 = vmatprep.subr.mxu0 %v1245
        %1278 = vmatpush1.msra.mxu0 %v1244
        %1279 = vmatprep.subr.mxu0 %v1247
        %1280 = vmatpush1.msra.mxu0 %v1246
        %1281 = vmatprep.subr.mxu0 %v1249
        %1282 = vmatpush1.msra.mxu0 %v1248
        %1283 = vmatprep.subr.mxu0 0.0
        %1284 = vmatpush1.msra.mxu0 0.0
        %1285 = vmatprep.subr.mxu0 0.0
        %1286 = vmatpush1.msra.mxu0 0.0
        %1287 = vmatprep.subr.mxu0 0.0
        %1288 = vmatpush1.msra.mxu0 0.0
        %1289 = vmatprep.subr.mxu0 0.0
        %1290 = vmatpush1.msra.mxu0 0.0
        %1291 = vmatprep.subr.mxu0 0.0
        %1292 = vmatpush1.msra.mxu0 0.0
        %1293 = vmatprep.subr.mxu0 0.0
        %1294 = vmatpush1.msra.mxu0 0.0
        %1295 = vmatprep.subr.mxu0 0.0
        %1296 = vmatpush1.msra.mxu0 0.0
        %1297 = vmatprep.subr.mxu0 0.0
        %1298 = vmatpush1.msra.mxu0 0.0
        %1299 = vmatprep.subr.mxu0 0.0
        %1300 = vmatpush1.msra.mxu0 0.0
        %1301 = vmatprep.subr.mxu0 0.0
        %1302 = vmatpush1.msra.mxu0 0.0
        %1303 = vmatprep.subr.mxu0 0.0
        %1304 = vmatpush1.msra.mxu0 0.0
        %1305 = vmatprep.subr.mxu0 0.0
        %1306 = vmatpush1.msra.mxu0 0.0
        %1307 = vmatprep.subr.mxu0 0.0
        %1308 = vmatpush1.msra.mxu0 0.0
        %1309 = vmatprep.subr.mxu0 0.0
        %1310 = vmatpush1.msra.mxu0 0.0
        %1311 = vmatprep.subr.mxu0 0.0
        %1312 = vmatpush1.msra.mxu0 0.0
        %1313 = vmatprep.subr.mxu0 0.0
        %1314 = vmatpush1.msra.mxu0 0.0
        %1315 = vmatprep.subr.mxu0 0.0
        %1316 = vmatpush1.msra.mxu0 0.0
        %1317 = vmatprep.subr.mxu0 0.0
        %1318 = vmatpush1.msra.mxu0 0.0
        %1319 = vmatprep.subr.mxu0 0.0
        %1320 = vmatpush1.msra.mxu0 0.0
        %1321 = vmatprep.subr.mxu0 0.0
        %1322 = vmatpush1.msra.mxu0 0.0
        %1323 = vmatprep.mubr.f32.mxu0 0.0
        %1324 = vmatmul.mubr.f32.gmra.mrb[0].mxu0 %v1255
        %v1325 = vpop.f32.mrb[0].mxu0
        %v1326 = vadd.f32 0.0, %v1325
        %v1327 = vpop.f32.mrb[0].mxu0
        %v1328 = vadd.f32 0.0, %v1327
        %1329 = vmatprep.mubr.f32.mxu0 0.0
        %1330 = vmatmul.mubr.f32.gmra.mrb[0].mxu0 %v1257
        %v1331 = vpop.f32.mrb[0].mxu0
        %v1332 = vadd.f32 0.0, %v1331
        %v1333 = vpop.f32.mrb[0].mxu0
        %v1334 = vadd.f32 0.0, %v1333
        %1335 = vdwg.mxu0
        %v1336 = vadd.f32 %v1221, %v1326
        %v1337 = vadd.f32 %v1222, %v1328
        %v1338 = vadd.f32 %v1223, %v1332
        %v1339 = vadd.f32 %v1224, %v1334
        %v1340 = vld [vmem:[%s4] sm:$0x3]
        %v1342 = vlaneseq
        %v1343 = vshrl.u32 %v1342, 7
        %v1344 = vsub.s32 0, %v1343
        %v1345 = vrot.slane %v1340, %v1344
        %v1346 = vlaneseq
        %v1347 = vshrl.u32 %v1346, 7
        %v1348 = vsub.s32 1, %v1347
        %v1349 = vrot.slane %v1340, %v1348
        %v1352 = vadd.f32 %v1336, %v1345
        %v1353 = vadd.f32 %v1337, %v1349
        %v1354 = vadd.f32 %v1338, %v1345
        %v1355 = vadd.f32 %v1339, %v1349
        %v1356 = vmax.f32 %v1352, 0.0
        %v1357 = vmax.f32 %v1353, 0.0
        %v1358 = vmax.f32 %v1354, 0.0
        %v1359 = vmax.f32 %v1355, 0.0
        %v1362 = vcombine.low %v1356, %v1357
        %v1364 = vunpack.c.l.s4 1966171168
        %v1365 = vunpack.c.0.s8 %v1364
        %v1366 = vlaneseq
        %v1367 = vshrl.u32 %v1366, 7
        %v1368 = vsub.s32 %v1365, %v1367
        %v1369 = vrot.slane %v1362, %v1368
        %v1371 = vunpack.c.l.s4 1966171168
        %v1372 = vunpack.c.0.s8 %v1371
        %v1373 = vlaneseq
        %v1374 = vshrl.u32 %v1373, 7
        %v1375 = vsub.s32 %v1372, %v1374
        %v1376 = vrot.slane %v1369, %v1375
        %v1378 = vlaneseq
        %vm1379 = vcmp.ge.s32.totalorder %v1378, 0
        %vm1380 = vcmp.lt.s32.totalorder %v1378, 256
        %vm1381 = vmand %vm1379, %vm1380
        %1382 = vst.msk [vmem:[#allocation2] sm:$0x3] %vm1381, %v1376
        %v1383 = vcombine.high %v1369, %v1369
        %v1385 = vunpack.c.l.s4 1966171168
        %v1386 = vunpack.c.0.s8 %v1385
        %v1387 = vlaneseq
        %v1388 = vshrl.u32 %v1387, 7
        %v1389 = vsub.s32 %v1386, %v1388
        %v1390 = vrot.slane %v1383, %v1389
        %1392 = vst.msk [vmem:[#allocation2 + $0x2] sm:$0x3] %vm1381, %v1390
        %v1393 = vcombine.high %v1376, %v1376
        %1395 = vst.msk [vmem:[#allocation2 + $0x4] sm:$0x3] %vm1381, %v1393
        %v1396 = vcombine.high %v1390, %v1390
        %1398 = vst.msk [vmem:[#allocation2 + $0x6] sm:$0x3] %vm1381, %v1396
        %v1399 = vcombine.high %v1356, %v1357
        %v1401 = vunpack.c.l.s4 1966171168
        %v1402 = vunpack.c.0.s8 %v1401
        %v1403 = vlaneseq
        %v1404 = vshrl.u32 %v1403, 7
        %v1405 = vsub.s32 %v1402, %v1404
        %v1406 = vrot.slane %v1399, %v1405
        %v1408 = vunpack.c.l.s4 1966171168
        %v1409 = vunpack.c.0.s8 %v1408
        %v1410 = vlaneseq
        %v1411 = vshrl.u32 %v1410, 7
        %v1412 = vsub.s32 %v1409, %v1411
        %v1413 = vrot.slane %v1406, %v1412
        %1415 = vst.msk [vmem:[#allocation2 + $0x8] sm:$0x3] %vm1381, %v1413
        %v1416 = vcombine.high %v1406, %v1406
        %v1418 = vunpack.c.l.s4 1966171168
        %v1419 = vunpack.c.0.s8 %v1418
        %v1420 = vlaneseq
        %v1421 = vshrl.u32 %v1420, 7
        %v1422 = vsub.s32 %v1419, %v1421
        %v1423 = vrot.slane %v1416, %v1422
        %1425 = vst.msk [vmem:[#allocation2 + $0xa] sm:$0x3] %vm1381, %v1423
        %v1426 = vcombine.high %v1413, %v1413
        %1428 = vst.msk [vmem:[#allocation2 + $0xc] sm:$0x3] %vm1381, %v1426
        %v1429 = vcombine.high %v1423, %v1423
        %1431 = vst.msk [vmem:[#allocation2 + $0xe] sm:$0x3] %vm1381, %v1429
        %v1434 = vcombine.low %v1358, %v1359
        %v1436 = vunpack.c.l.s4 1966171168
        %v1437 = vunpack.c.0.s8 %v1436
        %v1438 = vlaneseq
        %v1439 = vshrl.u32 %v1438, 7
        %v1440 = vsub.s32 %v1437, %v1439
        %v1441 = vrot.slane %v1434, %v1440
        %v1443 = vunpack.c.l.s4 1966171168
        %v1444 = vunpack.c.0.s8 %v1443
        %v1445 = vlaneseq
        %v1446 = vshrl.u32 %v1445, 7
        %v1447 = vsub.s32 %v1444, %v1446
        %v1448 = vrot.slane %v1441, %v1447
        %1450 = vst.msk [vmem:[#allocation2 + $0x10] sm:$0x3] %vm1381, %v1448
        %v1451 = vcombine.high %v1441, %v1441
        %v1453 = vunpack.c.l.s4 1966171168
        %v1454 = vunpack.c.0.s8 %v1453
        %v1455 = vlaneseq
        %v1456 = vshrl.u32 %v1455, 7
        %v1457 = vsub.s32 %v1454, %v1456
        %v1458 = vrot.slane %v1451, %v1457
        %1460 = vst.msk [vmem:[#allocation2 + $0x12] sm:$0x3] %vm1381, %v1458
        %v1461 = vcombine.high %v1448, %v1448
        %1463 = vst.msk [vmem:[#allocation2 + $0x14] sm:$0x3] %vm1381, %v1461
        %v1464 = vcombine.high %v1458, %v1458
        %1466 = vst.msk [vmem:[#allocation2 + $0x16] sm:$0x3] %vm1381, %v1464
        %v1467 = vcombine.high %v1358, %v1359
        %v1469 = vunpack.c.l.s4 1966171168
        %v1470 = vunpack.c.0.s8 %v1469
        %v1471 = vlaneseq
        %v1472 = vshrl.u32 %v1471, 7
        %v1473 = vsub.s32 %v1470, %v1472
        %v1474 = vrot.slane %v1467, %v1473
        %v1476 = vunpack.c.l.s4 1966171168
        %v1477 = vunpack.c.0.s8 %v1476
        %v1478 = vlaneseq
        %v1479 = vshrl.u32 %v1478, 7
        %v1480 = vsub.s32 %v1477, %v1479
        %v1481 = vrot.slane %v1474, %v1480
        %1483 = vst.msk [vmem:[#allocation2 + $0x18] sm:$0x3] %vm1381, %v1481
        %v1484 = vcombine.high %v1474, %v1474
        %v1486 = vunpack.c.l.s4 1966171168
        %v1487 = vunpack.c.0.s8 %v1486
        %v1488 = vlaneseq
        %v1489 = vshrl.u32 %v1488, 7
        %v1490 = vsub.s32 %v1487, %v1489
        %v1491 = vrot.slane %v1484, %v1490
        %1493 = vst.msk [vmem:[#allocation2 + $0x1a] sm:$0x3] %vm1381, %v1491
        %v1494 = vcombine.high %v1481, %v1481
        %1496 = vst.msk [vmem:[#allocation2 + $0x1c] sm:$0x3] %vm1381, %v1494
        %v1497 = vcombine.high %v1491, %v1491
        %1499 = vst.msk [vmem:[#allocation2 + $0x1e] sm:$0x3] %vm1381, %v1497
        %v1500 = vld [vmem:[#allocation2] sm:$0xff]
        %v1501 = vld [vmem:[#allocation2 + $0x8] sm:$0xff]
        %v1502 = vld [vmem:[#allocation2 + $0x10] sm:$0xff]
        %v1503 = vld [vmem:[#allocation2 + $0x18] sm:$0xff]
        %v1504 = vld [vmem:[%s5] sm:$0xff]
        %v1505 = vld [vmem:[%s5 + $0x8] sm:$0xff]
        %v1506 = vld [vmem:[%s5 + $0x10] sm:$0xff]
        %v1507 = vld [vmem:[%s5 + $0x18] sm:$0xff]
        %v1508 = vld [vmem:[%s5 + $0x20] sm:$0xff]
        %v1509 = vld [vmem:[%s5 + $0x28] sm:$0xff]
        %v1510 = vld [vmem:[%s5 + $0x30] sm:$0xff]
        %v1511 = vld [vmem:[%s5 + $0x38] sm:$0xff]
        %v1512 = vld [vmem:[%s5 + $0x40] sm:$0xff]
        %v1513 = vld [vmem:[%s5 + $0x48] sm:$0xff]
        %v1514 = vld [vmem:[%s5 + $0x50] sm:$0xff]
        %v1515 = vld [vmem:[%s5 + $0x58] sm:$0xff]
        %v1516 = vld [vmem:[%s5 + $0x60] sm:$0xff]
        %v1517 = vld [vmem:[%s5 + $0x68] sm:$0xff]
        %v1518 = vld [vmem:[%s5 + $0x70] sm:$0xff]
        %v1519 = vld [vmem:[%s5 + $0x78] sm:$0xff]
        %v1520 = vld [vmem:[%s5 + $0x80] sm:$0xff]
        %v1521 = vld [vmem:[%s5 + $0x88] sm:$0xff]
        %v1522 = vld [vmem:[%s5 + $0x90] sm:$0xff]
        %v1523 = vld [vmem:[%s5 + $0x98] sm:$0xff]
        %v1524 = vld [vmem:[%s5 + $0xa0] sm:$0xff]
        %v1525 = vld [vmem:[%s5 + $0xa8] sm:$0xff]
        %v1526 = vld [vmem:[%s5 + $0xb0] sm:$0xff]
        %v1527 = vld [vmem:[%s5 + $0xb8] sm:$0xff]
        %v1528 = vld [vmem:[%s5 + $0xc0] sm:$0xff]
        %v1529 = vld [vmem:[%s5 + $0xc8] sm:$0xff]
        %v1530 = vld [vmem:[%s5 + $0xd0] sm:$0xff]
        %v1531 = vld [vmem:[%s5 + $0xd8] sm:$0xff]
        %v1532 = vld [vmem:[%s5 + $0xe0] sm:$0xff]
        %v1533 = vld [vmem:[%s5 + $0xe8] sm:$0xff]
        %v1534 = vld [vmem:[%s5 + $0xf0] sm:$0xff]
        %v1535 = vld [vmem:[%s5 + $0xf8] sm:$0xff]
        %v1536 = vld [vmem:[%s5 + $0x100] sm:$0xff]
        %v1537 = vld [vmem:[%s5 + $0x108] sm:$0xff]
        %v1538 = vld [vmem:[%s5 + $0x110] sm:$0xff]
        %v1539 = vld [vmem:[%s5 + $0x118] sm:$0xff]
        %v1540 = vld [vmem:[%s5 + $0x120] sm:$0xff]
        %v1541 = vld [vmem:[%s5 + $0x128] sm:$0xff]
        %v1542 = vld [vmem:[%s5 + $0x130] sm:$0xff]
        %v1543 = vld [vmem:[%s5 + $0x138] sm:$0xff]
        %v1544 = vld [vmem:[%s5 + $0x140] sm:$0xff]
        %v1545 = vld [vmem:[%s5 + $0x148] sm:$0xff]
        %v1546 = vld [vmem:[%s5 + $0x150] sm:$0xff]
        %v1547 = vld [vmem:[%s5 + $0x158] sm:$0xff]
        %v1548 = vld [vmem:[%s5 + $0x160] sm:$0xff]
        %v1549 = vld [vmem:[%s5 + $0x168] sm:$0xff]
        %v1550 = vld [vmem:[%s5 + $0x170] sm:$0xff]
        %v1551 = vld [vmem:[%s5 + $0x178] sm:$0xff]
        %v1552 = vld [vmem:[%s5 + $0x180] sm:$0xff]
        %v1553 = vld [vmem:[%s5 + $0x188] sm:$0xff]
        %v1554 = vld [vmem:[%s5 + $0x190] sm:$0xff]
        %v1555 = vld [vmem:[%s5 + $0x198] sm:$0xff]
        %v1556 = vld [vmem:[%s5 + $0x1a0] sm:$0xff]
        %v1557 = vld [vmem:[%s5 + $0x1a8] sm:$0xff]
        %v1558 = vld [vmem:[%s5 + $0x1b0] sm:$0xff]
        %v1559 = vld [vmem:[%s5 + $0x1b8] sm:$0xff]
        %v1560 = vld [vmem:[%s5 + $0x1c0] sm:$0xff]
        %v1561 = vld [vmem:[%s5 + $0x1c8] sm:$0xff]
        %v1562 = vld [vmem:[%s5 + $0x1d0] sm:$0xff]
        %v1563 = vld [vmem:[%s5 + $0x1d8] sm:$0xff]
        %v1564 = vld [vmem:[%s5 + $0x1e0] sm:$0xff]
        %v1565 = vld [vmem:[%s5 + $0x1e8] sm:$0xff]
        %v1566 = vld [vmem:[%s5 + $0x1f0] sm:$0xff]
        %v1567 = vld [vmem:[%s5 + $0x1f8] sm:$0xff]
        %v1568 = vld [vmem:[%s5 + $0x200] sm:$0xff]
        %v1569 = vld [vmem:[%s5 + $0x208] sm:$0xff]
        %v1570 = vld [vmem:[%s5 + $0x210] sm:$0xff]
        %v1571 = vld [vmem:[%s5 + $0x218] sm:$0xff]
        %v1572 = vld [vmem:[%s5 + $0x220] sm:$0xff]
        %v1573 = vld [vmem:[%s5 + $0x228] sm:$0xff]
        %v1574 = vld [vmem:[%s5 + $0x230] sm:$0xff]
        %v1575 = vld [vmem:[%s5 + $0x238] sm:$0xff]
        %v1576 = vld [vmem:[%s5 + $0x240] sm:$0xff]
        %v1577 = vld [vmem:[%s5 + $0x248] sm:$0xff]
        %v1578 = vld [vmem:[%s5 + $0x250] sm:$0xff]
        %v1579 = vld [vmem:[%s5 + $0x258] sm:$0xff]
        %v1580 = vld [vmem:[%s5 + $0x260] sm:$0xff]
        %v1581 = vld [vmem:[%s5 + $0x268] sm:$0xff]
        %v1582 = vld [vmem:[%s5 + $0x270] sm:$0xff]
        %v1583 = vld [vmem:[%s5 + $0x278] sm:$0xff]
        %v1584 = vld [vmem:[%s5 + $0x280] sm:$0xff]
        %v1585 = vld [vmem:[%s5 + $0x288] sm:$0xff]
        %v1586 = vld [vmem:[%s5 + $0x290] sm:$0xff]
        %v1587 = vld [vmem:[%s5 + $0x298] sm:$0xff]
        %v1588 = vld [vmem:[%s5 + $0x2a0] sm:$0xff]
        %v1589 = vld [vmem:[%s5 + $0x2a8] sm:$0xff]
        %v1590 = vld [vmem:[%s5 + $0x2b0] sm:$0xff]
        %v1591 = vld [vmem:[%s5 + $0x2b8] sm:$0xff]
        %v1592 = vld [vmem:[%s5 + $0x2c0] sm:$0xff]
        %v1593 = vld [vmem:[%s5 + $0x2c8] sm:$0xff]
        %v1594 = vld [vmem:[%s5 + $0x2d0] sm:$0xff]
        %v1595 = vld [vmem:[%s5 + $0x2d8] sm:$0xff]
        %v1596 = vld [vmem:[%s5 + $0x2e0] sm:$0xff]
        %v1597 = vld [vmem:[%s5 + $0x2e8] sm:$0xff]
        %v1598 = vld [vmem:[%s5 + $0x2f0] sm:$0xff]
        %v1599 = vld [vmem:[%s5 + $0x2f8] sm:$0xff]
        %v1600 = vld [vmem:[%s5 + $0x300] sm:$0xff]
        %v1601 = vld [vmem:[%s5 + $0x308] sm:$0xff]
        %v1602 = vld [vmem:[%s5 + $0x310] sm:$0xff]
        %v1603 = vld [vmem:[%s5 + $0x318] sm:$0xff]
        %v1604 = vld [vmem:[%s5 + $0x320] sm:$0xff]
        %v1605 = vld [vmem:[%s5 + $0x328] sm:$0xff]
        %v1606 = vld [vmem:[%s5 + $0x330] sm:$0xff]
        %v1607 = vld [vmem:[%s5 + $0x338] sm:$0xff]
        %v1608 = vld [vmem:[%s5 + $0x340] sm:$0xff]
        %v1609 = vld [vmem:[%s5 + $0x348] sm:$0xff]
        %v1610 = vld [vmem:[%s5 + $0x350] sm:$0xff]
        %v1611 = vld [vmem:[%s5 + $0x358] sm:$0xff]
        %v1612 = vld [vmem:[%s5 + $0x360] sm:$0xff]
        %v1613 = vld [vmem:[%s5 + $0x368] sm:$0xff]
        %v1614 = vld [vmem:[%s5 + $0x370] sm:$0xff]
        %v1615 = vld [vmem:[%s5 + $0x378] sm:$0xff]
        %v1616 = vld [vmem:[%s5 + $0x380] sm:$0xff]
        %v1617 = vld [vmem:[%s5 + $0x388] sm:$0xff]
        %v1618 = vld [vmem:[%s5 + $0x390] sm:$0xff]
        %v1619 = vld [vmem:[%s5 + $0x398] sm:$0xff]
        %v1620 = vld [vmem:[%s5 + $0x3a0] sm:$0xff]
        %v1621 = vld [vmem:[%s5 + $0x3a8] sm:$0xff]
        %v1622 = vld [vmem:[%s5 + $0x3b0] sm:$0xff]
        %v1623 = vld [vmem:[%s5 + $0x3b8] sm:$0xff]
        %v1624 = vld [vmem:[%s5 + $0x3c0] sm:$0xff]
        %v1625 = vld [vmem:[%s5 + $0x3c8] sm:$0xff]
        %v1626 = vld [vmem:[%s5 + $0x3d0] sm:$0xff]
        %v1627 = vld [vmem:[%s5 + $0x3d8] sm:$0xff]
        %v1628 = vld [vmem:[%s5 + $0x3e0] sm:$0xff]
        %v1629 = vld [vmem:[%s5 + $0x3e8] sm:$0xff]
        %v1630 = vld [vmem:[%s5 + $0x3f0] sm:$0xff]
        %v1631 = vld [vmem:[%s5 + $0x3f8] sm:$0xff]
        %v1632 = vld [vmem:[%s5 + $0x400] sm:$0xff]
        %v1633 = vld [vmem:[%s5 + $0x408] sm:$0xff]
        %v1634 = vld [vmem:[%s5 + $0x410] sm:$0xff]
        %v1635 = vld [vmem:[%s5 + $0x418] sm:$0xff]
        %v1636 = vld [vmem:[%s5 + $0x420] sm:$0xff]
        %v1637 = vld [vmem:[%s5 + $0x428] sm:$0xff]
        %v1638 = vld [vmem:[%s5 + $0x430] sm:$0xff]
        %v1639 = vld [vmem:[%s5 + $0x438] sm:$0xff]
        %v1640 = vld [vmem:[%s5 + $0x440] sm:$0xff]
        %v1641 = vld [vmem:[%s5 + $0x448] sm:$0xff]
        %v1642 = vld [vmem:[%s5 + $0x450] sm:$0xff]
        %v1643 = vld [vmem:[%s5 + $0x458] sm:$0xff]
        %v1644 = vld [vmem:[%s5 + $0x460] sm:$0xff]
        %v1645 = vld [vmem:[%s5 + $0x468] sm:$0xff]
        %v1646 = vld [vmem:[%s5 + $0x470] sm:$0xff]
        %v1647 = vld [vmem:[%s5 + $0x478] sm:$0xff]
        %v1648 = vld [vmem:[%s5 + $0x480] sm:$0xff]
        %v1649 = vld [vmem:[%s5 + $0x488] sm:$0xff]
        %v1650 = vld [vmem:[%s5 + $0x490] sm:$0xff]
        %v1651 = vld [vmem:[%s5 + $0x498] sm:$0xff]
        %v1652 = vld [vmem:[%s5 + $0x4a0] sm:$0xff]
        %v1653 = vld [vmem:[%s5 + $0x4a8] sm:$0xff]
        %v1654 = vld [vmem:[%s5 + $0x4b0] sm:$0xff]
        %v1655 = vld [vmem:[%s5 + $0x4b8] sm:$0xff]
        %v1656 = vld [vmem:[%s5 + $0x4c0] sm:$0xff]
        %v1657 = vld [vmem:[%s5 + $0x4c8] sm:$0xff]
        %v1658 = vld [vmem:[%s5 + $0x4d0] sm:$0xff]
        %v1659 = vld [vmem:[%s5 + $0x4d8] sm:$0xff]
        %v1660 = vld [vmem:[%s5 + $0x4e0] sm:$0xff]
        %v1661 = vld [vmem:[%s5 + $0x4e8] sm:$0xff]
        %v1662 = vld [vmem:[%s5 + $0x4f0] sm:$0xff]
        %v1663 = vld [vmem:[%s5 + $0x4f8] sm:$0xff]
        %v1664 = vld [vmem:[%s5 + $0x500] sm:$0xff]
        %v1665 = vld [vmem:[%s5 + $0x508] sm:$0xff]
        %v1666 = vld [vmem:[%s5 + $0x510] sm:$0xff]
        %v1667 = vld [vmem:[%s5 + $0x518] sm:$0xff]
        %v1668 = vld [vmem:[%s5 + $0x520] sm:$0xff]
        %v1669 = vld [vmem:[%s5 + $0x528] sm:$0xff]
        %v1670 = vld [vmem:[%s5 + $0x530] sm:$0xff]
        %v1671 = vld [vmem:[%s5 + $0x538] sm:$0xff]
        %v1672 = vld [vmem:[%s5 + $0x540] sm:$0xff]
        %v1673 = vld [vmem:[%s5 + $0x548] sm:$0xff]
        %v1674 = vld [vmem:[%s5 + $0x550] sm:$0xff]
        %v1675 = vld [vmem:[%s5 + $0x558] sm:$0xff]
        %v1676 = vld [vmem:[%s5 + $0x560] sm:$0xff]
        %v1677 = vld [vmem:[%s5 + $0x568] sm:$0xff]
        %v1678 = vld [vmem:[%s5 + $0x570] sm:$0xff]
        %v1679 = vld [vmem:[%s5 + $0x578] sm:$0xff]
        %v1680 = vld [vmem:[%s5 + $0x580] sm:$0xff]
        %v1681 = vld [vmem:[%s5 + $0x588] sm:$0xff]
        %v1682 = vld [vmem:[%s5 + $0x590] sm:$0xff]
        %v1683 = vld [vmem:[%s5 + $0x598] sm:$0xff]
        %v1684 = vld [vmem:[%s5 + $0x5a0] sm:$0xff]
        %v1685 = vld [vmem:[%s5 + $0x5a8] sm:$0xff]
        %v1686 = vld [vmem:[%s5 + $0x5b0] sm:$0xff]
        %v1687 = vld [vmem:[%s5 + $0x5b8] sm:$0xff]
        %v1688 = vld [vmem:[%s5 + $0x5c0] sm:$0xff]
        %v1689 = vld [vmem:[%s5 + $0x5c8] sm:$0xff]
        %v1690 = vld [vmem:[%s5 + $0x5d0] sm:$0xff]
        %v1691 = vld [vmem:[%s5 + $0x5d8] sm:$0xff]
        %v1692 = vld [vmem:[%s5 + $0x5e0] sm:$0xff]
        %v1693 = vld [vmem:[%s5 + $0x5e8] sm:$0xff]
        %v1694 = vld [vmem:[%s5 + $0x5f0] sm:$0xff]
        %v1695 = vld [vmem:[%s5 + $0x5f8] sm:$0xff]
        %v1696 = vld [vmem:[%s5 + $0x600] sm:$0xff]
        %v1697 = vld [vmem:[%s5 + $0x608] sm:$0xff]
        %v1698 = vld [vmem:[%s5 + $0x610] sm:$0xff]
        %v1699 = vld [vmem:[%s5 + $0x618] sm:$0xff]
        %v1700 = vld [vmem:[%s5 + $0x620] sm:$0xff]
        %v1701 = vld [vmem:[%s5 + $0x628] sm:$0xff]
        %v1702 = vld [vmem:[%s5 + $0x630] sm:$0xff]
        %v1703 = vld [vmem:[%s5 + $0x638] sm:$0xff]
        %v1704 = vld [vmem:[%s5 + $0x640] sm:$0xff]
        %v1705 = vld [vmem:[%s5 + $0x648] sm:$0xff]
        %v1706 = vld [vmem:[%s5 + $0x650] sm:$0xff]
        %v1707 = vld [vmem:[%s5 + $0x658] sm:$0xff]
        %v1708 = vld [vmem:[%s5 + $0x660] sm:$0xff]
        %v1709 = vld [vmem:[%s5 + $0x668] sm:$0xff]
        %v1710 = vld [vmem:[%s5 + $0x670] sm:$0xff]
        %v1711 = vld [vmem:[%s5 + $0x678] sm:$0xff]
        %v1712 = vld [vmem:[%s5 + $0x680] sm:$0xff]
        %v1713 = vld [vmem:[%s5 + $0x688] sm:$0xff]
        %v1714 = vld [vmem:[%s5 + $0x690] sm:$0xff]
        %v1715 = vld [vmem:[%s5 + $0x698] sm:$0xff]
        %v1716 = vld [vmem:[%s5 + $0x6a0] sm:$0xff]
        %v1717 = vld [vmem:[%s5 + $0x6a8] sm:$0xff]
        %v1718 = vld [vmem:[%s5 + $0x6b0] sm:$0xff]
        %v1719 = vld [vmem:[%s5 + $0x6b8] sm:$0xff]
        %v1720 = vld [vmem:[%s5 + $0x6c0] sm:$0xff]
        %v1721 = vld [vmem:[%s5 + $0x6c8] sm:$0xff]
        %v1722 = vld [vmem:[%s5 + $0x6d0] sm:$0xff]
        %v1723 = vld [vmem:[%s5 + $0x6d8] sm:$0xff]
        %v1724 = vld [vmem:[%s5 + $0x6e0] sm:$0xff]
        %v1725 = vld [vmem:[%s5 + $0x6e8] sm:$0xff]
        %v1726 = vld [vmem:[%s5 + $0x6f0] sm:$0xff]
        %v1727 = vld [vmem:[%s5 + $0x6f8] sm:$0xff]
        %v1728 = vld [vmem:[%s5 + $0x700] sm:$0xff]
        %v1729 = vld [vmem:[%s5 + $0x708] sm:$0xff]
        %v1730 = vld [vmem:[%s5 + $0x710] sm:$0xff]
        %v1731 = vld [vmem:[%s5 + $0x718] sm:$0xff]
        %v1732 = vld [vmem:[%s5 + $0x720] sm:$0xff]
        %v1733 = vld [vmem:[%s5 + $0x728] sm:$0xff]
        %v1734 = vld [vmem:[%s5 + $0x730] sm:$0xff]
        %v1735 = vld [vmem:[%s5 + $0x738] sm:$0xff]
        %v1736 = vld [vmem:[%s5 + $0x740] sm:$0xff]
        %v1737 = vld [vmem:[%s5 + $0x748] sm:$0xff]
        %v1738 = vld [vmem:[%s5 + $0x750] sm:$0xff]
        %v1739 = vld [vmem:[%s5 + $0x758] sm:$0xff]
        %v1740 = vld [vmem:[%s5 + $0x760] sm:$0xff]
        %v1741 = vld [vmem:[%s5 + $0x768] sm:$0xff]
        %v1742 = vld [vmem:[%s5 + $0x770] sm:$0xff]
        %v1743 = vld [vmem:[%s5 + $0x778] sm:$0xff]
        %v1744 = vld [vmem:[%s5 + $0x780] sm:$0xff]
        %v1745 = vld [vmem:[%s5 + $0x788] sm:$0xff]
        %v1746 = vld [vmem:[%s5 + $0x790] sm:$0xff]
        %v1747 = vld [vmem:[%s5 + $0x798] sm:$0xff]
        %v1748 = vld [vmem:[%s5 + $0x7a0] sm:$0xff]
        %v1749 = vld [vmem:[%s5 + $0x7a8] sm:$0xff]
        %v1750 = vld [vmem:[%s5 + $0x7b0] sm:$0xff]
        %v1751 = vld [vmem:[%s5 + $0x7b8] sm:$0xff]
        %v1752 = vld [vmem:[%s5 + $0x7c0] sm:$0xff]
        %v1753 = vld [vmem:[%s5 + $0x7c8] sm:$0xff]
        %v1754 = vld [vmem:[%s5 + $0x7d0] sm:$0xff]
        %v1755 = vld [vmem:[%s5 + $0x7d8] sm:$0xff]
        %v1756 = vld [vmem:[%s5 + $0x7e0] sm:$0xff]
        %v1757 = vld [vmem:[%s5 + $0x7e8] sm:$0xff]
        %v1758 = vld [vmem:[%s5 + $0x7f0] sm:$0xff]
        %v1759 = vld [vmem:[%s5 + $0x7f8] sm:$0xff]
        %v1760 = vld [vmem:[%s5 + $0x800] sm:$0xff]
        %v1761 = vld [vmem:[%s5 + $0x808] sm:$0xff]
        %v1762 = vld [vmem:[%s5 + $0x810] sm:$0xff]
        %v1763 = vld [vmem:[%s5 + $0x818] sm:$0xff]
        %v1764 = vld [vmem:[%s5 + $0x820] sm:$0xff]
        %v1765 = vld [vmem:[%s5 + $0x828] sm:$0xff]
        %v1766 = vld [vmem:[%s5 + $0x830] sm:$0xff]
        %v1767 = vld [vmem:[%s5 + $0x838] sm:$0xff]
        %v1768 = vld [vmem:[%s5 + $0x840] sm:$0xff]
        %v1769 = vld [vmem:[%s5 + $0x848] sm:$0xff]
        %v1770 = vld [vmem:[%s5 + $0x850] sm:$0xff]
        %v1771 = vld [vmem:[%s5 + $0x858] sm:$0xff]
        %v1772 = vld [vmem:[%s5 + $0x860] sm:$0xff]
        %v1773 = vld [vmem:[%s5 + $0x868] sm:$0xff]
        %v1774 = vld [vmem:[%s5 + $0x870] sm:$0xff]
        %v1775 = vld [vmem:[%s5 + $0x878] sm:$0xff]
        %v1776 = vld [vmem:[%s5 + $0x880] sm:$0xff]
        %v1777 = vld [vmem:[%s5 + $0x888] sm:$0xff]
        %v1778 = vld [vmem:[%s5 + $0x890] sm:$0xff]
        %v1779 = vld [vmem:[%s5 + $0x898] sm:$0xff]
        %v1780 = vld [vmem:[%s5 + $0x8a0] sm:$0xff]
        %v1781 = vld [vmem:[%s5 + $0x8a8] sm:$0xff]
        %v1782 = vld [vmem:[%s5 + $0x8b0] sm:$0xff]
        %v1783 = vld [vmem:[%s5 + $0x8b8] sm:$0xff]
        %v1784 = vld [vmem:[%s5 + $0x8c0] sm:$0xff]
        %v1785 = vld [vmem:[%s5 + $0x8c8] sm:$0xff]
        %v1786 = vld [vmem:[%s5 + $0x8d0] sm:$0xff]
        %v1787 = vld [vmem:[%s5 + $0x8d8] sm:$0xff]
        %v1788 = vld [vmem:[%s5 + $0x8e0] sm:$0xff]
        %v1789 = vld [vmem:[%s5 + $0x8e8] sm:$0xff]
        %v1790 = vld [vmem:[%s5 + $0x8f0] sm:$0xff]
        %v1791 = vld [vmem:[%s5 + $0x8f8] sm:$0xff]
        %v1792 = vld [vmem:[%s5 + $0x900] sm:$0xff]
        %v1793 = vld [vmem:[%s5 + $0x908] sm:$0xff]
        %v1794 = vld [vmem:[%s5 + $0x910] sm:$0xff]
        %v1795 = vld [vmem:[%s5 + $0x918] sm:$0xff]
        %v1796 = vld [vmem:[%s5 + $0x920] sm:$0xff]
        %v1797 = vld [vmem:[%s5 + $0x928] sm:$0xff]
        %v1798 = vld [vmem:[%s5 + $0x930] sm:$0xff]
        %v1799 = vld [vmem:[%s5 + $0x938] sm:$0xff]
        %v1800 = vld [vmem:[%s5 + $0x940] sm:$0xff]
        %v1801 = vld [vmem:[%s5 + $0x948] sm:$0xff]
        %v1802 = vld [vmem:[%s5 + $0x950] sm:$0xff]
        %v1803 = vld [vmem:[%s5 + $0x958] sm:$0xff]
        %v1804 = vld [vmem:[%s5 + $0x960] sm:$0xff]
        %v1805 = vld [vmem:[%s5 + $0x968] sm:$0xff]
        %v1806 = vld [vmem:[%s5 + $0x970] sm:$0xff]
        %v1807 = vld [vmem:[%s5 + $0x978] sm:$0xff]
        %v1808 = vld [vmem:[%s5 + $0x980] sm:$0xff]
        %v1809 = vld [vmem:[%s5 + $0x988] sm:$0xff]
        %v1810 = vld [vmem:[%s5 + $0x990] sm:$0xff]
        %v1811 = vld [vmem:[%s5 + $0x998] sm:$0xff]
        %v1812 = vld [vmem:[%s5 + $0x9a0] sm:$0xff]
        %v1813 = vld [vmem:[%s5 + $0x9a8] sm:$0xff]
        %v1814 = vld [vmem:[%s5 + $0x9b0] sm:$0xff]
        %v1815 = vld [vmem:[%s5 + $0x9b8] sm:$0xff]
        %v1816 = vld [vmem:[%s5 + $0x9c0] sm:$0xff]
        %v1817 = vld [vmem:[%s5 + $0x9c8] sm:$0xff]
        %v1818 = vld [vmem:[%s5 + $0x9d0] sm:$0xff]
        %v1819 = vld [vmem:[%s5 + $0x9d8] sm:$0xff]
        %v1820 = vld [vmem:[%s5 + $0x9e0] sm:$0xff]
        %v1821 = vld [vmem:[%s5 + $0x9e8] sm:$0xff]
        %v1822 = vld [vmem:[%s5 + $0x9f0] sm:$0xff]
        %v1823 = vld [vmem:[%s5 + $0x9f8] sm:$0xff]
        %v1824 = vld [vmem:[%s5 + $0xa00] sm:$0xff]
        %v1825 = vld [vmem:[%s5 + $0xa08] sm:$0xff]
        %v1826 = vld [vmem:[%s5 + $0xa10] sm:$0xff]
        %v1827 = vld [vmem:[%s5 + $0xa18] sm:$0xff]
        %v1828 = vld [vmem:[%s5 + $0xa20] sm:$0xff]
        %v1829 = vld [vmem:[%s5 + $0xa28] sm:$0xff]
        %v1830 = vld [vmem:[%s5 + $0xa30] sm:$0xff]
        %v1831 = vld [vmem:[%s5 + $0xa38] sm:$0xff]
        %v1832 = vld [vmem:[%s5 + $0xa40] sm:$0xff]
        %v1833 = vld [vmem:[%s5 + $0xa48] sm:$0xff]
        %v1834 = vld [vmem:[%s5 + $0xa50] sm:$0xff]
        %v1835 = vld [vmem:[%s5 + $0xa58] sm:$0xff]
        %v1836 = vld [vmem:[%s5 + $0xa60] sm:$0xff]
        %v1837 = vld [vmem:[%s5 + $0xa68] sm:$0xff]
        %v1838 = vld [vmem:[%s5 + $0xa70] sm:$0xff]
        %v1839 = vld [vmem:[%s5 + $0xa78] sm:$0xff]
        %v1840 = vld [vmem:[%s5 + $0xa80] sm:$0xff]
        %v1841 = vld [vmem:[%s5 + $0xa88] sm:$0xff]
        %v1842 = vld [vmem:[%s5 + $0xa90] sm:$0xff]
        %v1843 = vld [vmem:[%s5 + $0xa98] sm:$0xff]
        %v1844 = vld [vmem:[%s5 + $0xaa0] sm:$0xff]
        %v1845 = vld [vmem:[%s5 + $0xaa8] sm:$0xff]
        %v1846 = vld [vmem:[%s5 + $0xab0] sm:$0xff]
        %v1847 = vld [vmem:[%s5 + $0xab8] sm:$0xff]
        %v1848 = vld [vmem:[%s5 + $0xac0] sm:$0xff]
        %v1849 = vld [vmem:[%s5 + $0xac8] sm:$0xff]
        %v1850 = vld [vmem:[%s5 + $0xad0] sm:$0xff]
        %v1851 = vld [vmem:[%s5 + $0xad8] sm:$0xff]
        %v1852 = vld [vmem:[%s5 + $0xae0] sm:$0xff]
        %v1853 = vld [vmem:[%s5 + $0xae8] sm:$0xff]
        %v1854 = vld [vmem:[%s5 + $0xaf0] sm:$0xff]
        %v1855 = vld [vmem:[%s5 + $0xaf8] sm:$0xff]
        %v1856 = vld [vmem:[%s5 + $0xb00] sm:$0xff]
        %v1857 = vld [vmem:[%s5 + $0xb08] sm:$0xff]
        %v1858 = vld [vmem:[%s5 + $0xb10] sm:$0xff]
        %v1859 = vld [vmem:[%s5 + $0xb18] sm:$0xff]
        %v1860 = vld [vmem:[%s5 + $0xb20] sm:$0xff]
        %v1861 = vld [vmem:[%s5 + $0xb28] sm:$0xff]
        %v1862 = vld [vmem:[%s5 + $0xb30] sm:$0xff]
        %v1863 = vld [vmem:[%s5 + $0xb38] sm:$0xff]
        %v1864 = vld [vmem:[%s5 + $0xb40] sm:$0xff]
        %v1865 = vld [vmem:[%s5 + $0xb48] sm:$0xff]
        %v1866 = vld [vmem:[%s5 + $0xb50] sm:$0xff]
        %v1867 = vld [vmem:[%s5 + $0xb58] sm:$0xff]
        %v1868 = vld [vmem:[%s5 + $0xb60] sm:$0xff]
        %v1869 = vld [vmem:[%s5 + $0xb68] sm:$0xff]
        %v1870 = vld [vmem:[%s5 + $0xb70] sm:$0xff]
        %v1871 = vld [vmem:[%s5 + $0xb78] sm:$0xff]
        %v1872 = vld [vmem:[%s5 + $0xb80] sm:$0xff]
        %v1873 = vld [vmem:[%s5 + $0xb88] sm:$0xff]
        %v1874 = vld [vmem:[%s5 + $0xb90] sm:$0xff]
        %v1875 = vld [vmem:[%s5 + $0xb98] sm:$0xff]
        %v1876 = vld [vmem:[%s5 + $0xba0] sm:$0xff]
        %v1877 = vld [vmem:[%s5 + $0xba8] sm:$0xff]
        %v1878 = vld [vmem:[%s5 + $0xbb0] sm:$0xff]
        %v1879 = vld [vmem:[%s5 + $0xbb8] sm:$0xff]
        %v1880 = vld [vmem:[%s5 + $0xbc0] sm:$0xff]
        %v1881 = vld [vmem:[%s5 + $0xbc8] sm:$0xff]
        %v1882 = vld [vmem:[%s5 + $0xbd0] sm:$0xff]
        %v1883 = vld [vmem:[%s5 + $0xbd8] sm:$0xff]
        %v1884 = vld [vmem:[%s5 + $0xbe0] sm:$0xff]
        %v1885 = vld [vmem:[%s5 + $0xbe8] sm:$0xff]
        %v1886 = vld [vmem:[%s5 + $0xbf0] sm:$0xff]
        %v1887 = vld [vmem:[%s5 + $0xbf8] sm:$0xff]
        %v1888 = vld [vmem:[%s5 + $0xc00] sm:$0xff]
        %v1889 = vld [vmem:[%s5 + $0xc08] sm:$0xff]
        %v1890 = vld [vmem:[%s5 + $0xc10] sm:$0xff]
        %v1891 = vld [vmem:[%s5 + $0xc18] sm:$0xff]
        %v1892 = vld [vmem:[%s5 + $0xc20] sm:$0xff]
        %v1893 = vld [vmem:[%s5 + $0xc28] sm:$0xff]
        %v1894 = vld [vmem:[%s5 + $0xc30] sm:$0xff]
        %v1895 = vld [vmem:[%s5 + $0xc38] sm:$0xff]
        %v1896 = vld [vmem:[%s5 + $0xc40] sm:$0xff]
        %v1897 = vld [vmem:[%s5 + $0xc48] sm:$0xff]
        %v1898 = vld [vmem:[%s5 + $0xc50] sm:$0xff]
        %v1899 = vld [vmem:[%s5 + $0xc58] sm:$0xff]
        %v1900 = vld [vmem:[%s5 + $0xc60] sm:$0xff]
        %v1901 = vld [vmem:[%s5 + $0xc68] sm:$0xff]
        %v1902 = vld [vmem:[%s5 + $0xc70] sm:$0xff]
        %v1903 = vld [vmem:[%s5 + $0xc78] sm:$0xff]
        %v1904 = vld [vmem:[%s5 + $0xc80] sm:$0xff]
        %v1905 = vld [vmem:[%s5 + $0xc88] sm:$0xff]
        %v1906 = vld [vmem:[%s5 + $0xc90] sm:$0xff]
        %v1907 = vld [vmem:[%s5 + $0xc98] sm:$0xff]
        %v1908 = vld [vmem:[%s5 + $0xca0] sm:$0xff]
        %v1909 = vld [vmem:[%s5 + $0xca8] sm:$0xff]
        %v1910 = vld [vmem:[%s5 + $0xcb0] sm:$0xff]
        %v1911 = vld [vmem:[%s5 + $0xcb8] sm:$0xff]
        %v1912 = vld [vmem:[%s5 + $0xcc0] sm:$0xff]
        %v1913 = vld [vmem:[%s5 + $0xcc8] sm:$0xff]
        %v1914 = vld [vmem:[%s5 + $0xcd0] sm:$0xff]
        %v1915 = vld [vmem:[%s5 + $0xcd8] sm:$0xff]
        %v1916 = vld [vmem:[%s5 + $0xce0] sm:$0xff]
        %v1917 = vld [vmem:[%s5 + $0xce8] sm:$0xff]
        %v1918 = vld [vmem:[%s5 + $0xcf0] sm:$0xff]
        %v1919 = vld [vmem:[%s5 + $0xcf8] sm:$0xff]
        %v1920 = vld [vmem:[%s5 + $0xd00] sm:$0xff]
        %v1921 = vld [vmem:[%s5 + $0xd08] sm:$0xff]
        %v1922 = vld [vmem:[%s5 + $0xd10] sm:$0xff]
        %v1923 = vld [vmem:[%s5 + $0xd18] sm:$0xff]
        %v1924 = vld [vmem:[%s5 + $0xd20] sm:$0xff]
        %v1925 = vld [vmem:[%s5 + $0xd28] sm:$0xff]
        %v1926 = vld [vmem:[%s5 + $0xd30] sm:$0xff]
        %v1927 = vld [vmem:[%s5 + $0xd38] sm:$0xff]
        %v1928 = vld [vmem:[%s5 + $0xd40] sm:$0xff]
        %v1929 = vld [vmem:[%s5 + $0xd48] sm:$0xff]
        %v1930 = vld [vmem:[%s5 + $0xd50] sm:$0xff]
        %v1931 = vld [vmem:[%s5 + $0xd58] sm:$0xff]
        %v1932 = vld [vmem:[%s5 + $0xd60] sm:$0xff]
        %v1933 = vld [vmem:[%s5 + $0xd68] sm:$0xff]
        %v1934 = vld [vmem:[%s5 + $0xd70] sm:$0xff]
        %v1935 = vld [vmem:[%s5 + $0xd78] sm:$0xff]
        %v1936 = vld [vmem:[%s5 + $0xd80] sm:$0xff]
        %v1937 = vld [vmem:[%s5 + $0xd88] sm:$0xff]
        %v1938 = vld [vmem:[%s5 + $0xd90] sm:$0xff]
        %v1939 = vld [vmem:[%s5 + $0xd98] sm:$0xff]
        %v1940 = vld [vmem:[%s5 + $0xda0] sm:$0xff]
        %v1941 = vld [vmem:[%s5 + $0xda8] sm:$0xff]
        %v1942 = vld [vmem:[%s5 + $0xdb0] sm:$0xff]
        %v1943 = vld [vmem:[%s5 + $0xdb8] sm:$0xff]
        %v1944 = vld [vmem:[%s5 + $0xdc0] sm:$0xff]
        %v1945 = vld [vmem:[%s5 + $0xdc8] sm:$0xff]
        %v1946 = vld [vmem:[%s5 + $0xdd0] sm:$0xff]
        %v1947 = vld [vmem:[%s5 + $0xdd8] sm:$0xff]
        %v1948 = vld [vmem:[%s5 + $0xde0] sm:$0xff]
        %v1949 = vld [vmem:[%s5 + $0xde8] sm:$0xff]
        %v1950 = vld [vmem:[%s5 + $0xdf0] sm:$0xff]
        %v1951 = vld [vmem:[%s5 + $0xdf8] sm:$0xff]
        %v1952 = vld [vmem:[%s5 + $0xe00] sm:$0xff]
        %v1953 = vld [vmem:[%s5 + $0xe08] sm:$0xff]
        %v1954 = vld [vmem:[%s5 + $0xe10] sm:$0xff]
        %v1955 = vld [vmem:[%s5 + $0xe18] sm:$0xff]
        %v1956 = vld [vmem:[%s5 + $0xe20] sm:$0xff]
        %v1957 = vld [vmem:[%s5 + $0xe28] sm:$0xff]
        %v1958 = vld [vmem:[%s5 + $0xe30] sm:$0xff]
        %v1959 = vld [vmem:[%s5 + $0xe38] sm:$0xff]
        %v1960 = vld [vmem:[%s5 + $0xe40] sm:$0xff]
        %v1961 = vld [vmem:[%s5 + $0xe48] sm:$0xff]
        %v1962 = vld [vmem:[%s5 + $0xe50] sm:$0xff]
        %v1963 = vld [vmem:[%s5 + $0xe58] sm:$0xff]
        %v1964 = vld [vmem:[%s5 + $0xe60] sm:$0xff]
        %v1965 = vld [vmem:[%s5 + $0xe68] sm:$0xff]
        %v1966 = vld [vmem:[%s5 + $0xe70] sm:$0xff]
        %v1967 = vld [vmem:[%s5 + $0xe78] sm:$0xff]
        %v1968 = vld [vmem:[%s5 + $0xe80] sm:$0xff]
        %v1969 = vld [vmem:[%s5 + $0xe88] sm:$0xff]
        %v1970 = vld [vmem:[%s5 + $0xe90] sm:$0xff]
        %v1971 = vld [vmem:[%s5 + $0xe98] sm:$0xff]
        %v1972 = vld [vmem:[%s5 + $0xea0] sm:$0xff]
        %v1973 = vld [vmem:[%s5 + $0xea8] sm:$0xff]
        %v1974 = vld [vmem:[%s5 + $0xeb0] sm:$0xff]
        %v1975 = vld [vmem:[%s5 + $0xeb8] sm:$0xff]
        %v1976 = vld [vmem:[%s5 + $0xec0] sm:$0xff]
        %v1977 = vld [vmem:[%s5 + $0xec8] sm:$0xff]
        %v1978 = vld [vmem:[%s5 + $0xed0] sm:$0xff]
        %v1979 = vld [vmem:[%s5 + $0xed8] sm:$0xff]
        %v1980 = vld [vmem:[%s5 + $0xee0] sm:$0xff]
        %v1981 = vld [vmem:[%s5 + $0xee8] sm:$0xff]
        %v1982 = vld [vmem:[%s5 + $0xef0] sm:$0xff]
        %v1983 = vld [vmem:[%s5 + $0xef8] sm:$0xff]
        %v1984 = vld [vmem:[%s5 + $0xf00] sm:$0xff]
        %v1985 = vld [vmem:[%s5 + $0xf08] sm:$0xff]
        %v1986 = vld [vmem:[%s5 + $0xf10] sm:$0xff]
        %v1987 = vld [vmem:[%s5 + $0xf18] sm:$0xff]
        %v1988 = vld [vmem:[%s5 + $0xf20] sm:$0xff]
        %v1989 = vld [vmem:[%s5 + $0xf28] sm:$0xff]
        %v1990 = vld [vmem:[%s5 + $0xf30] sm:$0xff]
        %v1991 = vld [vmem:[%s5 + $0xf38] sm:$0xff]
        %v1992 = vld [vmem:[%s5 + $0xf40] sm:$0xff]
        %v1993 = vld [vmem:[%s5 + $0xf48] sm:$0xff]
        %v1994 = vld [vmem:[%s5 + $0xf50] sm:$0xff]
        %v1995 = vld [vmem:[%s5 + $0xf58] sm:$0xff]
        %v1996 = vld [vmem:[%s5 + $0xf60] sm:$0xff]
        %v1997 = vld [vmem:[%s5 + $0xf68] sm:$0xff]
        %v1998 = vld [vmem:[%s5 + $0xf70] sm:$0xff]
        %v1999 = vld [vmem:[%s5 + $0xf78] sm:$0xff]
        %v2000 = vld [vmem:[%s5 + $0xf80] sm:$0xff]
        %v2001 = vld [vmem:[%s5 + $0xf88] sm:$0xff]
        %v2002 = vld [vmem:[%s5 + $0xf90] sm:$0xff]
        %v2003 = vld [vmem:[%s5 + $0xf98] sm:$0xff]
        %v2004 = vld [vmem:[%s5 + $0xfa0] sm:$0xff]
        %v2005 = vld [vmem:[%s5 + $0xfa8] sm:$0xff]
        %v2006 = vld [vmem:[%s5 + $0xfb0] sm:$0xff]
        %v2007 = vld [vmem:[%s5 + $0xfb8] sm:$0xff]
        %v2008 = vld [vmem:[%s5 + $0xfc0] sm:$0xff]
        %v2009 = vld [vmem:[%s5 + $0xfc8] sm:$0xff]
        %v2010 = vld [vmem:[%s5 + $0xfd0] sm:$0xff]
        %v2011 = vld [vmem:[%s5 + $0xfd8] sm:$0xff]
        %v2012 = vld [vmem:[%s5 + $0xfe0] sm:$0xff]
        %v2013 = vld [vmem:[%s5 + $0xfe8] sm:$0xff]
        %v2014 = vld [vmem:[%s5 + $0xff0] sm:$0xff]
        %v2015 = vld [vmem:[%s5 + $0xff8] sm:$0xff]
        %v2016 = vld [vmem:[%s6] sm:$0x1]
        %v2021 = vlaneseq
        %v2022 = vshrl.u32 %v2021, 7
        %v2023 = vsub.s32 0, %v2022
        %v2024 = vrot.slane %v1500, %v2023
        %v2025 = vlaneseq
        %v2026 = vshrl.u32 %v2025, 7
        %v2027 = vsub.s32 1, %v2026
        %v2028 = vrot.slane %v1500, %v2027
        %v2029 = vlaneseq
        %v2030 = vshrl.u32 %v2029, 7
        %v2031 = vsub.s32 2, %v2030
        %v2032 = vrot.slane %v1500, %v2031
        %v2033 = vlaneseq
        %v2034 = vshrl.u32 %v2033, 7
        %v2035 = vsub.s32 3, %v2034
        %v2036 = vrot.slane %v1500, %v2035
        %v2037 = vlaneseq
        %v2038 = vshrl.u32 %v2037, 7
        %v2039 = vsub.s32 4, %v2038
        %v2040 = vrot.slane %v1500, %v2039
        %v2041 = vlaneseq
        %v2042 = vshrl.u32 %v2041, 7
        %v2043 = vsub.s32 5, %v2042
        %v2044 = vrot.slane %v1500, %v2043
        %v2045 = vlaneseq
        %v2046 = vshrl.u32 %v2045, 7
        %v2047 = vsub.s32 6, %v2046
        %v2048 = vrot.slane %v1500, %v2047
        %v2049 = vlaneseq
        %v2050 = vshrl.u32 %v2049, 7
        %v2051 = vsub.s32 7, %v2050
        %v2052 = vrot.slane %v1500, %v2051
        %v2053 = vlaneseq
        %v2054 = vshrl.u32 %v2053, 7
        %v2055 = vsub.s32 0, %v2054
        %v2056 = vrot.slane %v1501, %v2055
        %v2057 = vlaneseq
        %v2058 = vshrl.u32 %v2057, 7
        %v2059 = vsub.s32 1, %v2058
        %v2060 = vrot.slane %v1501, %v2059
        %v2061 = vlaneseq
        %v2062 = vshrl.u32 %v2061, 7
        %v2063 = vsub.s32 2, %v2062
        %v2064 = vrot.slane %v1501, %v2063
        %v2065 = vlaneseq
        %v2066 = vshrl.u32 %v2065, 7
        %v2067 = vsub.s32 3, %v2066
        %v2068 = vrot.slane %v1501, %v2067
        %v2069 = vlaneseq
        %v2070 = vshrl.u32 %v2069, 7
        %v2071 = vsub.s32 4, %v2070
        %v2072 = vrot.slane %v1501, %v2071
        %v2073 = vlaneseq
        %v2074 = vshrl.u32 %v2073, 7
        %v2075 = vsub.s32 5, %v2074
        %v2076 = vrot.slane %v1501, %v2075
        %v2077 = vlaneseq
        %v2078 = vshrl.u32 %v2077, 7
        %v2079 = vsub.s32 6, %v2078
        %v2080 = vrot.slane %v1501, %v2079
        %v2081 = vlaneseq
        %v2082 = vshrl.u32 %v2081, 7
        %v2083 = vsub.s32 7, %v2082
        %v2084 = vrot.slane %v1501, %v2083
        %v2085 = vlaneseq
        %v2086 = vshrl.u32 %v2085, 7
        %v2087 = vsub.s32 0, %v2086
        %v2088 = vrot.slane %v1502, %v2087
        %v2089 = vlaneseq
        %v2090 = vshrl.u32 %v2089, 7
        %v2091 = vsub.s32 1, %v2090
        %v2092 = vrot.slane %v1502, %v2091
        %v2093 = vlaneseq
        %v2094 = vshrl.u32 %v2093, 7
        %v2095 = vsub.s32 2, %v2094
        %v2096 = vrot.slane %v1502, %v2095
        %v2097 = vlaneseq
        %v2098 = vshrl.u32 %v2097, 7
        %v2099 = vsub.s32 3, %v2098
        %v2100 = vrot.slane %v1502, %v2099
        %v2101 = vlaneseq
        %v2102 = vshrl.u32 %v2101, 7
        %v2103 = vsub.s32 4, %v2102
        %v2104 = vrot.slane %v1502, %v2103
        %v2105 = vlaneseq
        %v2106 = vshrl.u32 %v2105, 7
        %v2107 = vsub.s32 5, %v2106
        %v2108 = vrot.slane %v1502, %v2107
        %v2109 = vlaneseq
        %v2110 = vshrl.u32 %v2109, 7
        %v2111 = vsub.s32 6, %v2110
        %v2112 = vrot.slane %v1502, %v2111
        %v2113 = vlaneseq
        %v2114 = vshrl.u32 %v2113, 7
        %v2115 = vsub.s32 7, %v2114
        %v2116 = vrot.slane %v1502, %v2115
        %v2117 = vlaneseq
        %v2118 = vshrl.u32 %v2117, 7
        %v2119 = vsub.s32 0, %v2118
        %v2120 = vrot.slane %v1503, %v2119
        %v2121 = vlaneseq
        %v2122 = vshrl.u32 %v2121, 7
        %v2123 = vsub.s32 1, %v2122
        %v2124 = vrot.slane %v1503, %v2123
        %v2125 = vlaneseq
        %v2126 = vshrl.u32 %v2125, 7
        %v2127 = vsub.s32 2, %v2126
        %v2128 = vrot.slane %v1503, %v2127
        %v2129 = vlaneseq
        %v2130 = vshrl.u32 %v2129, 7
        %v2131 = vsub.s32 3, %v2130
        %v2132 = vrot.slane %v1503, %v2131
        %v2133 = vlaneseq
        %v2134 = vshrl.u32 %v2133, 7
        %v2135 = vsub.s32 4, %v2134
        %v2136 = vrot.slane %v1503, %v2135
        %v2137 = vlaneseq
        %v2138 = vshrl.u32 %v2137, 7
        %v2139 = vsub.s32 5, %v2138
        %v2140 = vrot.slane %v1503, %v2139
        %v2141 = vlaneseq
        %v2142 = vshrl.u32 %v2141, 7
        %v2143 = vsub.s32 6, %v2142
        %v2144 = vrot.slane %v1503, %v2143
        %v2145 = vlaneseq
        %v2146 = vshrl.u32 %v2145, 7
        %v2147 = vsub.s32 7, %v2146
        %v2148 = vrot.slane %v1503, %v2147
        %2181 = vmatprep.subr.mxu0 0.0
        %2182 = vmatpush1.msra.mxu0 %v1504
        %2183 = vmatprep.subr.mxu0 0.0
        %2184 = vmatpush1.msra.mxu0 %v1505
        %2185 = vmatprep.subr.mxu0 0.0
        %2186 = vmatpush1.msra.mxu0 %v1506
        %2187 = vmatprep.subr.mxu0 0.0
        %2188 = vmatpush1.msra.mxu0 %v1507
        %2189 = vmatprep.subr.mxu0 0.0
        %2190 = vmatpush1.msra.mxu0 %v1508
        %2191 = vmatprep.subr.mxu0 0.0
        %2192 = vmatpush1.msra.mxu0 %v1509
        %2193 = vmatprep.subr.mxu0 0.0
        %2194 = vmatpush1.msra.mxu0 %v1510
        %2195 = vmatprep.subr.mxu0 0.0
        %2196 = vmatpush1.msra.mxu0 %v1511
        %2197 = vmatprep.subr.mxu0 0.0
        %2198 = vmatpush1.msra.mxu0 %v1512
        %2199 = vmatprep.subr.mxu0 0.0
        %2200 = vmatpush1.msra.mxu0 %v1513
        %2201 = vmatprep.subr.mxu0 0.0
        %2202 = vmatpush1.msra.mxu0 %v1514
        %2203 = vmatprep.subr.mxu0 0.0
        %2204 = vmatpush1.msra.mxu0 %v1515
        %2205 = vmatprep.subr.mxu0 0.0
        %2206 = vmatpush1.msra.mxu0 %v1516
        %2207 = vmatprep.subr.mxu0 0.0
        %2208 = vmatpush1.msra.mxu0 %v1517
        %2209 = vmatprep.subr.mxu0 0.0
        %2210 = vmatpush1.msra.mxu0 %v1518
        %2211 = vmatprep.subr.mxu0 0.0
        %2212 = vmatpush1.msra.mxu0 %v1519
        %2213 = vmatprep.subr.mxu0 0.0
        %2214 = vmatpush1.msra.mxu0 %v1520
        %2215 = vmatprep.subr.mxu0 0.0
        %2216 = vmatpush1.msra.mxu0 %v1521
        %2217 = vmatprep.subr.mxu0 0.0
        %2218 = vmatpush1.msra.mxu0 %v1522
        %2219 = vmatprep.subr.mxu0 0.0
        %2220 = vmatpush1.msra.mxu0 %v1523
        %2221 = vmatprep.subr.mxu0 0.0
        %2222 = vmatpush1.msra.mxu0 %v1524
        %2223 = vmatprep.subr.mxu0 0.0
        %2224 = vmatpush1.msra.mxu0 %v1525
        %2225 = vmatprep.subr.mxu0 0.0
        %2226 = vmatpush1.msra.mxu0 %v1526
        %2227 = vmatprep.subr.mxu0 0.0
        %2228 = vmatpush1.msra.mxu0 %v1527
        %2229 = vmatprep.subr.mxu0 0.0
        %2230 = vmatpush1.msra.mxu0 %v1528
        %2231 = vmatprep.subr.mxu0 0.0
        %2232 = vmatpush1.msra.mxu0 %v1529
        %2233 = vmatprep.subr.mxu0 0.0
        %2234 = vmatpush1.msra.mxu0 %v1530
        %2235 = vmatprep.subr.mxu0 0.0
        %2236 = vmatpush1.msra.mxu0 %v1531
        %2237 = vmatprep.subr.mxu0 0.0
        %2238 = vmatpush1.msra.mxu0 %v1532
        %2239 = vmatprep.subr.mxu0 0.0
        %2240 = vmatpush1.msra.mxu0 %v1533
        %2241 = vmatprep.subr.mxu0 0.0
        %2242 = vmatpush1.msra.mxu0 %v1534
        %2243 = vmatprep.subr.mxu0 0.0
        %2244 = vmatpush1.msra.mxu0 %v1535
        %2245 = vmatprep.mubr.f32.mxu0 %v2028
        %2246 = vmatmul.mubr.f32.gmra.mrb[0].mxu0 %v2024
        %v2247 = vpop.f32.mrb[0].mxu0
        %v2248 = vadd.f32 %v2016, %v2247
        %v2249 = vpop.f32.mrb[0].mxu0
        %2250 = vdwg.mxu0
        %2251 = vmatprep.subr.mxu0 0.0
        %2252 = vmatpush1.msra.mxu0 %v1536
        %2253 = vmatprep.subr.mxu0 0.0
        %2254 = vmatpush1.msra.mxu0 %v1537
        %2255 = vmatprep.subr.mxu0 0.0
        %2256 = vmatpush1.msra.mxu0 %v1538
        %2257 = vmatprep.subr.mxu0 0.0
        %2258 = vmatpush1.msra.mxu0 %v1539
        %2259 = vmatprep.subr.mxu0 0.0
        %2260 = vmatpush1.msra.mxu0 %v1540
        %2261 = vmatprep.subr.mxu0 0.0
        %2262 = vmatpush1.msra.mxu0 %v1541
        %2263 = vmatprep.subr.mxu0 0.0
        %2264 = vmatpush1.msra.mxu0 %v1542
        %2265 = vmatprep.subr.mxu0 0.0
        %2266 = vmatpush1.msra.mxu0 %v1543
        %2267 = vmatprep.subr.mxu0 0.0
        %2268 = vmatpush1.msra.mxu0 %v1544
        %2269 = vmatprep.subr.mxu0 0.0
        %2270 = vmatpush1.msra.mxu0 %v1545
        %2271 = vmatprep.subr.mxu0 0.0
        %2272 = vmatpush1.msra.mxu0 %v1546
        %2273 = vmatprep.subr.mxu0 0.0
        %2274 = vmatpush1.msra.mxu0 %v1547
        %2275 = vmatprep.subr.mxu0 0.0
        %2276 = vmatpush1.msra.mxu0 %v1548
        %2277 = vmatprep.subr.mxu0 0.0
        %2278 = vmatpush1.msra.mxu0 %v1549
        %2279 = vmatprep.subr.mxu0 0.0
        %2280 = vmatpush1.msra.mxu0 %v1550
        %2281 = vmatprep.subr.mxu0 0.0
        %2282 = vmatpush1.msra.mxu0 %v1551
        %2283 = vmatprep.subr.mxu0 0.0
        %2284 = vmatpush1.msra.mxu0 %v1552
        %2285 = vmatprep.subr.mxu0 0.0
        %2286 = vmatpush1.msra.mxu0 %v1553
        %2287 = vmatprep.subr.mxu0 0.0
        %2288 = vmatpush1.msra.mxu0 %v1554
        %2289 = vmatprep.subr.mxu0 0.0
        %2290 = vmatpush1.msra.mxu0 %v1555
        %2291 = vmatprep.subr.mxu0 0.0
        %2292 = vmatpush1.msra.mxu0 %v1556
        %2293 = vmatprep.subr.mxu0 0.0
        %2294 = vmatpush1.msra.mxu0 %v1557
        %2295 = vmatprep.subr.mxu0 0.0
        %2296 = vmatpush1.msra.mxu0 %v1558
        %2297 = vmatprep.subr.mxu0 0.0
        %2298 = vmatpush1.msra.mxu0 %v1559
        %2299 = vmatprep.subr.mxu0 0.0
        %2300 = vmatpush1.msra.mxu0 %v1560
        %2301 = vmatprep.subr.mxu0 0.0
        %2302 = vmatpush1.msra.mxu0 %v1561
        %2303 = vmatprep.subr.mxu0 0.0
        %2304 = vmatpush1.msra.mxu0 %v1562
        %2305 = vmatprep.subr.mxu0 0.0
        %2306 = vmatpush1.msra.mxu0 %v1563
        %2307 = vmatprep.subr.mxu0 0.0
        %2308 = vmatpush1.msra.mxu0 %v1564
        %2309 = vmatprep.subr.mxu0 0.0
        %2310 = vmatpush1.msra.mxu0 %v1565
        %2311 = vmatprep.subr.mxu0 0.0
        %2312 = vmatpush1.msra.mxu0 %v1566
        %2313 = vmatprep.subr.mxu0 0.0
        %2314 = vmatpush1.msra.mxu0 %v1567
        %2315 = vmatprep.mubr.f32.mxu0 %v2036
        %2316 = vmatmul.mubr.f32.gmra.mrb[0].mxu0 %v2032
        %v2317 = vpop.f32.mrb[0].mxu0
        %v2318 = vadd.f32 %v2248, %v2317
        %v2319 = vpop.f32.mrb[0].mxu0
        %2320 = vdwg.mxu0
        %2321 = vmatprep.subr.mxu0 0.0
        %2322 = vmatpush1.msra.mxu0 %v1568
        %2323 = vmatprep.subr.mxu0 0.0
        %2324 = vmatpush1.msra.mxu0 %v1569
        %2325 = vmatprep.subr.mxu0 0.0
        %2326 = vmatpush1.msra.mxu0 %v1570
        %2327 = vmatprep.subr.mxu0 0.0
        %2328 = vmatpush1.msra.mxu0 %v1571
        %2329 = vmatprep.subr.mxu0 0.0
        %2330 = vmatpush1.msra.mxu0 %v1572
        %2331 = vmatprep.subr.mxu0 0.0
        %2332 = vmatpush1.msra.mxu0 %v1573
        %2333 = vmatprep.subr.mxu0 0.0
        %2334 = vmatpush1.msra.mxu0 %v1574
        %2335 = vmatprep.subr.mxu0 0.0
        %2336 = vmatpush1.msra.mxu0 %v1575
        %2337 = vmatprep.subr.mxu0 0.0
        %2338 = vmatpush1.msra.mxu0 %v1576
        %2339 = vmatprep.subr.mxu0 0.0
        %2340 = vmatpush1.msra.mxu0 %v1577
        %2341 = vmatprep.subr.mxu0 0.0
        %2342 = vmatpush1.msra.mxu0 %v1578
        %2343 = vmatprep.subr.mxu0 0.0
        %2344 = vmatpush1.msra.mxu0 %v1579
        %2345 = vmatprep.subr.mxu0 0.0
        %2346 = vmatpush1.msra.mxu0 %v1580
        %2347 = vmatprep.subr.mxu0 0.0
        %2348 = vmatpush1.msra.mxu0 %v1581
        %2349 = vmatprep.subr.mxu0 0.0
        %2350 = vmatpush1.msra.mxu0 %v1582
        %2351 = vmatprep.subr.mxu0 0.0
        %2352 = vmatpush1.msra.mxu0 %v1583
        %2353 = vmatprep.subr.mxu0 0.0
        %2354 = vmatpush1.msra.mxu0 %v1584
        %2355 = vmatprep.subr.mxu0 0.0
        %2356 = vmatpush1.msra.mxu0 %v1585
        %2357 = vmatprep.subr.mxu0 0.0
        %2358 = vmatpush1.msra.mxu0 %v1586
        %2359 = vmatprep.subr.mxu0 0.0
        %2360 = vmatpush1.msra.mxu0 %v1587
        %2361 = vmatprep.subr.mxu0 0.0
        %2362 = vmatpush1.msra.mxu0 %v1588
        %2363 = vmatprep.subr.mxu0 0.0
        %2364 = vmatpush1.msra.mxu0 %v1589
        %2365 = vmatprep.subr.mxu0 0.0
        %2366 = vmatpush1.msra.mxu0 %v1590
        %2367 = vmatprep.subr.mxu0 0.0
        %2368 = vmatpush1.msra.mxu0 %v1591
        %2369 = vmatprep.subr.mxu0 0.0
        %2370 = vmatpush1.msra.mxu0 %v1592
        %2371 = vmatprep.subr.mxu0 0.0
        %2372 = vmatpush1.msra.mxu0 %v1593
        %2373 = vmatprep.subr.mxu0 0.0
        %2374 = vmatpush1.msra.mxu0 %v1594
        %2375 = vmatprep.subr.mxu0 0.0
        %2376 = vmatpush1.msra.mxu0 %v1595
        %2377 = vmatprep.subr.mxu0 0.0
        %2378 = vmatpush1.msra.mxu0 %v1596
        %2379 = vmatprep.subr.mxu0 0.0
        %2380 = vmatpush1.msra.mxu0 %v1597
        %2381 = vmatprep.subr.mxu0 0.0
        %2382 = vmatpush1.msra.mxu0 %v1598
        %2383 = vmatprep.subr.mxu0 0.0
        %2384 = vmatpush1.msra.mxu0 %v1599
        %2385 = vmatprep.mubr.f32.mxu0 %v2044
        %2386 = vmatmul.mubr.f32.gmra.mrb[0].mxu0 %v2040
        %v2387 = vpop.f32.mrb[0].mxu0
        %v2388 = vadd.f32 %v2318, %v2387
        %v2389 = vpop.f32.mrb[0].mxu0
        %2390 = vdwg.mxu0
        %2391 = vmatprep.subr.mxu0 0.0
        %2392 = vmatpush1.msra.mxu0 %v1600
        %2393 = vmatprep.subr.mxu0 0.0
        %2394 = vmatpush1.msra.mxu0 %v1601
        %2395 = vmatprep.subr.mxu0 0.0
        %2396 = vmatpush1.msra.mxu0 %v1602
        %2397 = vmatprep.subr.mxu0 0.0
        %2398 = vmatpush1.msra.mxu0 %v1603
        %2399 = vmatprep.subr.mxu0 0.0
        %2400 = vmatpush1.msra.mxu0 %v1604
        %2401 = vmatprep.subr.mxu0 0.0
        %2402 = vmatpush1.msra.mxu0 %v1605
        %2403 = vmatprep.subr.mxu0 0.0
        %2404 = vmatpush1.msra.mxu0 %v1606
        %2405 = vmatprep.subr.mxu0 0.0
        %2406 = vmatpush1.msra.mxu0 %v1607
        %2407 = vmatprep.subr.mxu0 0.0
        %2408 = vmatpush1.msra.mxu0 %v1608
        %2409 = vmatprep.subr.mxu0 0.0
        %2410 = vmatpush1.msra.mxu0 %v1609
        %2411 = vmatprep.subr.mxu0 0.0
        %2412 = vmatpush1.msra.mxu0 %v1610
        %2413 = vmatprep.subr.mxu0 0.0
        %2414 = vmatpush1.msra.mxu0 %v1611
        %2415 = vmatprep.subr.mxu0 0.0
        %2416 = vmatpush1.msra.mxu0 %v1612
        %2417 = vmatprep.subr.mxu0 0.0
        %2418 = vmatpush1.msra.mxu0 %v1613
        %2419 = vmatprep.subr.mxu0 0.0
        %2420 = vmatpush1.msra.mxu0 %v1614
        %2421 = vmatprep.subr.mxu0 0.0
        %2422 = vmatpush1.msra.mxu0 %v1615
        %2423 = vmatprep.subr.mxu0 0.0
        %2424 = vmatpush1.msra.mxu0 %v1616
        %2425 = vmatprep.subr.mxu0 0.0
        %2426 = vmatpush1.msra.mxu0 %v1617
        %2427 = vmatprep.subr.mxu0 0.0
        %2428 = vmatpush1.msra.mxu0 %v1618
        %2429 = vmatprep.subr.mxu0 0.0
        %2430 = vmatpush1.msra.mxu0 %v1619
        %2431 = vmatprep.subr.mxu0 0.0
        %2432 = vmatpush1.msra.mxu0 %v1620
        %2433 = vmatprep.subr.mxu0 0.0
        %2434 = vmatpush1.msra.mxu0 %v1621
        %2435 = vmatprep.subr.mxu0 0.0
        %2436 = vmatpush1.msra.mxu0 %v1622
        %2437 = vmatprep.subr.mxu0 0.0
        %2438 = vmatpush1.msra.mxu0 %v1623
        %2439 = vmatprep.subr.mxu0 0.0
        %2440 = vmatpush1.msra.mxu0 %v1624
        %2441 = vmatprep.subr.mxu0 0.0
        %2442 = vmatpush1.msra.mxu0 %v1625
        %2443 = vmatprep.subr.mxu0 0.0
        %2444 = vmatpush1.msra.mxu0 %v1626
        %2445 = vmatprep.subr.mxu0 0.0
        %2446 = vmatpush1.msra.mxu0 %v1627
        %2447 = vmatprep.subr.mxu0 0.0
        %2448 = vmatpush1.msra.mxu0 %v1628
        %2449 = vmatprep.subr.mxu0 0.0
        %2450 = vmatpush1.msra.mxu0 %v1629
        %2451 = vmatprep.subr.mxu0 0.0
        %2452 = vmatpush1.msra.mxu0 %v1630
        %2453 = vmatprep.subr.mxu0 0.0
        %2454 = vmatpush1.msra.mxu0 %v1631
        %2455 = vmatprep.mubr.f32.mxu0 %v2052
        %2456 = vmatmul.mubr.f32.gmra.mrb[0].mxu0 %v2048
        %v2457 = vpop.f32.mrb[0].mxu0
        %v2458 = vadd.f32 %v2388, %v2457
        %v2459 = vpop.f32.mrb[0].mxu0
        %2460 = vdwg.mxu0
        %2461 = vmatprep.subr.mxu0 0.0
        %2462 = vmatpush1.msra.mxu0 %v1632
        %2463 = vmatprep.subr.mxu0 0.0
        %2464 = vmatpush1.msra.mxu0 %v1633
        %2465 = vmatprep.subr.mxu0 0.0
        %2466 = vmatpush1.msra.mxu0 %v1634
        %2467 = vmatprep.subr.mxu0 0.0
        %2468 = vmatpush1.msra.mxu0 %v1635
        %2469 = vmatprep.subr.mxu0 0.0
        %2470 = vmatpush1.msra.mxu0 %v1636
        %2471 = vmatprep.subr.mxu0 0.0
        %2472 = vmatpush1.msra.mxu0 %v1637
        %2473 = vmatprep.subr.mxu0 0.0
        %2474 = vmatpush1.msra.mxu0 %v1638
        %2475 = vmatprep.subr.mxu0 0.0
        %2476 = vmatpush1.msra.mxu0 %v1639
        %2477 = vmatprep.subr.mxu0 0.0
        %2478 = vmatpush1.msra.mxu0 %v1640
        %2479 = vmatprep.subr.mxu0 0.0
        %2480 = vmatpush1.msra.mxu0 %v1641
        %2481 = vmatprep.subr.mxu0 0.0
        %2482 = vmatpush1.msra.mxu0 %v1642
        %2483 = vmatprep.subr.mxu0 0.0
        %2484 = vmatpush1.msra.mxu0 %v1643
        %2485 = vmatprep.subr.mxu0 0.0
        %2486 = vmatpush1.msra.mxu0 %v1644
        %2487 = vmatprep.subr.mxu0 0.0
        %2488 = vmatpush1.msra.mxu0 %v1645
        %2489 = vmatprep.subr.mxu0 0.0
        %2490 = vmatpush1.msra.mxu0 %v1646
        %2491 = vmatprep.subr.mxu0 0.0
        %2492 = vmatpush1.msra.mxu0 %v1647
        %2493 = vmatprep.subr.mxu0 0.0
        %2494 = vmatpush1.msra.mxu0 %v1648
        %2495 = vmatprep.subr.mxu0 0.0
        %2496 = vmatpush1.msra.mxu0 %v1649
        %2497 = vmatprep.subr.mxu0 0.0
        %2498 = vmatpush1.msra.mxu0 %v1650
        %2499 = vmatprep.subr.mxu0 0.0
        %2500 = vmatpush1.msra.mxu0 %v1651
        %2501 = vmatprep.subr.mxu0 0.0
        %2502 = vmatpush1.msra.mxu0 %v1652
        %2503 = vmatprep.subr.mxu0 0.0
        %2504 = vmatpush1.msra.mxu0 %v1653
        %2505 = vmatprep.subr.mxu0 0.0
        %2506 = vmatpush1.msra.mxu0 %v1654
        %2507 = vmatprep.subr.mxu0 0.0
        %2508 = vmatpush1.msra.mxu0 %v1655
        %2509 = vmatprep.subr.mxu0 0.0
        %2510 = vmatpush1.msra.mxu0 %v1656
        %2511 = vmatprep.subr.mxu0 0.0
        %2512 = vmatpush1.msra.mxu0 %v1657
        %2513 = vmatprep.subr.mxu0 0.0
        %2514 = vmatpush1.msra.mxu0 %v1658
        %2515 = vmatprep.subr.mxu0 0.0
        %2516 = vmatpush1.msra.mxu0 %v1659
        %2517 = vmatprep.subr.mxu0 0.0
        %2518 = vmatpush1.msra.mxu0 %v1660
        %2519 = vmatprep.subr.mxu0 0.0
        %2520 = vmatpush1.msra.mxu0 %v1661
        %2521 = vmatprep.subr.mxu0 0.0
        %2522 = vmatpush1.msra.mxu0 %v1662
        %2523 = vmatprep.subr.mxu0 0.0
        %2524 = vmatpush1.msra.mxu0 %v1663
        %2525 = vmatprep.mubr.f32.mxu0 %v2060
        %2526 = vmatmul.mubr.f32.gmra.mrb[0].mxu0 %v2056
        %v2527 = vpop.f32.mrb[0].mxu0
        %v2528 = vadd.f32 %v2458, %v2527
        %v2529 = vpop.f32.mrb[0].mxu0
        %2530 = vdwg.mxu0
        %2531 = vmatprep.subr.mxu0 0.0
        %2532 = vmatpush1.msra.mxu0 %v1664
        %2533 = vmatprep.subr.mxu0 0.0
        %2534 = vmatpush1.msra.mxu0 %v1665
        %2535 = vmatprep.subr.mxu0 0.0
        %2536 = vmatpush1.msra.mxu0 %v1666
        %2537 = vmatprep.subr.mxu0 0.0
        %2538 = vmatpush1.msra.mxu0 %v1667
        %2539 = vmatprep.subr.mxu0 0.0
        %2540 = vmatpush1.msra.mxu0 %v1668
        %2541 = vmatprep.subr.mxu0 0.0
        %2542 = vmatpush1.msra.mxu0 %v1669
        %2543 = vmatprep.subr.mxu0 0.0
        %2544 = vmatpush1.msra.mxu0 %v1670
        %2545 = vmatprep.subr.mxu0 0.0
        %2546 = vmatpush1.msra.mxu0 %v1671
        %2547 = vmatprep.subr.mxu0 0.0
        %2548 = vmatpush1.msra.mxu0 %v1672
        %2549 = vmatprep.subr.mxu0 0.0
        %2550 = vmatpush1.msra.mxu0 %v1673
        %2551 = vmatprep.subr.mxu0 0.0
        %2552 = vmatpush1.msra.mxu0 %v1674
        %2553 = vmatprep.subr.mxu0 0.0
        %2554 = vmatpush1.msra.mxu0 %v1675
        %2555 = vmatprep.subr.mxu0 0.0
        %2556 = vmatpush1.msra.mxu0 %v1676
        %2557 = vmatprep.subr.mxu0 0.0
        %2558 = vmatpush1.msra.mxu0 %v1677
        %2559 = vmatprep.subr.mxu0 0.0
        %2560 = vmatpush1.msra.mxu0 %v1678
        %2561 = vmatprep.subr.mxu0 0.0
        %2562 = vmatpush1.msra.mxu0 %v1679
        %2563 = vmatprep.subr.mxu0 0.0
        %2564 = vmatpush1.msra.mxu0 %v1680
        %2565 = vmatprep.subr.mxu0 0.0
        %2566 = vmatpush1.msra.mxu0 %v1681
        %2567 = vmatprep.subr.mxu0 0.0
        %2568 = vmatpush1.msra.mxu0 %v1682
        %2569 = vmatprep.subr.mxu0 0.0
        %2570 = vmatpush1.msra.mxu0 %v1683
        %2571 = vmatprep.subr.mxu0 0.0
        %2572 = vmatpush1.msra.mxu0 %v1684
        %2573 = vmatprep.subr.mxu0 0.0
        %2574 = vmatpush1.msra.mxu0 %v1685
        %2575 = vmatprep.subr.mxu0 0.0
        %2576 = vmatpush1.msra.mxu0 %v1686
        %2577 = vmatprep.subr.mxu0 0.0
        %2578 = vmatpush1.msra.mxu0 %v1687
        %2579 = vmatprep.subr.mxu0 0.0
        %2580 = vmatpush1.msra.mxu0 %v1688
        %2581 = vmatprep.subr.mxu0 0.0
        %2582 = vmatpush1.msra.mxu0 %v1689
        %2583 = vmatprep.subr.mxu0 0.0
        %2584 = vmatpush1.msra.mxu0 %v1690
        %2585 = vmatprep.subr.mxu0 0.0
        %2586 = vmatpush1.msra.mxu0 %v1691
        %2587 = vmatprep.subr.mxu0 0.0
        %2588 = vmatpush1.msra.mxu0 %v1692
        %2589 = vmatprep.subr.mxu0 0.0
        %2590 = vmatpush1.msra.mxu0 %v1693
        %2591 = vmatprep.subr.mxu0 0.0
        %2592 = vmatpush1.msra.mxu0 %v1694
        %2593 = vmatprep.subr.mxu0 0.0
        %2594 = vmatpush1.msra.mxu0 %v1695
        %2595 = vmatprep.mubr.f32.mxu0 %v2068
        %2596 = vmatmul.mubr.f32.gmra.mrb[0].mxu0 %v2064
        %v2597 = vpop.f32.mrb[0].mxu0
        %v2598 = vadd.f32 %v2528, %v2597
        %v2599 = vpop.f32.mrb[0].mxu0
        %2600 = vdwg.mxu0
        %2601 = vmatprep.subr.mxu0 0.0
        %2602 = vmatpush1.msra.mxu0 %v1696
        %2603 = vmatprep.subr.mxu0 0.0
        %2604 = vmatpush1.msra.mxu0 %v1697
        %2605 = vmatprep.subr.mxu0 0.0
        %2606 = vmatpush1.msra.mxu0 %v1698
        %2607 = vmatprep.subr.mxu0 0.0
        %2608 = vmatpush1.msra.mxu0 %v1699
        %2609 = vmatprep.subr.mxu0 0.0
        %2610 = vmatpush1.msra.mxu0 %v1700
        %2611 = vmatprep.subr.mxu0 0.0
        %2612 = vmatpush1.msra.mxu0 %v1701
        %2613 = vmatprep.subr.mxu0 0.0
        %2614 = vmatpush1.msra.mxu0 %v1702
        %2615 = vmatprep.subr.mxu0 0.0
        %2616 = vmatpush1.msra.mxu0 %v1703
        %2617 = vmatprep.subr.mxu0 0.0
        %2618 = vmatpush1.msra.mxu0 %v1704
        %2619 = vmatprep.subr.mxu0 0.0
        %2620 = vmatpush1.msra.mxu0 %v1705
        %2621 = vmatprep.subr.mxu0 0.0
        %2622 = vmatpush1.msra.mxu0 %v1706
        %2623 = vmatprep.subr.mxu0 0.0
        %2624 = vmatpush1.msra.mxu0 %v1707
        %2625 = vmatprep.subr.mxu0 0.0
        %2626 = vmatpush1.msra.mxu0 %v1708
        %2627 = vmatprep.subr.mxu0 0.0
        %2628 = vmatpush1.msra.mxu0 %v1709
        %2629 = vmatprep.subr.mxu0 0.0
        %2630 = vmatpush1.msra.mxu0 %v1710
        %2631 = vmatprep.subr.mxu0 0.0
        %2632 = vmatpush1.msra.mxu0 %v1711
        %2633 = vmatprep.subr.mxu0 0.0
        %2634 = vmatpush1.msra.mxu0 %v1712
        %2635 = vmatprep.subr.mxu0 0.0
        %2636 = vmatpush1.msra.mxu0 %v1713
        %2637 = vmatprep.subr.mxu0 0.0
        %2638 = vmatpush1.msra.mxu0 %v1714
        %2639 = vmatprep.subr.mxu0 0.0
        %2640 = vmatpush1.msra.mxu0 %v1715
        %2641 = vmatprep.subr.mxu0 0.0
        %2642 = vmatpush1.msra.mxu0 %v1716
        %2643 = vmatprep.subr.mxu0 0.0
        %2644 = vmatpush1.msra.mxu0 %v1717
        %2645 = vmatprep.subr.mxu0 0.0
        %2646 = vmatpush1.msra.mxu0 %v1718
        %2647 = vmatprep.subr.mxu0 0.0
        %2648 = vmatpush1.msra.mxu0 %v1719
        %2649 = vmatprep.subr.mxu0 0.0
        %2650 = vmatpush1.msra.mxu0 %v1720
        %2651 = vmatprep.subr.mxu0 0.0
        %2652 = vmatpush1.msra.mxu0 %v1721
        %2653 = vmatprep.subr.mxu0 0.0
        %2654 = vmatpush1.msra.mxu0 %v1722
        %2655 = vmatprep.subr.mxu0 0.0
        %2656 = vmatpush1.msra.mxu0 %v1723
        %2657 = vmatprep.subr.mxu0 0.0
        %2658 = vmatpush1.msra.mxu0 %v1724
        %2659 = vmatprep.subr.mxu0 0.0
        %2660 = vmatpush1.msra.mxu0 %v1725
        %2661 = vmatprep.subr.mxu0 0.0
        %2662 = vmatpush1.msra.mxu0 %v1726
        %2663 = vmatprep.subr.mxu0 0.0
        %2664 = vmatpush1.msra.mxu0 %v1727
        %2665 = vmatprep.mubr.f32.mxu0 %v2076
        %2666 = vmatmul.mubr.f32.gmra.mrb[0].mxu0 %v2072
        %v2667 = vpop.f32.mrb[0].mxu0
        %v2668 = vadd.f32 %v2598, %v2667
        %v2669 = vpop.f32.mrb[0].mxu0
        %2670 = vdwg.mxu0
        %2671 = vmatprep.subr.mxu0 0.0
        %2672 = vmatpush1.msra.mxu0 %v1728
        %2673 = vmatprep.subr.mxu0 0.0
        %2674 = vmatpush1.msra.mxu0 %v1729
        %2675 = vmatprep.subr.mxu0 0.0
        %2676 = vmatpush1.msra.mxu0 %v1730
        %2677 = vmatprep.subr.mxu0 0.0
        %2678 = vmatpush1.msra.mxu0 %v1731
        %2679 = vmatprep.subr.mxu0 0.0
        %2680 = vmatpush1.msra.mxu0 %v1732
        %2681 = vmatprep.subr.mxu0 0.0
        %2682 = vmatpush1.msra.mxu0 %v1733
        %2683 = vmatprep.subr.mxu0 0.0
        %2684 = vmatpush1.msra.mxu0 %v1734
        %2685 = vmatprep.subr.mxu0 0.0
        %2686 = vmatpush1.msra.mxu0 %v1735
        %2687 = vmatprep.subr.mxu0 0.0
        %2688 = vmatpush1.msra.mxu0 %v1736
        %2689 = vmatprep.subr.mxu0 0.0
        %2690 = vmatpush1.msra.mxu0 %v1737
        %2691 = vmatprep.subr.mxu0 0.0
        %2692 = vmatpush1.msra.mxu0 %v1738
        %2693 = vmatprep.subr.mxu0 0.0
        %2694 = vmatpush1.msra.mxu0 %v1739
        %2695 = vmatprep.subr.mxu0 0.0
        %2696 = vmatpush1.msra.mxu0 %v1740
        %2697 = vmatprep.subr.mxu0 0.0
        %2698 = vmatpush1.msra.mxu0 %v1741
        %2699 = vmatprep.subr.mxu0 0.0
        %2700 = vmatpush1.msra.mxu0 %v1742
        %2701 = vmatprep.subr.mxu0 0.0
        %2702 = vmatpush1.msra.mxu0 %v1743
        %2703 = vmatprep.subr.mxu0 0.0
        %2704 = vmatpush1.msra.mxu0 %v1744
        %2705 = vmatprep.subr.mxu0 0.0
        %2706 = vmatpush1.msra.mxu0 %v1745
        %2707 = vmatprep.subr.mxu0 0.0
        %2708 = vmatpush1.msra.mxu0 %v1746
        %2709 = vmatprep.subr.mxu0 0.0
        %2710 = vmatpush1.msra.mxu0 %v1747
        %2711 = vmatprep.subr.mxu0 0.0
        %2712 = vmatpush1.msra.mxu0 %v1748
        %2713 = vmatprep.subr.mxu0 0.0
        %2714 = vmatpush1.msra.mxu0 %v1749
        %2715 = vmatprep.subr.mxu0 0.0
        %2716 = vmatpush1.msra.mxu0 %v1750
        %2717 = vmatprep.subr.mxu0 0.0
        %2718 = vmatpush1.msra.mxu0 %v1751
        %2719 = vmatprep.subr.mxu0 0.0
        %2720 = vmatpush1.msra.mxu0 %v1752
        %2721 = vmatprep.subr.mxu0 0.0
        %2722 = vmatpush1.msra.mxu0 %v1753
        %2723 = vmatprep.subr.mxu0 0.0
        %2724 = vmatpush1.msra.mxu0 %v1754
        %2725 = vmatprep.subr.mxu0 0.0
        %2726 = vmatpush1.msra.mxu0 %v1755
        %2727 = vmatprep.subr.mxu0 0.0
        %2728 = vmatpush1.msra.mxu0 %v1756
        %2729 = vmatprep.subr.mxu0 0.0
        %2730 = vmatpush1.msra.mxu0 %v1757
        %2731 = vmatprep.subr.mxu0 0.0
        %2732 = vmatpush1.msra.mxu0 %v1758
        %2733 = vmatprep.subr.mxu0 0.0
        %2734 = vmatpush1.msra.mxu0 %v1759
        %2735 = vmatprep.mubr.f32.mxu0 %v2084
        %2736 = vmatmul.mubr.f32.gmra.mrb[0].mxu0 %v2080
        %v2737 = vpop.f32.mrb[0].mxu0
        %v2738 = vadd.f32 %v2668, %v2737
        %v2739 = vpop.f32.mrb[0].mxu0
        %2740 = vdwg.mxu0
        %2741 = vmatprep.subr.mxu0 0.0
        %2742 = vmatpush1.msra.mxu0 %v1760
        %2743 = vmatprep.subr.mxu0 0.0
        %2744 = vmatpush1.msra.mxu0 %v1761
        %2745 = vmatprep.subr.mxu0 0.0
        %2746 = vmatpush1.msra.mxu0 %v1762
        %2747 = vmatprep.subr.mxu0 0.0
        %2748 = vmatpush1.msra.mxu0 %v1763
        %2749 = vmatprep.subr.mxu0 0.0
        %2750 = vmatpush1.msra.mxu0 %v1764
        %2751 = vmatprep.subr.mxu0 0.0
        %2752 = vmatpush1.msra.mxu0 %v1765
        %2753 = vmatprep.subr.mxu0 0.0
        %2754 = vmatpush1.msra.mxu0 %v1766
        %2755 = vmatprep.subr.mxu0 0.0
        %2756 = vmatpush1.msra.mxu0 %v1767
        %2757 = vmatprep.subr.mxu0 0.0
        %2758 = vmatpush1.msra.mxu0 %v1768
        %2759 = vmatprep.subr.mxu0 0.0
        %2760 = vmatpush1.msra.mxu0 %v1769
        %2761 = vmatprep.subr.mxu0 0.0
        %2762 = vmatpush1.msra.mxu0 %v1770
        %2763 = vmatprep.subr.mxu0 0.0
        %2764 = vmatpush1.msra.mxu0 %v1771
        %2765 = vmatprep.subr.mxu0 0.0
        %2766 = vmatpush1.msra.mxu0 %v1772
        %2767 = vmatprep.subr.mxu0 0.0
        %2768 = vmatpush1.msra.mxu0 %v1773
        %2769 = vmatprep.subr.mxu0 0.0
        %2770 = vmatpush1.msra.mxu0 %v1774
        %2771 = vmatprep.subr.mxu0 0.0
        %2772 = vmatpush1.msra.mxu0 %v1775
        %2773 = vmatprep.subr.mxu0 0.0
        %2774 = vmatpush1.msra.mxu0 %v1776
        %2775 = vmatprep.subr.mxu0 0.0
        %2776 = vmatpush1.msra.mxu0 %v1777
        %2777 = vmatprep.subr.mxu0 0.0
        %2778 = vmatpush1.msra.mxu0 %v1778
        %2779 = vmatprep.subr.mxu0 0.0
        %2780 = vmatpush1.msra.mxu0 %v1779
        %2781 = vmatprep.subr.mxu0 0.0
        %2782 = vmatpush1.msra.mxu0 %v1780
        %2783 = vmatprep.subr.mxu0 0.0
        %2784 = vmatpush1.msra.mxu0 %v1781
        %2785 = vmatprep.subr.mxu0 0.0
        %2786 = vmatpush1.msra.mxu0 %v1782
        %2787 = vmatprep.subr.mxu0 0.0
        %2788 = vmatpush1.msra.mxu0 %v1783
        %2789 = vmatprep.subr.mxu0 0.0
        %2790 = vmatpush1.msra.mxu0 %v1784
        %2791 = vmatprep.subr.mxu0 0.0
        %2792 = vmatpush1.msra.mxu0 %v1785
        %2793 = vmatprep.subr.mxu0 0.0
        %2794 = vmatpush1.msra.mxu0 %v1786
        %2795 = vmatprep.subr.mxu0 0.0
        %2796 = vmatpush1.msra.mxu0 %v1787
        %2797 = vmatprep.subr.mxu0 0.0
        %2798 = vmatpush1.msra.mxu0 %v1788
        %2799 = vmatprep.subr.mxu0 0.0
        %2800 = vmatpush1.msra.mxu0 %v1789
        %2801 = vmatprep.subr.mxu0 0.0
        %2802 = vmatpush1.msra.mxu0 %v1790
        %2803 = vmatprep.subr.mxu0 0.0
        %2804 = vmatpush1.msra.mxu0 %v1791
        %2805 = vmatprep.mubr.f32.mxu0 %v2092
        %2806 = vmatmul.mubr.f32.gmra.mrb[0].mxu0 %v2088
        %v2807 = vpop.f32.mrb[0].mxu0
        %v2808 = vadd.f32 %v2738, %v2807
        %v2809 = vpop.f32.mrb[0].mxu0
        %2810 = vdwg.mxu0
        %2811 = vmatprep.subr.mxu0 0.0
        %2812 = vmatpush1.msra.mxu0 %v1792
        %2813 = vmatprep.subr.mxu0 0.0
        %2814 = vmatpush1.msra.mxu0 %v1793
        %2815 = vmatprep.subr.mxu0 0.0
        %2816 = vmatpush1.msra.mxu0 %v1794
        %2817 = vmatprep.subr.mxu0 0.0
        %2818 = vmatpush1.msra.mxu0 %v1795
        %2819 = vmatprep.subr.mxu0 0.0
        %2820 = vmatpush1.msra.mxu0 %v1796
        %2821 = vmatprep.subr.mxu0 0.0
        %2822 = vmatpush1.msra.mxu0 %v1797
        %2823 = vmatprep.subr.mxu0 0.0
        %2824 = vmatpush1.msra.mxu0 %v1798
        %2825 = vmatprep.subr.mxu0 0.0
        %2826 = vmatpush1.msra.mxu0 %v1799
        %2827 = vmatprep.subr.mxu0 0.0
        %2828 = vmatpush1.msra.mxu0 %v1800
        %2829 = vmatprep.subr.mxu0 0.0
        %2830 = vmatpush1.msra.mxu0 %v1801
        %2831 = vmatprep.subr.mxu0 0.0
        %2832 = vmatpush1.msra.mxu0 %v1802
        %2833 = vmatprep.subr.mxu0 0.0
        %2834 = vmatpush1.msra.mxu0 %v1803
        %2835 = vmatprep.subr.mxu0 0.0
        %2836 = vmatpush1.msra.mxu0 %v1804
        %2837 = vmatprep.subr.mxu0 0.0
        %2838 = vmatpush1.msra.mxu0 %v1805
        %2839 = vmatprep.subr.mxu0 0.0
        %2840 = vmatpush1.msra.mxu0 %v1806
        %2841 = vmatprep.subr.mxu0 0.0
        %2842 = vmatpush1.msra.mxu0 %v1807
        %2843 = vmatprep.subr.mxu0 0.0
        %2844 = vmatpush1.msra.mxu0 %v1808
        %2845 = vmatprep.subr.mxu0 0.0
        %2846 = vmatpush1.msra.mxu0 %v1809
        %2847 = vmatprep.subr.mxu0 0.0
        %2848 = vmatpush1.msra.mxu0 %v1810
        %2849 = vmatprep.subr.mxu0 0.0
        %2850 = vmatpush1.msra.mxu0 %v1811
        %2851 = vmatprep.subr.mxu0 0.0
        %2852 = vmatpush1.msra.mxu0 %v1812
        %2853 = vmatprep.subr.mxu0 0.0
        %2854 = vmatpush1.msra.mxu0 %v1813
        %2855 = vmatprep.subr.mxu0 0.0
        %2856 = vmatpush1.msra.mxu0 %v1814
        %2857 = vmatprep.subr.mxu0 0.0
        %2858 = vmatpush1.msra.mxu0 %v1815
        %2859 = vmatprep.subr.mxu0 0.0
        %2860 = vmatpush1.msra.mxu0 %v1816
        %2861 = vmatprep.subr.mxu0 0.0
        %2862 = vmatpush1.msra.mxu0 %v1817
        %2863 = vmatprep.subr.mxu0 0.0
        %2864 = vmatpush1.msra.mxu0 %v1818
        %2865 = vmatprep.subr.mxu0 0.0
        %2866 = vmatpush1.msra.mxu0 %v1819
        %2867 = vmatprep.subr.mxu0 0.0
        %2868 = vmatpush1.msra.mxu0 %v1820
        %2869 = vmatprep.subr.mxu0 0.0
        %2870 = vmatpush1.msra.mxu0 %v1821
        %2871 = vmatprep.subr.mxu0 0.0
        %2872 = vmatpush1.msra.mxu0 %v1822
        %2873 = vmatprep.subr.mxu0 0.0
        %2874 = vmatpush1.msra.mxu0 %v1823
        %2875 = vmatprep.mubr.f32.mxu0 %v2100
        %2876 = vmatmul.mubr.f32.gmra.mrb[0].mxu0 %v2096
        %v2877 = vpop.f32.mrb[0].mxu0
        %v2878 = vadd.f32 %v2808, %v2877
        %v2879 = vpop.f32.mrb[0].mxu0
        %2880 = vdwg.mxu0
        %2881 = vmatprep.subr.mxu0 0.0
        %2882 = vmatpush1.msra.mxu0 %v1824
        %2883 = vmatprep.subr.mxu0 0.0
        %2884 = vmatpush1.msra.mxu0 %v1825
        %2885 = vmatprep.subr.mxu0 0.0
        %2886 = vmatpush1.msra.mxu0 %v1826
        %2887 = vmatprep.subr.mxu0 0.0
        %2888 = vmatpush1.msra.mxu0 %v1827
        %2889 = vmatprep.subr.mxu0 0.0
        %2890 = vmatpush1.msra.mxu0 %v1828
        %2891 = vmatprep.subr.mxu0 0.0
        %2892 = vmatpush1.msra.mxu0 %v1829
        %2893 = vmatprep.subr.mxu0 0.0
        %2894 = vmatpush1.msra.mxu0 %v1830
        %2895 = vmatprep.subr.mxu0 0.0
        %2896 = vmatpush1.msra.mxu0 %v1831
        %2897 = vmatprep.subr.mxu0 0.0
        %2898 = vmatpush1.msra.mxu0 %v1832
        %2899 = vmatprep.subr.mxu0 0.0
        %2900 = vmatpush1.msra.mxu0 %v1833
        %2901 = vmatprep.subr.mxu0 0.0
        %2902 = vmatpush1.msra.mxu0 %v1834
        %2903 = vmatprep.subr.mxu0 0.0
        %2904 = vmatpush1.msra.mxu0 %v1835
        %2905 = vmatprep.subr.mxu0 0.0
        %2906 = vmatpush1.msra.mxu0 %v1836
        %2907 = vmatprep.subr.mxu0 0.0
        %2908 = vmatpush1.msra.mxu0 %v1837
        %2909 = vmatprep.subr.mxu0 0.0
        %2910 = vmatpush1.msra.mxu0 %v1838
        %2911 = vmatprep.subr.mxu0 0.0
        %2912 = vmatpush1.msra.mxu0 %v1839
        %2913 = vmatprep.subr.mxu0 0.0
        %2914 = vmatpush1.msra.mxu0 %v1840
        %2915 = vmatprep.subr.mxu0 0.0
        %2916 = vmatpush1.msra.mxu0 %v1841
        %2917 = vmatprep.subr.mxu0 0.0
        %2918 = vmatpush1.msra.mxu0 %v1842
        %2919 = vmatprep.subr.mxu0 0.0
        %2920 = vmatpush1.msra.mxu0 %v1843
        %2921 = vmatprep.subr.mxu0 0.0
        %2922 = vmatpush1.msra.mxu0 %v1844
        %2923 = vmatprep.subr.mxu0 0.0
        %2924 = vmatpush1.msra.mxu0 %v1845
        %2925 = vmatprep.subr.mxu0 0.0
        %2926 = vmatpush1.msra.mxu0 %v1846
        %2927 = vmatprep.subr.mxu0 0.0
        %2928 = vmatpush1.msra.mxu0 %v1847
        %2929 = vmatprep.subr.mxu0 0.0
        %2930 = vmatpush1.msra.mxu0 %v1848
        %2931 = vmatprep.subr.mxu0 0.0
        %2932 = vmatpush1.msra.mxu0 %v1849
        %2933 = vmatprep.subr.mxu0 0.0
        %2934 = vmatpush1.msra.mxu0 %v1850
        %2935 = vmatprep.subr.mxu0 0.0
        %2936 = vmatpush1.msra.mxu0 %v1851
        %2937 = vmatprep.subr.mxu0 0.0
        %2938 = vmatpush1.msra.mxu0 %v1852
        %2939 = vmatprep.subr.mxu0 0.0
        %2940 = vmatpush1.msra.mxu0 %v1853
        %2941 = vmatprep.subr.mxu0 0.0
        %2942 = vmatpush1.msra.mxu0 %v1854
        %2943 = vmatprep.subr.mxu0 0.0
        %2944 = vmatpush1.msra.mxu0 %v1855
        %2945 = vmatprep.mubr.f32.mxu0 %v2108
        %2946 = vmatmul.mubr.f32.gmra.mrb[0].mxu0 %v2104
        %v2947 = vpop.f32.mrb[0].mxu0
        %v2948 = vadd.f32 %v2878, %v2947
        %v2949 = vpop.f32.mrb[0].mxu0
        %2950 = vdwg.mxu0
        %2951 = vmatprep.subr.mxu0 0.0
        %2952 = vmatpush1.msra.mxu0 %v1856
        %2953 = vmatprep.subr.mxu0 0.0
        %2954 = vmatpush1.msra.mxu0 %v1857
        %2955 = vmatprep.subr.mxu0 0.0
        %2956 = vmatpush1.msra.mxu0 %v1858
        %2957 = vmatprep.subr.mxu0 0.0
        %2958 = vmatpush1.msra.mxu0 %v1859
        %2959 = vmatprep.subr.mxu0 0.0
        %2960 = vmatpush1.msra.mxu0 %v1860
        %2961 = vmatprep.subr.mxu0 0.0
        %2962 = vmatpush1.msra.mxu0 %v1861
        %2963 = vmatprep.subr.mxu0 0.0
        %2964 = vmatpush1.msra.mxu0 %v1862
        %2965 = vmatprep.subr.mxu0 0.0
        %2966 = vmatpush1.msra.mxu0 %v1863
        %2967 = vmatprep.subr.mxu0 0.0
        %2968 = vmatpush1.msra.mxu0 %v1864
        %2969 = vmatprep.subr.mxu0 0.0
        %2970 = vmatpush1.msra.mxu0 %v1865
        %2971 = vmatprep.subr.mxu0 0.0
        %2972 = vmatpush1.msra.mxu0 %v1866
        %2973 = vmatprep.subr.mxu0 0.0
        %2974 = vmatpush1.msra.mxu0 %v1867
        %2975 = vmatprep.subr.mxu0 0.0
        %2976 = vmatpush1.msra.mxu0 %v1868
        %2977 = vmatprep.subr.mxu0 0.0
        %2978 = vmatpush1.msra.mxu0 %v1869
        %2979 = vmatprep.subr.mxu0 0.0
        %2980 = vmatpush1.msra.mxu0 %v1870
        %2981 = vmatprep.subr.mxu0 0.0
        %2982 = vmatpush1.msra.mxu0 %v1871
        %2983 = vmatprep.subr.mxu0 0.0
        %2984 = vmatpush1.msra.mxu0 %v1872
        %2985 = vmatprep.subr.mxu0 0.0
        %2986 = vmatpush1.msra.mxu0 %v1873
        %2987 = vmatprep.subr.mxu0 0.0
        %2988 = vmatpush1.msra.mxu0 %v1874
        %2989 = vmatprep.subr.mxu0 0.0
        %2990 = vmatpush1.msra.mxu0 %v1875
        %2991 = vmatprep.subr.mxu0 0.0
        %2992 = vmatpush1.msra.mxu0 %v1876
        %2993 = vmatprep.subr.mxu0 0.0
        %2994 = vmatpush1.msra.mxu0 %v1877
        %2995 = vmatprep.subr.mxu0 0.0
        %2996 = vmatpush1.msra.mxu0 %v1878
        %2997 = vmatprep.subr.mxu0 0.0
        %2998 = vmatpush1.msra.mxu0 %v1879
        %2999 = vmatprep.subr.mxu0 0.0
        %3000 = vmatpush1.msra.mxu0 %v1880
        %3001 = vmatprep.subr.mxu0 0.0
        %3002 = vmatpush1.msra.mxu0 %v1881
        %3003 = vmatprep.subr.mxu0 0.0
        %3004 = vmatpush1.msra.mxu0 %v1882
        %3005 = vmatprep.subr.mxu0 0.0
        %3006 = vmatpush1.msra.mxu0 %v1883
        %3007 = vmatprep.subr.mxu0 0.0
        %3008 = vmatpush1.msra.mxu0 %v1884
        %3009 = vmatprep.subr.mxu0 0.0
        %3010 = vmatpush1.msra.mxu0 %v1885
        %3011 = vmatprep.subr.mxu0 0.0
        %3012 = vmatpush1.msra.mxu0 %v1886
        %3013 = vmatprep.subr.mxu0 0.0
        %3014 = vmatpush1.msra.mxu0 %v1887
        %3015 = vmatprep.mubr.f32.mxu0 %v2116
        %3016 = vmatmul.mubr.f32.gmra.mrb[0].mxu0 %v2112
        %v3017 = vpop.f32.mrb[0].mxu0
        %v3018 = vadd.f32 %v2948, %v3017
        %v3019 = vpop.f32.mrb[0].mxu0
        %3020 = vdwg.mxu0
        %3021 = vmatprep.subr.mxu0 0.0
        %3022 = vmatpush1.msra.mxu0 %v1888
        %3023 = vmatprep.subr.mxu0 0.0
        %3024 = vmatpush1.msra.mxu0 %v1889
        %3025 = vmatprep.subr.mxu0 0.0
        %3026 = vmatpush1.msra.mxu0 %v1890
        %3027 = vmatprep.subr.mxu0 0.0
        %3028 = vmatpush1.msra.mxu0 %v1891
        %3029 = vmatprep.subr.mxu0 0.0
        %3030 = vmatpush1.msra.mxu0 %v1892
        %3031 = vmatprep.subr.mxu0 0.0
        %3032 = vmatpush1.msra.mxu0 %v1893
        %3033 = vmatprep.subr.mxu0 0.0
        %3034 = vmatpush1.msra.mxu0 %v1894
        %3035 = vmatprep.subr.mxu0 0.0
        %3036 = vmatpush1.msra.mxu0 %v1895
        %3037 = vmatprep.subr.mxu0 0.0
        %3038 = vmatpush1.msra.mxu0 %v1896
        %3039 = vmatprep.subr.mxu0 0.0
        %3040 = vmatpush1.msra.mxu0 %v1897
        %3041 = vmatprep.subr.mxu0 0.0
        %3042 = vmatpush1.msra.mxu0 %v1898
        %3043 = vmatprep.subr.mxu0 0.0
        %3044 = vmatpush1.msra.mxu0 %v1899
        %3045 = vmatprep.subr.mxu0 0.0
        %3046 = vmatpush1.msra.mxu0 %v1900
        %3047 = vmatprep.subr.mxu0 0.0
        %3048 = vmatpush1.msra.mxu0 %v1901
        %3049 = vmatprep.subr.mxu0 0.0
        %3050 = vmatpush1.msra.mxu0 %v1902
        %3051 = vmatprep.subr.mxu0 0.0
        %3052 = vmatpush1.msra.mxu0 %v1903
        %3053 = vmatprep.subr.mxu0 0.0
        %3054 = vmatpush1.msra.mxu0 %v1904
        %3055 = vmatprep.subr.mxu0 0.0
        %3056 = vmatpush1.msra.mxu0 %v1905
        %3057 = vmatprep.subr.mxu0 0.0
        %3058 = vmatpush1.msra.mxu0 %v1906
        %3059 = vmatprep.subr.mxu0 0.0
        %3060 = vmatpush1.msra.mxu0 %v1907
        %3061 = vmatprep.subr.mxu0 0.0
        %3062 = vmatpush1.msra.mxu0 %v1908
        %3063 = vmatprep.subr.mxu0 0.0
        %3064 = vmatpush1.msra.mxu0 %v1909
        %3065 = vmatprep.subr.mxu0 0.0
        %3066 = vmatpush1.msra.mxu0 %v1910
        %3067 = vmatprep.subr.mxu0 0.0
        %3068 = vmatpush1.msra.mxu0 %v1911
        %3069 = vmatprep.subr.mxu0 0.0
        %3070 = vmatpush1.msra.mxu0 %v1912
        %3071 = vmatprep.subr.mxu0 0.0
        %3072 = vmatpush1.msra.mxu0 %v1913
        %3073 = vmatprep.subr.mxu0 0.0
        %3074 = vmatpush1.msra.mxu0 %v1914
        %3075 = vmatprep.subr.mxu0 0.0
        %3076 = vmatpush1.msra.mxu0 %v1915
        %3077 = vmatprep.subr.mxu0 0.0
        %3078 = vmatpush1.msra.mxu0 %v1916
        %3079 = vmatprep.subr.mxu0 0.0
        %3080 = vmatpush1.msra.mxu0 %v1917
        %3081 = vmatprep.subr.mxu0 0.0
        %3082 = vmatpush1.msra.mxu0 %v1918
        %3083 = vmatprep.subr.mxu0 0.0
        %3084 = vmatpush1.msra.mxu0 %v1919
        %3085 = vmatprep.mubr.f32.mxu0 %v2124
        %3086 = vmatmul.mubr.f32.gmra.mrb[0].mxu0 %v2120
        %v3087 = vpop.f32.mrb[0].mxu0
        %v3088 = vadd.f32 %v3018, %v3087
        %v3089 = vpop.f32.mrb[0].mxu0
        %3090 = vdwg.mxu0
        %3091 = vmatprep.subr.mxu0 0.0
        %3092 = vmatpush1.msra.mxu0 %v1920
        %3093 = vmatprep.subr.mxu0 0.0
        %3094 = vmatpush1.msra.mxu0 %v1921
        %3095 = vmatprep.subr.mxu0 0.0
        %3096 = vmatpush1.msra.mxu0 %v1922
        %3097 = vmatprep.subr.mxu0 0.0
        %3098 = vmatpush1.msra.mxu0 %v1923
        %3099 = vmatprep.subr.mxu0 0.0
        %3100 = vmatpush1.msra.mxu0 %v1924
        %3101 = vmatprep.subr.mxu0 0.0
        %3102 = vmatpush1.msra.mxu0 %v1925
        %3103 = vmatprep.subr.mxu0 0.0
        %3104 = vmatpush1.msra.mxu0 %v1926
        %3105 = vmatprep.subr.mxu0 0.0
        %3106 = vmatpush1.msra.mxu0 %v1927
        %3107 = vmatprep.subr.mxu0 0.0
        %3108 = vmatpush1.msra.mxu0 %v1928
        %3109 = vmatprep.subr.mxu0 0.0
        %3110 = vmatpush1.msra.mxu0 %v1929
        %3111 = vmatprep.subr.mxu0 0.0
        %3112 = vmatpush1.msra.mxu0 %v1930
        %3113 = vmatprep.subr.mxu0 0.0
        %3114 = vmatpush1.msra.mxu0 %v1931
        %3115 = vmatprep.subr.mxu0 0.0
        %3116 = vmatpush1.msra.mxu0 %v1932
        %3117 = vmatprep.subr.mxu0 0.0
        %3118 = vmatpush1.msra.mxu0 %v1933
        %3119 = vmatprep.subr.mxu0 0.0
        %3120 = vmatpush1.msra.mxu0 %v1934
        %3121 = vmatprep.subr.mxu0 0.0
        %3122 = vmatpush1.msra.mxu0 %v1935
        %3123 = vmatprep.subr.mxu0 0.0
        %3124 = vmatpush1.msra.mxu0 %v1936
        %3125 = vmatprep.subr.mxu0 0.0
        %3126 = vmatpush1.msra.mxu0 %v1937
        %3127 = vmatprep.subr.mxu0 0.0
        %3128 = vmatpush1.msra.mxu0 %v1938
        %3129 = vmatprep.subr.mxu0 0.0
        %3130 = vmatpush1.msra.mxu0 %v1939
        %3131 = vmatprep.subr.mxu0 0.0
        %3132 = vmatpush1.msra.mxu0 %v1940
        %3133 = vmatprep.subr.mxu0 0.0
        %3134 = vmatpush1.msra.mxu0 %v1941
        %3135 = vmatprep.subr.mxu0 0.0
        %3136 = vmatpush1.msra.mxu0 %v1942
        %3137 = vmatprep.subr.mxu0 0.0
        %3138 = vmatpush1.msra.mxu0 %v1943
        %3139 = vmatprep.subr.mxu0 0.0
        %3140 = vmatpush1.msra.mxu0 %v1944
        %3141 = vmatprep.subr.mxu0 0.0
        %3142 = vmatpush1.msra.mxu0 %v1945
        %3143 = vmatprep.subr.mxu0 0.0
        %3144 = vmatpush1.msra.mxu0 %v1946
        %3145 = vmatprep.subr.mxu0 0.0
        %3146 = vmatpush1.msra.mxu0 %v1947
        %3147 = vmatprep.subr.mxu0 0.0
        %3148 = vmatpush1.msra.mxu0 %v1948
        %3149 = vmatprep.subr.mxu0 0.0
        %3150 = vmatpush1.msra.mxu0 %v1949
        %3151 = vmatprep.subr.mxu0 0.0
        %3152 = vmatpush1.msra.mxu0 %v1950
        %3153 = vmatprep.subr.mxu0 0.0
        %3154 = vmatpush1.msra.mxu0 %v1951
        %3155 = vmatprep.mubr.f32.mxu0 %v2132
        %3156 = vmatmul.mubr.f32.gmra.mrb[0].mxu0 %v2128
        %v3157 = vpop.f32.mrb[0].mxu0
        %v3158 = vadd.f32 %v3088, %v3157
        %v3159 = vpop.f32.mrb[0].mxu0
        %3160 = vdwg.mxu0
        %3161 = vmatprep.subr.mxu0 0.0
        %3162 = vmatpush1.msra.mxu0 %v1952
        %3163 = vmatprep.subr.mxu0 0.0
        %3164 = vmatpush1.msra.mxu0 %v1953
        %3165 = vmatprep.subr.mxu0 0.0
        %3166 = vmatpush1.msra.mxu0 %v1954
        %3167 = vmatprep.subr.mxu0 0.0
        %3168 = vmatpush1.msra.mxu0 %v1955
        %3169 = vmatprep.subr.mxu0 0.0
        %3170 = vmatpush1.msra.mxu0 %v1956
        %3171 = vmatprep.subr.mxu0 0.0
        %3172 = vmatpush1.msra.mxu0 %v1957
        %3173 = vmatprep.subr.mxu0 0.0
        %3174 = vmatpush1.msra.mxu0 %v1958
        %3175 = vmatprep.subr.mxu0 0.0
        %3176 = vmatpush1.msra.mxu0 %v1959
        %3177 = vmatprep.subr.mxu0 0.0
        %3178 = vmatpush1.msra.mxu0 %v1960
        %3179 = vmatprep.subr.mxu0 0.0
        %3180 = vmatpush1.msra.mxu0 %v1961
        %3181 = vmatprep.subr.mxu0 0.0
        %3182 = vmatpush1.msra.mxu0 %v1962
        %3183 = vmatprep.subr.mxu0 0.0
        %3184 = vmatpush1.msra.mxu0 %v1963
        %3185 = vmatprep.subr.mxu0 0.0
        %3186 = vmatpush1.msra.mxu0 %v1964
        %3187 = vmatprep.subr.mxu0 0.0
        %3188 = vmatpush1.msra.mxu0 %v1965
        %3189 = vmatprep.subr.mxu0 0.0
        %3190 = vmatpush1.msra.mxu0 %v1966
        %3191 = vmatprep.subr.mxu0 0.0
        %3192 = vmatpush1.msra.mxu0 %v1967
        %3193 = vmatprep.subr.mxu0 0.0
        %3194 = vmatpush1.msra.mxu0 %v1968
        %3195 = vmatprep.subr.mxu0 0.0
        %3196 = vmatpush1.msra.mxu0 %v1969
        %3197 = vmatprep.subr.mxu0 0.0
        %3198 = vmatpush1.msra.mxu0 %v1970
        %3199 = vmatprep.subr.mxu0 0.0
        %3200 = vmatpush1.msra.mxu0 %v1971
        %3201 = vmatprep.subr.mxu0 0.0
        %3202 = vmatpush1.msra.mxu0 %v1972
        %3203 = vmatprep.subr.mxu0 0.0
        %3204 = vmatpush1.msra.mxu0 %v1973
        %3205 = vmatprep.subr.mxu0 0.0
        %3206 = vmatpush1.msra.mxu0 %v1974
        %3207 = vmatprep.subr.mxu0 0.0
        %3208 = vmatpush1.msra.mxu0 %v1975
        %3209 = vmatprep.subr.mxu0 0.0
        %3210 = vmatpush1.msra.mxu0 %v1976
        %3211 = vmatprep.subr.mxu0 0.0
        %3212 = vmatpush1.msra.mxu0 %v1977
        %3213 = vmatprep.subr.mxu0 0.0
        %3214 = vmatpush1.msra.mxu0 %v1978
        %3215 = vmatprep.subr.mxu0 0.0
        %3216 = vmatpush1.msra.mxu0 %v1979
        %3217 = vmatprep.subr.mxu0 0.0
        %3218 = vmatpush1.msra.mxu0 %v1980
        %3219 = vmatprep.subr.mxu0 0.0
        %3220 = vmatpush1.msra.mxu0 %v1981
        %3221 = vmatprep.subr.mxu0 0.0
        %3222 = vmatpush1.msra.mxu0 %v1982
        %3223 = vmatprep.subr.mxu0 0.0
        %3224 = vmatpush1.msra.mxu0 %v1983
        %3225 = vmatprep.mubr.f32.mxu0 %v2140
        %3226 = vmatmul.mubr.f32.gmra.mrb[0].mxu0 %v2136
        %v3227 = vpop.f32.mrb[0].mxu0
        %v3228 = vadd.f32 %v3158, %v3227
        %v3229 = vpop.f32.mrb[0].mxu0
        %3230 = vdwg.mxu0
        %3231 = vmatprep.subr.mxu0 0.0
        %3232 = vmatpush1.msra.mxu0 %v1984
        %3233 = vmatprep.subr.mxu0 0.0
        %3234 = vmatpush1.msra.mxu0 %v1985
        %3235 = vmatprep.subr.mxu0 0.0
        %3236 = vmatpush1.msra.mxu0 %v1986
        %3237 = vmatprep.subr.mxu0 0.0
        %3238 = vmatpush1.msra.mxu0 %v1987
        %3239 = vmatprep.subr.mxu0 0.0
        %3240 = vmatpush1.msra.mxu0 %v1988
        %3241 = vmatprep.subr.mxu0 0.0
        %3242 = vmatpush1.msra.mxu0 %v1989
        %3243 = vmatprep.subr.mxu0 0.0
        %3244 = vmatpush1.msra.mxu0 %v1990
        %3245 = vmatprep.subr.mxu0 0.0
        %3246 = vmatpush1.msra.mxu0 %v1991
        %3247 = vmatprep.subr.mxu0 0.0
        %3248 = vmatpush1.msra.mxu0 %v1992
        %3249 = vmatprep.subr.mxu0 0.0
        %3250 = vmatpush1.msra.mxu0 %v1993
        %3251 = vmatprep.subr.mxu0 0.0
        %3252 = vmatpush1.msra.mxu0 %v1994
        %3253 = vmatprep.subr.mxu0 0.0
        %3254 = vmatpush1.msra.mxu0 %v1995
        %3255 = vmatprep.subr.mxu0 0.0
        %3256 = vmatpush1.msra.mxu0 %v1996
        %3257 = vmatprep.subr.mxu0 0.0
        %3258 = vmatpush1.msra.mxu0 %v1997
        %3259 = vmatprep.subr.mxu0 0.0
        %3260 = vmatpush1.msra.mxu0 %v1998
        %3261 = vmatprep.subr.mxu0 0.0
        %3262 = vmatpush1.msra.mxu0 %v1999
        %3263 = vmatprep.subr.mxu0 0.0
        %3264 = vmatpush1.msra.mxu0 %v2000
        %3265 = vmatprep.subr.mxu0 0.0
        %3266 = vmatpush1.msra.mxu0 %v2001
        %3267 = vmatprep.subr.mxu0 0.0
        %3268 = vmatpush1.msra.mxu0 %v2002
        %3269 = vmatprep.subr.mxu0 0.0
        %3270 = vmatpush1.msra.mxu0 %v2003
        %3271 = vmatprep.subr.mxu0 0.0
        %3272 = vmatpush1.msra.mxu0 %v2004
        %3273 = vmatprep.subr.mxu0 0.0
        %3274 = vmatpush1.msra.mxu0 %v2005
        %3275 = vmatprep.subr.mxu0 0.0
        %3276 = vmatpush1.msra.mxu0 %v2006
        %3277 = vmatprep.subr.mxu0 0.0
        %3278 = vmatpush1.msra.mxu0 %v2007
        %3279 = vmatprep.subr.mxu0 0.0
        %3280 = vmatpush1.msra.mxu0 %v2008
        %3281 = vmatprep.subr.mxu0 0.0
        %3282 = vmatpush1.msra.mxu0 %v2009
        %3283 = vmatprep.subr.mxu0 0.0
        %3284 = vmatpush1.msra.mxu0 %v2010
        %3285 = vmatprep.subr.mxu0 0.0
        %3286 = vmatpush1.msra.mxu0 %v2011
        %3287 = vmatprep.subr.mxu0 0.0
        %3288 = vmatpush1.msra.mxu0 %v2012
        %3289 = vmatprep.subr.mxu0 0.0
        %3290 = vmatpush1.msra.mxu0 %v2013
        %3291 = vmatprep.subr.mxu0 0.0
        %3292 = vmatpush1.msra.mxu0 %v2014
        %3293 = vmatprep.subr.mxu0 0.0
        %3294 = vmatpush1.msra.mxu0 %v2015
        %3295 = vmatprep.mubr.f32.mxu0 %v2148
        %3296 = vmatmul.mubr.f32.gmra.mrb[0].mxu0 %v2144
        %v3297 = vpop.f32.mrb[0].mxu0
        %v3298 = vadd.f32 %v3228, %v3297
        %v3299 = vpop.f32.mrb[0].mxu0
        %3300 = vdwg.mxu0
        %v3301 = vmax.f32 %v3298, 0.0
        %v3302 = vld [vmem:[%s7] sm:$0xff]
        %v3303 = vld [vmem:[%s7 + $0x8] sm:$0xff]
        %v3304 = vld [vmem:[%s7 + $0x10] sm:$0xff]
        %v3305 = vld [vmem:[%s7 + $0x18] sm:$0xff]
        %v3306 = vld [vmem:[%s7 + $0x20] sm:$0xff]
        %v3307 = vld [vmem:[%s7 + $0x28] sm:$0xff]
        %v3308 = vld [vmem:[%s7 + $0x30] sm:$0xff]
        %v3309 = vld [vmem:[%s7 + $0x38] sm:$0xff]
        %v3310 = vld [vmem:[%s7 + $0x40] sm:$0xff]
        %v3311 = vld [vmem:[%s7 + $0x48] sm:$0xff]
        %v3312 = vld [vmem:[%s7 + $0x50] sm:$0xff]
        %v3313 = vld [vmem:[%s7 + $0x58] sm:$0xff]
        %v3314 = vld [vmem:[%s7 + $0x60] sm:$0xff]
        %v3315 = vld [vmem:[%s7 + $0x68] sm:$0xff]
        %v3316 = vld [vmem:[%s7 + $0x70] sm:$0xff]
        %v3317 = vld [vmem:[%s7 + $0x78] sm:$0xff]
        %v3318 = vld [vmem:[%s8] sm:$0x1]
        %3319 = vmatprep.subr.mxu0 0.0
        %3320 = vmatpush1.msra.mxu0 %v3302
        %3321 = vmatprep.subr.mxu0 0.0
        %3322 = vmatpush1.msra.mxu0 %v3303
        %3323 = vmatprep.subr.mxu0 0.0
        %3324 = vmatpush1.msra.mxu0 %v3304
        %3325 = vmatprep.subr.mxu0 0.0
        %3326 = vmatpush1.msra.mxu0 %v3305
        %3327 = vmatprep.subr.mxu0 0.0
        %3328 = vmatpush1.msra.mxu0 %v3306
        %3329 = vmatprep.subr.mxu0 0.0
        %3330 = vmatpush1.msra.mxu0 %v3307
        %3331 = vmatprep.subr.mxu0 0.0
        %3332 = vmatpush1.msra.mxu0 %v3308
        %3333 = vmatprep.subr.mxu0 0.0
        %3334 = vmatpush1.msra.mxu0 %v3309
        %3335 = vmatprep.subr.mxu0 0.0
        %3336 = vmatpush1.msra.mxu0 %v3310
        %3337 = vmatprep.subr.mxu0 0.0
        %3338 = vmatpush1.msra.mxu0 %v3311
        %3339 = vmatprep.subr.mxu0 0.0
        %3340 = vmatpush1.msra.mxu0 %v3312
        %3341 = vmatprep.subr.mxu0 0.0
        %3342 = vmatpush1.msra.mxu0 %v3313
        %3343 = vmatprep.subr.mxu0 0.0
        %3344 = vmatpush1.msra.mxu0 %v3314
        %3345 = vmatprep.subr.mxu0 0.0
        %3346 = vmatpush1.msra.mxu0 %v3315
        %3347 = vmatprep.subr.mxu0 0.0
        %3348 = vmatpush1.msra.mxu0 %v3316
        %3349 = vmatprep.subr.mxu0 0.0
        %3350 = vmatpush1.msra.mxu0 %v3317
        %3351 = vmatprep.subr.mxu0 0.0
        %3352 = vmatpush1.msra.mxu0 0.0
        %3353 = vmatprep.subr.mxu0 0.0
        %3354 = vmatpush1.msra.mxu0 0.0
        %3355 = vmatprep.subr.mxu0 0.0
        %3356 = vmatpush1.msra.mxu0 0.0
        %3357 = vmatprep.subr.mxu0 0.0
        %3358 = vmatpush1.msra.mxu0 0.0
        %3359 = vmatprep.subr.mxu0 0.0
        %3360 = vmatpush1.msra.mxu0 0.0
        %3361 = vmatprep.subr.mxu0 0.0
        %3362 = vmatpush1.msra.mxu0 0.0
        %3363 = vmatprep.subr.mxu0 0.0
        %3364 = vmatpush1.msra.mxu0 0.0
        %3365 = vmatprep.subr.mxu0 0.0
        %3366 = vmatpush1.msra.mxu0 0.0
        %3367 = vmatprep.subr.mxu0 0.0
        %3368 = vmatpush1.msra.mxu0 0.0
        %3369 = vmatprep.subr.mxu0 0.0
        %3370 = vmatpush1.msra.mxu0 0.0
        %3371 = vmatprep.subr.mxu0 0.0
        %3372 = vmatpush1.msra.mxu0 0.0
        %3373 = vmatprep.subr.mxu0 0.0
        %3374 = vmatpush1.msra.mxu0 0.0
        %3375 = vmatprep.subr.mxu0 0.0
        %3376 = vmatpush1.msra.mxu0 0.0
        %3377 = vmatprep.subr.mxu0 0.0
        %3378 = vmatpush1.msra.mxu0 0.0
        %3379 = vmatprep.subr.mxu0 0.0
        %3380 = vmatpush1.msra.mxu0 0.0
        %3381 = vmatprep.subr.mxu0 0.0
        %3382 = vmatpush1.msra.mxu0 0.0
        %3383 = vmatprep.mubr.f32.mxu0 0.0
        %3384 = vmatmul.mubr.f32.gmra.mrb[0].mxu0 %v3301
        %v3385 = vpop.f32.mrb[0].mxu0
        %v3386 = vadd.f32 %v3318, %v3385
        %v3387 = vpop.f32.mrb[0].mxu0
        %3388 = vdwg.mxu0
        %vm3389 = vcmask 24576
        %3390 = vst.msk [vmem:[%s324] sm:$0x1] %vm3389, %v3386
        %s3391 = sand.u32 %s225, 1
        %s3392 = scalar_lea.sflag [#allocation4], %s3391
        %s3393 = sand.u32 %s225, 1
        %s3394 = scalar_lea.vmem [#allocation3], %s3393
        // Predicated region
        $region57: #{cnn_classifier_forward.1} parent=55 // pred_check
          %p3395 = pneg %p235
        $region58: #{cnn_classifier_forward.1} parent=55 // pred_check_branch
          %3397 = sbr.rel (%p3395) target = $region60
        $region59: #{cnn_classifier_forward.1} parent=55 // pred_region
          %s3399 = ssub.s32 16, 16
          %3400 = vsyncadd %s3392, %s3399
          %s3401 = smul.addr %s23, 16
          %s3402 = scalar_lea.hbm %s9, %s3401
          %s3404 = sshll.u32 %s3394, 4
          %s3405 = int_to_ptr.vmem [resolvable:$true] %s3404
          %3407 = dma.vmem_to_hbm [thread:$0]  %s3405, 16, %s3402, %s3392
        $region60: #{cnn_classifier_forward.1} parent=55 // pred_fallthru
          _
      $region56: #{cnn_classifier_forward.1} parent=5 // pred_fallthru
        _
      %p3408 = scmp.le.s32.totalorder 2, %s18
      // Predicated region
      $region61: #{cnn_classifier_forward.1} parent=5 // pred_check
        %p3409 = pneg %p3408
      $region62: #{cnn_classifier_forward.1} parent=5 // pred_check_branch
        %3411 = sbr.rel (%p3409) target = $region64
      $region63: #{cnn_classifier_forward.1} parent=5 // pred_region
        %s3412 = ssub.s32 %s18, 2
        // Predicated region
        $region65: #{cnn_classifier_forward.1} parent=63 // pred_check
          %p3413 = pneg %p241
        $region66: #{cnn_classifier_forward.1} parent=63 // pred_check_branch
          %3415 = sbr.rel (%p3413) target = $region68
        $region67: #{cnn_classifier_forward.1} parent=63 // pred_region
          %s3416 = sand.u32 %s226, 1
          %s3417 = scalar_lea.sflag [#allocation4], %s3416
          %s3418 = sand.u32 %s226, 1
          %s3419 = scalar_lea.vmem [#allocation3], %s3418
          %3420 = dma.done %s3417, 16
        $region68: #{cnn_classifier_forward.1} parent=63 // pred_fallthru
          _
      $region64: #{cnn_classifier_forward.1} parent=5 // pred_fallthru
        _
    $region6: #{cnn_classifier_forward.1} parent=1 // loop_footer
      %s22 = sadd.s32 1, %s18
    $region7: #{cnn_classifier_forward.1} parent=1 // loop_footer_branch
      %17 = sbr.rel target = $region3
    $region8: #{cnn_classifier_forward.1} parent=1 // loop_exit
      _
    %3421 = vsyncpa [#allocation4], 1
    %s3422 = scalar_lea.sflag [#allocation4], 1
    %3423 = vsyncpa %s3422, 1

</llo_original>
